<compile_context>
chip_gen: v7x
topology: tpu7x:2x2x1
jax: 0.10.0
libtpu: 0.0.40
codegen_flags: <defaults>
</compile_context>

<pallas_src>
import math

import jax
import jax.numpy as jnp
from jax.experimental import pallas as pl
from jax.experimental.pallas import tpu as pltpu


def _round_up(x, m):
    return ((x + m - 1) // m) * m


def _make_sig_kernel(inv_temperature, eps, seq_len, num_heads):
    eps_over_s = eps / float(seq_len)

    def sig_kernel(q0_ref, k_ref, mask_ref, out_ref):
        # q0_ref:   (G, 1, D)      native dtype
        # k_ref:    (G, S_pad, D)  native dtype
        # mask_ref: (G, S_pad)     float32
        # out_ref:  (TB, S_pad)    float32,  G == TB * num_heads
        g_rows = q0_ref.shape[0]
        s_pad = k_ref.shape[1]
        tb = out_ref.shape[0]

        # --- class-token row of q @ k^T per (batch, head) row, on the MXU ---
        scores3 = jax.lax.dot_general(
            q0_ref[...], k_ref[...],
            dimension_numbers=(((2,), (2,)), ((0,), (0,))),
            preferred_element_type=jnp.float32,
        )                                              # (G, 1, S_pad) f32
        scores = scores3[:, 0, :] * inv_temperature    # (G, S_pad) f32

        # Mask sequence padding before the max so results match the unpadded
        # reference exactly (padded lanes contribute exp(-big) == 0).
        lane = jax.lax.broadcasted_iota(jnp.int32, (g_rows, s_pad), 1)
        scores = jnp.where(lane < seq_len, scores, jnp.float32(-1e30))

        scores = scores - jnp.max(scores, axis=-1, keepdims=True)
        attn = jnp.exp(scores) * mask_ref[...]                    # (G, S_pad)
        denom = jnp.sum(attn, axis=-1, keepdims=True) + eps       # (G, 1)
        attn = (attn + eps_over_s) * pl.reciprocal(denom, approx=True)

        # --- significance = sum over heads, as a block-diagonal MXU matmul ---
        # headsum[b, g] = 1.0 iff row g belongs to batch b of this block.
        row = jax.lax.broadcasted_iota(jnp.int32, (tb, g_rows), 0)
        col = jax.lax.broadcasted_iota(jnp.int32, (tb, g_rows), 1)
        headsum = jnp.logical_and(col >= row * num_heads,
                                  col < (row + 1) * num_heads)
        out_ref[...] = jnp.dot(headsum.astype(jnp.float32), attn,
                               preferred_element_type=jnp.float32)

    return sig_kernel


def top_sampler_significance(q, k, token_mask, *, temperature, eps=1e-6,
                             batch_tile=8):
    """Head-summed class-token attention (significance score). -> [B, S] f32."""
    B, H, S, D = k.shape

    TB = batch_tile
    B_pad = _round_up(B, TB)
    S_pad = _round_up(S, 128)          # lane-dense output / (8,128)-friendly

    q0 = q[:, :, 0, :]                                  # [B, H, D]
    mask = token_mask.astype(jnp.float32)               # [B, S]

    if B_pad != B:
        q0 = jnp.pad(q0, ((0, B_pad - B), (0, 0), (0, 0)))
        k = jnp.pad(k, ((0, B_pad - B), (0, 0), (0, 0), (0, 0)))
        mask = jnp.pad(mask, ((0, B_pad - B), (0, 0)))
    if S_pad != S:
        k = jnp.pad(k, ((0, 0), (0, 0), (0, S_pad - S), (0, 0)))
        mask = jnp.pad(mask, ((0, 0), (0, S_pad - S)))

    G = B_pad * H          # flattened (batch, head) rows
    GB = TB * H            # rows handled per grid step

    q0_g = q0.reshape(G, 1, D)                          # free leading reshapes
    k_g = k.reshape(G, S_pad, D)
    mask_g = jnp.broadcast_to(mask[:, None, :],
                              (B_pad, H, S_pad)).reshape(G, S_pad)

    # Explicit VMEM budget: double-buffered blocks + headroom for temporaries.
    block_bytes = (GB * 1 * D * q.dtype.itemsize
                   + GB * S_pad * D * k.dtype.itemsize
                   + GB * S_pad * 4
                   + TB * S_pad * 4)
    vmem_limit = int(min(2 * block_bytes + (8 << 20), 64 << 20))
    # TODO(synk): for very long sequences (double-buffered k block > ~48 MiB)
    # add an S-tiling grid axis with online-softmax accumulation for v7x VMEM.

    sig_pad = pl.pallas_call(
        _make_sig_kernel(1.0 / float(temperature), float(eps), int(S), int(H)),
        out_shape=jax.ShapeDtypeStruct((B_pad, S_pad), jnp.float32),
        grid_spec=pltpu.PrefetchScalarGridSpec(
            num_scalar_prefetch=0,
            grid=(B_pad // TB,),
            in_specs=[
                pl.BlockSpec((GB, 1, D), lambda i: (i, 0, 0)),
                pl.BlockSpec((GB, S_pad, D), lambda i: (i, 0, 0)),
                pl.BlockSpec((GB, S_pad), lambda i: (i, 0)),
            ],
            out_specs=pl.BlockSpec((TB, S_pad), lambda i: (i, 0)),
        ),
        compiler_params=pltpu.CompilerParams(
            dimension_semantics=("parallel",),
            vmem_limit_bytes=vmem_limit,
        ),
    )(q0_g, k_g, mask_g)

    return sig_pad[:B, :S]


def top_sampler_forward(q, k, v, token_mask, *, temperature, num_sampled,
                        eps=1e-6):
    """Reproduces TopSampler.forward. Returns a boolean mask of shape [B, S]."""
    del v  # v only contributes its shape in the reference forward
    sig = top_sampler_significance(q, k, token_mask,
                                   temperature=temperature, eps=eps)
    sig = sig[:, 1:]                       # drop class token
    # NOTE: the reference renormalizes sig by its row sum here; a positive
    # per-row scale does not change argsort order, so it is skipped.
    index = jnp.argsort(sig, axis=-1)      # ascending, like torch.sort
    index = jnp.concatenate(
        [jnp.zeros_like(index[..., :1]), index + 1], axis=-1)
    return index <= (num_sampled + 1)


# ---------------------- pure-JAX references (for the test) ----------------------
def _reference_significance(q, k, token_mask, *, temperature, eps=1e-6):
    B, H, S, D = k.shape
    attn = jnp.einsum("bhd,bhsd->bhs", q[:, :, 0, :], k,
                      precision=jax.lax.Precision.HIGHEST) / temperature
    attn = attn - jnp.max(attn, axis=-1, keepdims=True)
    attn = jnp.exp(attn) * token_mask[:, None, :]
    attn = (attn + eps / S) / (jnp.sum(attn, axis=-1, keepdims=True) + eps)
    return jnp.sum(attn, axis=1)           # [B, S]


def _reference_mask_from_sig(sig, num_sampled):
    # 1:1 mirror of the PyTorch glue (including its renormalization).
    sig = sig[:, 1:]
    sig = sig / jnp.sum(sig, axis=1, keepdims=True)
    index = jnp.argsort(sig, axis=-1)
    index = jnp.concatenate(
        [jnp.zeros_like(index[..., :1]), index + 1], axis=-1)
    return index <= (num_sampled + 1)


if __name__ == "__main__":
    B, H, S, D = 2, 4, 8, 32
    num_sampled = 4
    temperature = math.sqrt(D)
    eps = 1e-6

    key = jax.random.PRNGKey(0)
    kq, kk, kv, km = jax.random.split(key, 4)
    q = jax.random.normal(kq, (B, H, S, D), dtype=jnp.float32)
    k = jax.random.normal(kk, (B, H, S, D), dtype=jnp.float32)
    v = jax.random.normal(kv, (B, H, S, D), dtype=jnp.float32)
    token_mask = (jax.random.uniform(km, (B, S)) > 0.2).astype(jnp.float32)
    token_mask = token_mask.at[:, 0].set(1.0)   # class token always valid

    sig_out = top_sampler_significance(q, k, token_mask,
                                       temperature=temperature, eps=eps)
    out = top_sampler_forward(q, k, v, token_mask,
                              temperature=temperature,
                              num_sampled=num_sampled, eps=eps)
    out = jax.block_until_ready(out)

    sig_ref = _reference_significance(q, k, token_mask,
                                      temperature=temperature, eps=eps)

    assert out.shape == (B, S) and out.dtype == jnp.bool_
    # Kernel numerics vs high-precision pure-JAX reference (tolerance absorbs
    # MXU vs XLA matmul rounding and the approximate EUP reciprocal).
    assert bool(jnp.allclose(sig_out, sig_ref, rtol=5e-2, atol=5e-3)), \
        "significance mismatch"
    # End-to-end mask path (incl. the skipped, order-preserving renormalization)
    # against the 1:1 PyTorch-mirroring glue applied to the kernel's scores.
    assert bool(jnp.array_equal(out, _reference_mask_from_sig(sig_out,
                                                              num_sampled))), \
        "mask mismatch"
    print("KERNEL_OK")
</pallas_src>

<mosaic_0001>
module attributes {stable_mosaic.version = 11 : i64} {
  func.func @sig_kernel(%arg0: i32, %arg1: memref<32x1x32xf32, #tpu.memory_space<vmem>>, %arg2: memref<32x128x32xf32, #tpu.memory_space<vmem>>, %arg3: memref<32x128xf32, #tpu.memory_space<vmem>>, %arg4: memref<8x128xf32, #tpu.memory_space<vmem>>) attributes {dimension_semantics = [#tpu.dimension_semantics<parallel>], iteration_bounds = array<i64: 1>, scalar_prefetch = 0 : i64, scratch_operands = 0 : i64, tpu.core_type = #tpu.core_type<tc>, window_params = [{transform_indices = @transform_0, window_bounds = array<i64: 32, 1, 32>}, {transform_indices = @transform_1, window_bounds = array<i64: 32, 128, 32>}, {transform_indices = @transform_2, window_bounds = array<i64: 32, 128>}, {transform_indices = @transform_3, window_bounds = array<i64: 8, 128>}]} {
    %c0 = arith.constant 0 : index
    %c0_0 = arith.constant 0 : index
    %c0_1 = arith.constant 0 : index
    %0 = vector.load %arg1[%c0, %c0_0, %c0_1] : memref<32x1x32xf32, #tpu.memory_space<vmem>>, vector<32x1x32xf32>
    %c0_2 = arith.constant 0 : index
    %c0_3 = arith.constant 0 : index
    %c0_4 = arith.constant 0 : index
    %1 = vector.load %arg2[%c0_2, %c0_3, %c0_4] : memref<32x128x32xf32, #tpu.memory_space<vmem>>, vector<32x128x32xf32>
    %cst = arith.constant dense<0.000000e+00> : vector<32x1x128xf32>
    %2 = tpu.matmul %0, %1, %cst {dimension_numbers = #tpu.dot_dimension_numbers<[2], [2], [1], [1], [0, 0, 0, 1, 1, 1], [0], [0]>} : vector<32x1x32xf32>, vector<32x128x32xf32>, vector<32x1x128xf32> -> vector<32x1x128xf32>
    %3 = vector.shape_cast %2 : vector<32x1x128xf32> to vector<32x128xf32>
    %cst_5 = arith.constant 0.176776692 : f32
    %4 = vector.broadcast %cst_5 : f32 to vector<32x128xf32>
    %5 = arith.mulf %3, %4 : vector<32x128xf32>
    %6 = tpu.iota {dimensions = array<i32: 1>} : vector<32x128xi32>
    %c8_i32 = arith.constant 8 : i32
    %7 = vector.broadcast %c8_i32 : i32 to vector<32x128xi32>
    %8 = arith.cmpi slt, %6, %7 : vector<32x128xi32>
    %cst_6 = arith.constant -1.000000e+30 : f32
    %9 = vector.broadcast %cst_6 : f32 to vector<32x128xf32>
    %10 = arith.select %8, %5, %9 : vector<32x128xi1>, vector<32x128xf32>
    %cst_7 = arith.constant dense<0xFF800000> : vector<32xf32>
    %11 = vector.multi_reduction <maximumf>, %10, %cst_7 [1] : vector<32x128xf32> to vector<32xf32>
    %12 = vector.shape_cast %11 : vector<32xf32> to vector<32x1xf32>
    %13 = vector.broadcast %12 : vector<32x1xf32> to vector<32x128xf32>
    %14 = arith.subf %10, %13 : vector<32x128xf32>
    %15 = math.exp %14 : vector<32x128xf32>
    %c0_8 = arith.constant 0 : index
    %c0_9 = arith.constant 0 : index
    %16 = vector.load %arg3[%c0_8, %c0_9] : memref<32x128xf32, #tpu.memory_space<vmem>>, vector<32x128xf32>
    %17 = arith.mulf %15, %16 : vector<32x128xf32>
    %cst_10 = arith.constant dense<0.000000e+00> : vector<32xf32>
    %18 = vector.multi_reduction <add>, %17, %cst_10 [1] : vector<32x128xf32> to vector<32xf32>
    %19 = vector.shape_cast %18 : vector<32xf32> to vector<32x1xf32>
    %cst_11 = arith.constant 9.99999997E-7 : f32
    %20 = vector.broadcast %cst_11 : f32 to vector<32x1xf32>
    %21 = arith.addf %19, %20 : vector<32x1xf32>
    %cst_12 = arith.constant 1.250000e-07 : f32
    %22 = vector.broadcast %cst_12 : f32 to vector<32x128xf32>
    %23 = arith.addf %17, %22 : vector<32x128xf32>
    %24 = tpu.reciprocal %21 {approx = true} : vector<32x1xf32> -> vector<32x1xf32>
    %25 = vector.broadcast %24 : vector<32x1xf32> to vector<32x128xf32>
    %26 = arith.mulf %23, %25 : vector<32x128xf32>
    %27 = tpu.iota {dimensions = array<i32: 0>} : vector<8x32xi32>
    %28 = tpu.iota {dimensions = array<i32: 1>} : vector<8x32xi32>
    %c4_i32 = arith.constant 4 : i32
    %29 = vector.broadcast %c4_i32 : i32 to vector<8x32xi32>
    %30 = arith.muli %27, %29 : vector<8x32xi32>
    %31 = arith.cmpi sge, %28, %30 : vector<8x32xi32>
    %c1_i32 = arith.constant 1 : i32
    %32 = vector.broadcast %c1_i32 : i32 to vector<8x32xi32>
    %33 = arith.addi %27, %32 : vector<8x32xi32>
    %c4_i32_13 = arith.constant 4 : i32
    %34 = vector.broadcast %c4_i32_13 : i32 to vector<8x32xi32>
    %35 = arith.muli %33, %34 : vector<8x32xi32>
    %36 = arith.cmpi slt, %28, %35 : vector<8x32xi32>
    %37 = arith.andi %31, %36 : vector<8x32xi1>
    %38 = arith.extui %37 : vector<8x32xi1> to vector<8x32xi32>
    %39 = arith.sitofp %38 : vector<8x32xi32> to vector<8x32xf32>
    %cst_14 = arith.constant dense<0.000000e+00> : vector<8x128xf32>
    %40 = tpu.matmul %39, %26, %cst_14 {dimension_numbers = #tpu.dot_dimension_numbers<[1], [0], [0], [1], [0, 0, 1, 1], [], []>} : vector<8x32xf32>, vector<32x128xf32>, vector<8x128xf32> -> vector<8x128xf32>
    %c0_15 = arith.constant 0 : index
    %c0_16 = arith.constant 0 : index
    %41 = vector.load %arg4[%c0_15, %c0_16] : memref<8x128xf32, #tpu.memory_space<vmem>>, vector<8x128xf32>
    tpu.vector_store %arg4[%c0_15, %c0_16], %40 {strides = array<i32>} : memref<8x128xf32, #tpu.memory_space<vmem>>, vector<8x128xf32>,
    return
  }
  func.func @transform_0(%arg0: i32) -> (i32, i32, i32) {
    %c0_i32 = arith.constant 0 : i32
    %c0_i32_0 = arith.constant 0 : i32
    %c0_i32_1 = arith.constant 0 : i32
    return %arg0, %c0_i32, %c0_i32_0 : i32, i32, i32
  }
  func.func @transform_1(%arg0: i32) -> (i32, i32, i32) {
    %c0_i32 = arith.constant 0 : i32
    %c0_i32_0 = arith.constant 0 : i32
    %c0_i32_1 = arith.constant 0 : i32
    return %arg0, %c0_i32, %c0_i32_0 : i32, i32, i32
  }
  func.func @transform_2(%arg0: i32) -> (i32, i32) {
    %c0_i32 = arith.constant 0 : i32
    %c0_i32_0 = arith.constant 0 : i32
    return %arg0, %c0_i32 : i32, i32
  }
  func.func @transform_3(%arg0: i32) -> (i32, i32) {
    %c0_i32 = arith.constant 0 : i32
    %c0_i32_0 = arith.constant 0 : i32
    return %arg0, %c0_i32 : i32, i32
  }
}

</mosaic_0001>

<llo_original>
// kernel: tpu_custom_call.1
$region0: #{tpu_custom_call.1}
  #allocation0 [shape = 'u32[]', space=smem, size = 0x4, offset = 0x4, fixed_abs, tag = 'smem constant byte address 0x4 - core index']
  #allocation1 [shape = 'u32[144,128]{1,0:T(1,128)}', space=vmem, size = 0x12000, scoped, tag = 'internal scratch']
  %s0 = inlined_call_operand.vmem [shape: f32[32,1,32], index: 0, kind: input, shape index: {}]
  %s1 = inlined_call_operand.vmem [shape: f32[32,128,32], index: 1, kind: input, shape index: {}]
  %s2 = inlined_call_operand.vmem [shape: f32[32,128], index: 2, kind: input, shape index: {}]
  %s3 = inlined_call_operand.hbm [shape: f32[8,128], index: 3, kind: output, shape index: {}]
  %s4 = sld [smem:[#allocation0]]
  $region22: #{tpu_custom_call.1} parent=0
    _
  %s6 = ssub.s32 1, %s4
  %s7 = scalar_select 0, %s6, %s4
  $region1: #{tpu_custom_call.1} parent=0
    #allocation2 [shape = 'u8[4096]{0}', space=vmem, size = 0x1000, scoped, tag = 'output window, operand 0, single buffered']
    #allocation3 [shape = 's32[1]{0}', space=sflag, size = 0x4, scoped, tag = 'scoped memory for tpu_custom_call.1']
    %8 = vsyncpa [#allocation3], 0
    // Predicated region
    $region2: #{tpu_custom_call.1} parent=1 // pred_check
      _
    $region3: #{tpu_custom_call.1} parent=1 // pred_check_branch
      %10 = sbr.rel (0) target = $region5
    $region4: #{tpu_custom_call.1} parent=1 // pred_region
      _
    $region5: #{tpu_custom_call.1} parent=1 // pred_fallthru
      _
    // Predicated region
    $region6: #{tpu_custom_call.1} parent=1 // pred_check
      _
    $region7: #{tpu_custom_call.1} parent=1 // pred_check_branch
      %12 = sbr.rel (0) target = $region9
    $region8: #{tpu_custom_call.1} parent=1 // pred_region
      _
    $region9: #{tpu_custom_call.1} parent=1 // pred_fallthru
      _
    // Predicated region
    $region10: #{tpu_custom_call.1} parent=1 // pred_check
      _
    $region11: #{tpu_custom_call.1} parent=1 // pred_check_branch
      %14 = sbr.rel (0) target = $region13
    $region12: #{tpu_custom_call.1} parent=1 // pred_region
      _
    $region13: #{tpu_custom_call.1} parent=1 // pred_fallthru
      _
    %v15 = vld [vmem:[%s0] sm:$0x1]
    %v16 = vld [vmem:[%s0 + $0x1] sm:$0x1]
    %v17 = vld [vmem:[%s0 + $0x2] sm:$0x1]
    %v18 = vld [vmem:[%s0 + $0x3] sm:$0x1]
    %v19 = vld [vmem:[%s0 + $0x4] sm:$0x1]
    %v20 = vld [vmem:[%s0 + $0x5] sm:$0x1]
    %v21 = vld [vmem:[%s0 + $0x6] sm:$0x1]
    %v22 = vld [vmem:[%s0 + $0x7] sm:$0x1]
    %v23 = vld [vmem:[%s0 + $0x8] sm:$0x1]
    %v24 = vld [vmem:[%s0 + $0x9] sm:$0x1]
    %v25 = vld [vmem:[%s0 + $0xa] sm:$0x1]
    %v26 = vld [vmem:[%s0 + $0xb] sm:$0x1]
    %v27 = vld [vmem:[%s0 + $0xc] sm:$0x1]
    %v28 = vld [vmem:[%s0 + $0xd] sm:$0x1]
    %v29 = vld [vmem:[%s0 + $0xe] sm:$0x1]
    %v30 = vld [vmem:[%s0 + $0xf] sm:$0x1]
    %v31 = vld [vmem:[%s0 + $0x10] sm:$0x1]
    %v32 = vld [vmem:[%s0 + $0x11] sm:$0x1]
    %v33 = vld [vmem:[%s0 + $0x12] sm:$0x1]
    %v34 = vld [vmem:[%s0 + $0x13] sm:$0x1]
    %v35 = vld [vmem:[%s0 + $0x14] sm:$0x1]
    %v36 = vld [vmem:[%s0 + $0x15] sm:$0x1]
    %v37 = vld [vmem:[%s0 + $0x16] sm:$0x1]
    %v38 = vld [vmem:[%s0 + $0x17] sm:$0x1]
    %v39 = vld [vmem:[%s0 + $0x18] sm:$0x1]
    %v40 = vld [vmem:[%s0 + $0x19] sm:$0x1]
    %v41 = vld [vmem:[%s0 + $0x1a] sm:$0x1]
    %v42 = vld [vmem:[%s0 + $0x1b] sm:$0x1]
    %v43 = vld [vmem:[%s0 + $0x1c] sm:$0x1]
    %v44 = vld [vmem:[%s0 + $0x1d] sm:$0x1]
    %v45 = vld [vmem:[%s0 + $0x1e] sm:$0x1]
    %v46 = vld [vmem:[%s0 + $0x1f] sm:$0x1]
    %v47 = vld [vmem:[%s1] sm:$0xff]
    %v48 = vld [vmem:[%s1 + $0x8] sm:$0xff]
    %v49 = vld [vmem:[%s1 + $0x10] sm:$0xff]
    %v50 = vld [vmem:[%s1 + $0x18] sm:$0xff]
    %v51 = vld [vmem:[%s1 + $0x20] sm:$0xff]
    %v52 = vld [vmem:[%s1 + $0x28] sm:$0xff]
    %v53 = vld [vmem:[%s1 + $0x30] sm:$0xff]
    %v54 = vld [vmem:[%s1 + $0x38] sm:$0xff]
    %v55 = vld [vmem:[%s1 + $0x40] sm:$0xff]
    %v56 = vld [vmem:[%s1 + $0x48] sm:$0xff]
    %v57 = vld [vmem:[%s1 + $0x50] sm:$0xff]
    %v58 = vld [vmem:[%s1 + $0x58] sm:$0xff]
    %v59 = vld [vmem:[%s1 + $0x60] sm:$0xff]
    %v60 = vld [vmem:[%s1 + $0x68] sm:$0xff]
    %v61 = vld [vmem:[%s1 + $0x70] sm:$0xff]
    %v62 = vld [vmem:[%s1 + $0x78] sm:$0xff]
    %v63 = vld [vmem:[%s1 + $0x80] sm:$0xff]
    %v64 = vld [vmem:[%s1 + $0x88] sm:$0xff]
    %v65 = vld [vmem:[%s1 + $0x90] sm:$0xff]
    %v66 = vld [vmem:[%s1 + $0x98] sm:$0xff]
    %v67 = vld [vmem:[%s1 + $0xa0] sm:$0xff]
    %v68 = vld [vmem:[%s1 + $0xa8] sm:$0xff]
    %v69 = vld [vmem:[%s1 + $0xb0] sm:$0xff]
    %v70 = vld [vmem:[%s1 + $0xb8] sm:$0xff]
    %v71 = vld [vmem:[%s1 + $0xc0] sm:$0xff]
    %v72 = vld [vmem:[%s1 + $0xc8] sm:$0xff]
    %v73 = vld [vmem:[%s1 + $0xd0] sm:$0xff]
    %v74 = vld [vmem:[%s1 + $0xd8] sm:$0xff]
    %v75 = vld [vmem:[%s1 + $0xe0] sm:$0xff]
    %v76 = vld [vmem:[%s1 + $0xe8] sm:$0xff]
    %v77 = vld [vmem:[%s1 + $0xf0] sm:$0xff]
    %v78 = vld [vmem:[%s1 + $0xf8] sm:$0xff]
    %v79 = vld [vmem:[%s1 + $0x100] sm:$0xff]
    %v80 = vld [vmem:[%s1 + $0x108] sm:$0xff]
    %v81 = vld [vmem:[%s1 + $0x110] sm:$0xff]
    %v82 = vld [vmem:[%s1 + $0x118] sm:$0xff]
    %v83 = vld [vmem:[%s1 + $0x120] sm:$0xff]
    %v84 = vld [vmem:[%s1 + $0x128] sm:$0xff]
    %v85 = vld [vmem:[%s1 + $0x130] sm:$0xff]
    %v86 = vld [vmem:[%s1 + $0x138] sm:$0xff]
    %v87 = vld [vmem:[%s1 + $0x140] sm:$0xff]
    %v88 = vld [vmem:[%s1 + $0x148] sm:$0xff]
    %v89 = vld [vmem:[%s1 + $0x150] sm:$0xff]
    %v90 = vld [vmem:[%s1 + $0x158] sm:$0xff]
    %v91 = vld [vmem:[%s1 + $0x160] sm:$0xff]
    %v92 = vld [vmem:[%s1 + $0x168] sm:$0xff]
    %v93 = vld [vmem:[%s1 + $0x170] sm:$0xff]
    %v94 = vld [vmem:[%s1 + $0x178] sm:$0xff]
    %v95 = vld [vmem:[%s1 + $0x180] sm:$0xff]
    %v96 = vld [vmem:[%s1 + $0x188] sm:$0xff]
    %v97 = vld [vmem:[%s1 + $0x190] sm:$0xff]
    %v98 = vld [vmem:[%s1 + $0x198] sm:$0xff]
    %v99 = vld [vmem:[%s1 + $0x1a0] sm:$0xff]
    %v100 = vld [vmem:[%s1 + $0x1a8] sm:$0xff]
    %v101 = vld [vmem:[%s1 + $0x1b0] sm:$0xff]
    %v102 = vld [vmem:[%s1 + $0x1b8] sm:$0xff]
    %v103 = vld [vmem:[%s1 + $0x1c0] sm:$0xff]
    %v104 = vld [vmem:[%s1 + $0x1c8] sm:$0xff]
    %v105 = vld [vmem:[%s1 + $0x1d0] sm:$0xff]
    %v106 = vld [vmem:[%s1 + $0x1d8] sm:$0xff]
    %v107 = vld [vmem:[%s1 + $0x1e0] sm:$0xff]
    %v108 = vld [vmem:[%s1 + $0x1e8] sm:$0xff]
    %v109 = vld [vmem:[%s1 + $0x1f0] sm:$0xff]
    %v110 = vld [vmem:[%s1 + $0x1f8] sm:$0xff]
    %v111 = vld [vmem:[%s1 + $0x200] sm:$0xff]
    %v112 = vld [vmem:[%s1 + $0x208] sm:$0xff]
    %v113 = vld [vmem:[%s1 + $0x210] sm:$0xff]
    %v114 = vld [vmem:[%s1 + $0x218] sm:$0xff]
    %v115 = vld [vmem:[%s1 + $0x220] sm:$0xff]
    %v116 = vld [vmem:[%s1 + $0x228] sm:$0xff]
    %v117 = vld [vmem:[%s1 + $0x230] sm:$0xff]
    %v118 = vld [vmem:[%s1 + $0x238] sm:$0xff]
    %v119 = vld [vmem:[%s1 + $0x240] sm:$0xff]
    %v120 = vld [vmem:[%s1 + $0x248] sm:$0xff]
    %v121 = vld [vmem:[%s1 + $0x250] sm:$0xff]
    %v122 = vld [vmem:[%s1 + $0x258] sm:$0xff]
    %v123 = vld [vmem:[%s1 + $0x260] sm:$0xff]
    %v124 = vld [vmem:[%s1 + $0x268] sm:$0xff]
    %v125 = vld [vmem:[%s1 + $0x270] sm:$0xff]
    %v126 = vld [vmem:[%s1 + $0x278] sm:$0xff]
    %v127 = vld [vmem:[%s1 + $0x280] sm:$0xff]
    %v128 = vld [vmem:[%s1 + $0x288] sm:$0xff]
    %v129 = vld [vmem:[%s1 + $0x290] sm:$0xff]
    %v130 = vld [vmem:[%s1 + $0x298] sm:$0xff]
    %v131 = vld [vmem:[%s1 + $0x2a0] sm:$0xff]
    %v132 = vld [vmem:[%s1 + $0x2a8] sm:$0xff]
    %v133 = vld [vmem:[%s1 + $0x2b0] sm:$0xff]
    %v134 = vld [vmem:[%s1 + $0x2b8] sm:$0xff]
    %v135 = vld [vmem:[%s1 + $0x2c0] sm:$0xff]
    %v136 = vld [vmem:[%s1 + $0x2c8] sm:$0xff]
    %v137 = vld [vmem:[%s1 + $0x2d0] sm:$0xff]
    %v138 = vld [vmem:[%s1 + $0x2d8] sm:$0xff]
    %v139 = vld [vmem:[%s1 + $0x2e0] sm:$0xff]
    %v140 = vld [vmem:[%s1 + $0x2e8] sm:$0xff]
    %v141 = vld [vmem:[%s1 + $0x2f0] sm:$0xff]
    %v142 = vld [vmem:[%s1 + $0x2f8] sm:$0xff]
    %v143 = vld [vmem:[%s1 + $0x300] sm:$0xff]
    %v144 = vld [vmem:[%s1 + $0x308] sm:$0xff]
    %v145 = vld [vmem:[%s1 + $0x310] sm:$0xff]
    %v146 = vld [vmem:[%s1 + $0x318] sm:$0xff]
    %v147 = vld [vmem:[%s1 + $0x320] sm:$0xff]
    %v148 = vld [vmem:[%s1 + $0x328] sm:$0xff]
    %v149 = vld [vmem:[%s1 + $0x330] sm:$0xff]
    %v150 = vld [vmem:[%s1 + $0x338] sm:$0xff]
    %v151 = vld [vmem:[%s1 + $0x340] sm:$0xff]
    %v152 = vld [vmem:[%s1 + $0x348] sm:$0xff]
    %v153 = vld [vmem:[%s1 + $0x350] sm:$0xff]
    %v154 = vld [vmem:[%s1 + $0x358] sm:$0xff]
    %v155 = vld [vmem:[%s1 + $0x360] sm:$0xff]
    %v156 = vld [vmem:[%s1 + $0x368] sm:$0xff]
    %v157 = vld [vmem:[%s1 + $0x370] sm:$0xff]
    %v158 = vld [vmem:[%s1 + $0x378] sm:$0xff]
    %v159 = vld [vmem:[%s1 + $0x380] sm:$0xff]
    %v160 = vld [vmem:[%s1 + $0x388] sm:$0xff]
    %v161 = vld [vmem:[%s1 + $0x390] sm:$0xff]
    %v162 = vld [vmem:[%s1 + $0x398] sm:$0xff]
    %v163 = vld [vmem:[%s1 + $0x3a0] sm:$0xff]
    %v164 = vld [vmem:[%s1 + $0x3a8] sm:$0xff]
    %v165 = vld [vmem:[%s1 + $0x3b0] sm:$0xff]
    %v166 = vld [vmem:[%s1 + $0x3b8] sm:$0xff]
    %v167 = vld [vmem:[%s1 + $0x3c0] sm:$0xff]
    %v168 = vld [vmem:[%s1 + $0x3c8] sm:$0xff]
    %v169 = vld [vmem:[%s1 + $0x3d0] sm:$0xff]
    %v170 = vld [vmem:[%s1 + $0x3d8] sm:$0xff]
    %v171 = vld [vmem:[%s1 + $0x3e0] sm:$0xff]
    %v172 = vld [vmem:[%s1 + $0x3e8] sm:$0xff]
    %v173 = vld [vmem:[%s1 + $0x3f0] sm:$0xff]
    %v174 = vld [vmem:[%s1 + $0x3f8] sm:$0xff]
    %v175 = vld [vmem:[%s1 + $0x400] sm:$0xff]
    %v176 = vld [vmem:[%s1 + $0x408] sm:$0xff]
    %v177 = vld [vmem:[%s1 + $0x410] sm:$0xff]
    %v178 = vld [vmem:[%s1 + $0x418] sm:$0xff]
    %v179 = vld [vmem:[%s1 + $0x420] sm:$0xff]
    %v180 = vld [vmem:[%s1 + $0x428] sm:$0xff]
    %v181 = vld [vmem:[%s1 + $0x430] sm:$0xff]
    %v182 = vld [vmem:[%s1 + $0x438] sm:$0xff]
    %v183 = vld [vmem:[%s1 + $0x440] sm:$0xff]
    %v184 = vld [vmem:[%s1 + $0x448] sm:$0xff]
    %v185 = vld [vmem:[%s1 + $0x450] sm:$0xff]
    %v186 = vld [vmem:[%s1 + $0x458] sm:$0xff]
    %v187 = vld [vmem:[%s1 + $0x460] sm:$0xff]
    %v188 = vld [vmem:[%s1 + $0x468] sm:$0xff]
    %v189 = vld [vmem:[%s1 + $0x470] sm:$0xff]
    %v190 = vld [vmem:[%s1 + $0x478] sm:$0xff]
    %v191 = vld [vmem:[%s1 + $0x480] sm:$0xff]
    %v192 = vld [vmem:[%s1 + $0x488] sm:$0xff]
    %v193 = vld [vmem:[%s1 + $0x490] sm:$0xff]
    %v194 = vld [vmem:[%s1 + $0x498] sm:$0xff]
    %v195 = vld [vmem:[%s1 + $0x4a0] sm:$0xff]
    %v196 = vld [vmem:[%s1 + $0x4a8] sm:$0xff]
    %v197 = vld [vmem:[%s1 + $0x4b0] sm:$0xff]
    %v198 = vld [vmem:[%s1 + $0x4b8] sm:$0xff]
    %v199 = vld [vmem:[%s1 + $0x4c0] sm:$0xff]
    %v200 = vld [vmem:[%s1 + $0x4c8] sm:$0xff]
    %v201 = vld [vmem:[%s1 + $0x4d0] sm:$0xff]
    %v202 = vld [vmem:[%s1 + $0x4d8] sm:$0xff]
    %v203 = vld [vmem:[%s1 + $0x4e0] sm:$0xff]
    %v204 = vld [vmem:[%s1 + $0x4e8] sm:$0xff]
    %v205 = vld [vmem:[%s1 + $0x4f0] sm:$0xff]
    %v206 = vld [vmem:[%s1 + $0x4f8] sm:$0xff]
    %v207 = vld [vmem:[%s1 + $0x500] sm:$0xff]
    %v208 = vld [vmem:[%s1 + $0x508] sm:$0xff]
    %v209 = vld [vmem:[%s1 + $0x510] sm:$0xff]
    %v210 = vld [vmem:[%s1 + $0x518] sm:$0xff]
    %v211 = vld [vmem:[%s1 + $0x520] sm:$0xff]
    %v212 = vld [vmem:[%s1 + $0x528] sm:$0xff]
    %v213 = vld [vmem:[%s1 + $0x530] sm:$0xff]
    %v214 = vld [vmem:[%s1 + $0x538] sm:$0xff]
    %v215 = vld [vmem:[%s1 + $0x540] sm:$0xff]
    %v216 = vld [vmem:[%s1 + $0x548] sm:$0xff]
    %v217 = vld [vmem:[%s1 + $0x550] sm:$0xff]
    %v218 = vld [vmem:[%s1 + $0x558] sm:$0xff]
    %v219 = vld [vmem:[%s1 + $0x560] sm:$0xff]
    %v220 = vld [vmem:[%s1 + $0x568] sm:$0xff]
    %v221 = vld [vmem:[%s1 + $0x570] sm:$0xff]
    %v222 = vld [vmem:[%s1 + $0x578] sm:$0xff]
    %v223 = vld [vmem:[%s1 + $0x580] sm:$0xff]
    %v224 = vld [vmem:[%s1 + $0x588] sm:$0xff]
    %v225 = vld [vmem:[%s1 + $0x590] sm:$0xff]
    %v226 = vld [vmem:[%s1 + $0x598] sm:$0xff]
    %v227 = vld [vmem:[%s1 + $0x5a0] sm:$0xff]
    %v228 = vld [vmem:[%s1 + $0x5a8] sm:$0xff]
    %v229 = vld [vmem:[%s1 + $0x5b0] sm:$0xff]
    %v230 = vld [vmem:[%s1 + $0x5b8] sm:$0xff]
    %v231 = vld [vmem:[%s1 + $0x5c0] sm:$0xff]
    %v232 = vld [vmem:[%s1 + $0x5c8] sm:$0xff]
    %v233 = vld [vmem:[%s1 + $0x5d0] sm:$0xff]
    %v234 = vld [vmem:[%s1 + $0x5d8] sm:$0xff]
    %v235 = vld [vmem:[%s1 + $0x5e0] sm:$0xff]
    %v236 = vld [vmem:[%s1 + $0x5e8] sm:$0xff]
    %v237 = vld [vmem:[%s1 + $0x5f0] sm:$0xff]
    %v238 = vld [vmem:[%s1 + $0x5f8] sm:$0xff]
    %v239 = vld [vmem:[%s1 + $0x600] sm:$0xff]
    %v240 = vld [vmem:[%s1 + $0x608] sm:$0xff]
    %v241 = vld [vmem:[%s1 + $0x610] sm:$0xff]
    %v242 = vld [vmem:[%s1 + $0x618] sm:$0xff]
    %v243 = vld [vmem:[%s1 + $0x620] sm:$0xff]
    %v244 = vld [vmem:[%s1 + $0x628] sm:$0xff]
    %v245 = vld [vmem:[%s1 + $0x630] sm:$0xff]
    %v246 = vld [vmem:[%s1 + $0x638] sm:$0xff]
    %v247 = vld [vmem:[%s1 + $0x640] sm:$0xff]
    %v248 = vld [vmem:[%s1 + $0x648] sm:$0xff]
    %v249 = vld [vmem:[%s1 + $0x650] sm:$0xff]
    %v250 = vld [vmem:[%s1 + $0x658] sm:$0xff]
    %v251 = vld [vmem:[%s1 + $0x660] sm:$0xff]
    %v252 = vld [vmem:[%s1 + $0x668] sm:$0xff]
    %v253 = vld [vmem:[%s1 + $0x670] sm:$0xff]
    %v254 = vld [vmem:[%s1 + $0x678] sm:$0xff]
    %v255 = vld [vmem:[%s1 + $0x680] sm:$0xff]
    %v256 = vld [vmem:[%s1 + $0x688] sm:$0xff]
    %v257 = vld [vmem:[%s1 + $0x690] sm:$0xff]
    %v258 = vld [vmem:[%s1 + $0x698] sm:$0xff]
    %v259 = vld [vmem:[%s1 + $0x6a0] sm:$0xff]
    %v260 = vld [vmem:[%s1 + $0x6a8] sm:$0xff]
    %v261 = vld [vmem:[%s1 + $0x6b0] sm:$0xff]
    %v262 = vld [vmem:[%s1 + $0x6b8] sm:$0xff]
    %v263 = vld [vmem:[%s1 + $0x6c0] sm:$0xff]
    %v264 = vld [vmem:[%s1 + $0x6c8] sm:$0xff]
    %v265 = vld [vmem:[%s1 + $0x6d0] sm:$0xff]
    %v266 = vld [vmem:[%s1 + $0x6d8] sm:$0xff]
    %v267 = vld [vmem:[%s1 + $0x6e0] sm:$0xff]
    %v268 = vld [vmem:[%s1 + $0x6e8] sm:$0xff]
    %v269 = vld [vmem:[%s1 + $0x6f0] sm:$0xff]
    %v270 = vld [vmem:[%s1 + $0x6f8] sm:$0xff]
    %v271 = vld [vmem:[%s1 + $0x700] sm:$0xff]
    %v272 = vld [vmem:[%s1 + $0x708] sm:$0xff]
    %v273 = vld [vmem:[%s1 + $0x710] sm:$0xff]
    %v274 = vld [vmem:[%s1 + $0x718] sm:$0xff]
    %v275 = vld [vmem:[%s1 + $0x720] sm:$0xff]
    %v276 = vld [vmem:[%s1 + $0x728] sm:$0xff]
    %v277 = vld [vmem:[%s1 + $0x730] sm:$0xff]
    %v278 = vld [vmem:[%s1 + $0x738] sm:$0xff]
    %v279 = vld [vmem:[%s1 + $0x740] sm:$0xff]
    %v280 = vld [vmem:[%s1 + $0x748] sm:$0xff]
    %v281 = vld [vmem:[%s1 + $0x750] sm:$0xff]
    %v282 = vld [vmem:[%s1 + $0x758] sm:$0xff]
    %v283 = vld [vmem:[%s1 + $0x760] sm:$0xff]
    %v284 = vld [vmem:[%s1 + $0x768] sm:$0xff]
    %v285 = vld [vmem:[%s1 + $0x770] sm:$0xff]
    %v286 = vld [vmem:[%s1 + $0x778] sm:$0xff]
    %v287 = vld [vmem:[%s1 + $0x780] sm:$0xff]
    %v288 = vld [vmem:[%s1 + $0x788] sm:$0xff]
    %v289 = vld [vmem:[%s1 + $0x790] sm:$0xff]
    %v290 = vld [vmem:[%s1 + $0x798] sm:$0xff]
    %v291 = vld [vmem:[%s1 + $0x7a0] sm:$0xff]
    %v292 = vld [vmem:[%s1 + $0x7a8] sm:$0xff]
    %v293 = vld [vmem:[%s1 + $0x7b0] sm:$0xff]
    %v294 = vld [vmem:[%s1 + $0x7b8] sm:$0xff]
    %v295 = vld [vmem:[%s1 + $0x7c0] sm:$0xff]
    %v296 = vld [vmem:[%s1 + $0x7c8] sm:$0xff]
    %v297 = vld [vmem:[%s1 + $0x7d0] sm:$0xff]
    %v298 = vld [vmem:[%s1 + $0x7d8] sm:$0xff]
    %v299 = vld [vmem:[%s1 + $0x7e0] sm:$0xff]
    %v300 = vld [vmem:[%s1 + $0x7e8] sm:$0xff]
    %v301 = vld [vmem:[%s1 + $0x7f0] sm:$0xff]
    %v302 = vld [vmem:[%s1 + $0x7f8] sm:$0xff]
    %v303 = vld [vmem:[%s1 + $0x800] sm:$0xff]
    %v304 = vld [vmem:[%s1 + $0x808] sm:$0xff]
    %v305 = vld [vmem:[%s1 + $0x810] sm:$0xff]
    %v306 = vld [vmem:[%s1 + $0x818] sm:$0xff]
    %v307 = vld [vmem:[%s1 + $0x820] sm:$0xff]
    %v308 = vld [vmem:[%s1 + $0x828] sm:$0xff]
    %v309 = vld [vmem:[%s1 + $0x830] sm:$0xff]
    %v310 = vld [vmem:[%s1 + $0x838] sm:$0xff]
    %v311 = vld [vmem:[%s1 + $0x840] sm:$0xff]
    %v312 = vld [vmem:[%s1 + $0x848] sm:$0xff]
    %v313 = vld [vmem:[%s1 + $0x850] sm:$0xff]
    %v314 = vld [vmem:[%s1 + $0x858] sm:$0xff]
    %v315 = vld [vmem:[%s1 + $0x860] sm:$0xff]
    %v316 = vld [vmem:[%s1 + $0x868] sm:$0xff]
    %v317 = vld [vmem:[%s1 + $0x870] sm:$0xff]
    %v318 = vld [vmem:[%s1 + $0x878] sm:$0xff]
    %v319 = vld [vmem:[%s1 + $0x880] sm:$0xff]
    %v320 = vld [vmem:[%s1 + $0x888] sm:$0xff]
    %v321 = vld [vmem:[%s1 + $0x890] sm:$0xff]
    %v322 = vld [vmem:[%s1 + $0x898] sm:$0xff]
    %v323 = vld [vmem:[%s1 + $0x8a0] sm:$0xff]
    %v324 = vld [vmem:[%s1 + $0x8a8] sm:$0xff]
    %v325 = vld [vmem:[%s1 + $0x8b0] sm:$0xff]
    %v326 = vld [vmem:[%s1 + $0x8b8] sm:$0xff]
    %v327 = vld [vmem:[%s1 + $0x8c0] sm:$0xff]
    %v328 = vld [vmem:[%s1 + $0x8c8] sm:$0xff]
    %v329 = vld [vmem:[%s1 + $0x8d0] sm:$0xff]
    %v330 = vld [vmem:[%s1 + $0x8d8] sm:$0xff]
    %v331 = vld [vmem:[%s1 + $0x8e0] sm:$0xff]
    %v332 = vld [vmem:[%s1 + $0x8e8] sm:$0xff]
    %v333 = vld [vmem:[%s1 + $0x8f0] sm:$0xff]
    %v334 = vld [vmem:[%s1 + $0x8f8] sm:$0xff]
    %v335 = vld [vmem:[%s1 + $0x900] sm:$0xff]
    %v336 = vld [vmem:[%s1 + $0x908] sm:$0xff]
    %v337 = vld [vmem:[%s1 + $0x910] sm:$0xff]
    %v338 = vld [vmem:[%s1 + $0x918] sm:$0xff]
    %v339 = vld [vmem:[%s1 + $0x920] sm:$0xff]
    %v340 = vld [vmem:[%s1 + $0x928] sm:$0xff]
    %v341 = vld [vmem:[%s1 + $0x930] sm:$0xff]
    %v342 = vld [vmem:[%s1 + $0x938] sm:$0xff]
    %v343 = vld [vmem:[%s1 + $0x940] sm:$0xff]
    %v344 = vld [vmem:[%s1 + $0x948] sm:$0xff]
    %v345 = vld [vmem:[%s1 + $0x950] sm:$0xff]
    %v346 = vld [vmem:[%s1 + $0x958] sm:$0xff]
    %v347 = vld [vmem:[%s1 + $0x960] sm:$0xff]
    %v348 = vld [vmem:[%s1 + $0x968] sm:$0xff]
    %v349 = vld [vmem:[%s1 + $0x970] sm:$0xff]
    %v350 = vld [vmem:[%s1 + $0x978] sm:$0xff]
    %v351 = vld [vmem:[%s1 + $0x980] sm:$0xff]
    %v352 = vld [vmem:[%s1 + $0x988] sm:$0xff]
    %v353 = vld [vmem:[%s1 + $0x990] sm:$0xff]
    %v354 = vld [vmem:[%s1 + $0x998] sm:$0xff]
    %v355 = vld [vmem:[%s1 + $0x9a0] sm:$0xff]
    %v356 = vld [vmem:[%s1 + $0x9a8] sm:$0xff]
    %v357 = vld [vmem:[%s1 + $0x9b0] sm:$0xff]
    %v358 = vld [vmem:[%s1 + $0x9b8] sm:$0xff]
    %v359 = vld [vmem:[%s1 + $0x9c0] sm:$0xff]
    %v360 = vld [vmem:[%s1 + $0x9c8] sm:$0xff]
    %v361 = vld [vmem:[%s1 + $0x9d0] sm:$0xff]
    %v362 = vld [vmem:[%s1 + $0x9d8] sm:$0xff]
    %v363 = vld [vmem:[%s1 + $0x9e0] sm:$0xff]
    %v364 = vld [vmem:[%s1 + $0x9e8] sm:$0xff]
    %v365 = vld [vmem:[%s1 + $0x9f0] sm:$0xff]
    %v366 = vld [vmem:[%s1 + $0x9f8] sm:$0xff]
    %v367 = vld [vmem:[%s1 + $0xa00] sm:$0xff]
    %v368 = vld [vmem:[%s1 + $0xa08] sm:$0xff]
    %v369 = vld [vmem:[%s1 + $0xa10] sm:$0xff]
    %v370 = vld [vmem:[%s1 + $0xa18] sm:$0xff]
    %v371 = vld [vmem:[%s1 + $0xa20] sm:$0xff]
    %v372 = vld [vmem:[%s1 + $0xa28] sm:$0xff]
    %v373 = vld [vmem:[%s1 + $0xa30] sm:$0xff]
    %v374 = vld [vmem:[%s1 + $0xa38] sm:$0xff]
    %v375 = vld [vmem:[%s1 + $0xa40] sm:$0xff]
    %v376 = vld [vmem:[%s1 + $0xa48] sm:$0xff]
    %v377 = vld [vmem:[%s1 + $0xa50] sm:$0xff]
    %v378 = vld [vmem:[%s1 + $0xa58] sm:$0xff]
    %v379 = vld [vmem:[%s1 + $0xa60] sm:$0xff]
    %v380 = vld [vmem:[%s1 + $0xa68] sm:$0xff]
    %v381 = vld [vmem:[%s1 + $0xa70] sm:$0xff]
    %v382 = vld [vmem:[%s1 + $0xa78] sm:$0xff]
    %v383 = vld [vmem:[%s1 + $0xa80] sm:$0xff]
    %v384 = vld [vmem:[%s1 + $0xa88] sm:$0xff]
    %v385 = vld [vmem:[%s1 + $0xa90] sm:$0xff]
    %v386 = vld [vmem:[%s1 + $0xa98] sm:$0xff]
    %v387 = vld [vmem:[%s1 + $0xaa0] sm:$0xff]
    %v388 = vld [vmem:[%s1 + $0xaa8] sm:$0xff]
    %v389 = vld [vmem:[%s1 + $0xab0] sm:$0xff]
    %v390 = vld [vmem:[%s1 + $0xab8] sm:$0xff]
    %v391 = vld [vmem:[%s1 + $0xac0] sm:$0xff]
    %v392 = vld [vmem:[%s1 + $0xac8] sm:$0xff]
    %v393 = vld [vmem:[%s1 + $0xad0] sm:$0xff]
    %v394 = vld [vmem:[%s1 + $0xad8] sm:$0xff]
    %v395 = vld [vmem:[%s1 + $0xae0] sm:$0xff]
    %v396 = vld [vmem:[%s1 + $0xae8] sm:$0xff]
    %v397 = vld [vmem:[%s1 + $0xaf0] sm:$0xff]
    %v398 = vld [vmem:[%s1 + $0xaf8] sm:$0xff]
    %v399 = vld [vmem:[%s1 + $0xb00] sm:$0xff]
    %v400 = vld [vmem:[%s1 + $0xb08] sm:$0xff]
    %v401 = vld [vmem:[%s1 + $0xb10] sm:$0xff]
    %v402 = vld [vmem:[%s1 + $0xb18] sm:$0xff]
    %v403 = vld [vmem:[%s1 + $0xb20] sm:$0xff]
    %v404 = vld [vmem:[%s1 + $0xb28] sm:$0xff]
    %v405 = vld [vmem:[%s1 + $0xb30] sm:$0xff]
    %v406 = vld [vmem:[%s1 + $0xb38] sm:$0xff]
    %v407 = vld [vmem:[%s1 + $0xb40] sm:$0xff]
    %v408 = vld [vmem:[%s1 + $0xb48] sm:$0xff]
    %v409 = vld [vmem:[%s1 + $0xb50] sm:$0xff]
    %v410 = vld [vmem:[%s1 + $0xb58] sm:$0xff]
    %v411 = vld [vmem:[%s1 + $0xb60] sm:$0xff]
    %v412 = vld [vmem:[%s1 + $0xb68] sm:$0xff]
    %v413 = vld [vmem:[%s1 + $0xb70] sm:$0xff]
    %v414 = vld [vmem:[%s1 + $0xb78] sm:$0xff]
    %v415 = vld [vmem:[%s1 + $0xb80] sm:$0xff]
    %v416 = vld [vmem:[%s1 + $0xb88] sm:$0xff]
    %v417 = vld [vmem:[%s1 + $0xb90] sm:$0xff]
    %v418 = vld [vmem:[%s1 + $0xb98] sm:$0xff]
    %v419 = vld [vmem:[%s1 + $0xba0] sm:$0xff]
    %v420 = vld [vmem:[%s1 + $0xba8] sm:$0xff]
    %v421 = vld [vmem:[%s1 + $0xbb0] sm:$0xff]
    %v422 = vld [vmem:[%s1 + $0xbb8] sm:$0xff]
    %v423 = vld [vmem:[%s1 + $0xbc0] sm:$0xff]
    %v424 = vld [vmem:[%s1 + $0xbc8] sm:$0xff]
    %v425 = vld [vmem:[%s1 + $0xbd0] sm:$0xff]
    %v426 = vld [vmem:[%s1 + $0xbd8] sm:$0xff]
    %v427 = vld [vmem:[%s1 + $0xbe0] sm:$0xff]
    %v428 = vld [vmem:[%s1 + $0xbe8] sm:$0xff]
    %v429 = vld [vmem:[%s1 + $0xbf0] sm:$0xff]
    %v430 = vld [vmem:[%s1 + $0xbf8] sm:$0xff]
    %v431 = vld [vmem:[%s1 + $0xc00] sm:$0xff]
    %v432 = vld [vmem:[%s1 + $0xc08] sm:$0xff]
    %v433 = vld [vmem:[%s1 + $0xc10] sm:$0xff]
    %v434 = vld [vmem:[%s1 + $0xc18] sm:$0xff]
    %v435 = vld [vmem:[%s1 + $0xc20] sm:$0xff]
    %v436 = vld [vmem:[%s1 + $0xc28] sm:$0xff]
    %v437 = vld [vmem:[%s1 + $0xc30] sm:$0xff]
    %v438 = vld [vmem:[%s1 + $0xc38] sm:$0xff]
    %v439 = vld [vmem:[%s1 + $0xc40] sm:$0xff]
    %v440 = vld [vmem:[%s1 + $0xc48] sm:$0xff]
    %v441 = vld [vmem:[%s1 + $0xc50] sm:$0xff]
    %v442 = vld [vmem:[%s1 + $0xc58] sm:$0xff]
    %v443 = vld [vmem:[%s1 + $0xc60] sm:$0xff]
    %v444 = vld [vmem:[%s1 + $0xc68] sm:$0xff]
    %v445 = vld [vmem:[%s1 + $0xc70] sm:$0xff]
    %v446 = vld [vmem:[%s1 + $0xc78] sm:$0xff]
    %v447 = vld [vmem:[%s1 + $0xc80] sm:$0xff]
    %v448 = vld [vmem:[%s1 + $0xc88] sm:$0xff]
    %v449 = vld [vmem:[%s1 + $0xc90] sm:$0xff]
    %v450 = vld [vmem:[%s1 + $0xc98] sm:$0xff]
    %v451 = vld [vmem:[%s1 + $0xca0] sm:$0xff]
    %v452 = vld [vmem:[%s1 + $0xca8] sm:$0xff]
    %v453 = vld [vmem:[%s1 + $0xcb0] sm:$0xff]
    %v454 = vld [vmem:[%s1 + $0xcb8] sm:$0xff]
    %v455 = vld [vmem:[%s1 + $0xcc0] sm:$0xff]
    %v456 = vld [vmem:[%s1 + $0xcc8] sm:$0xff]
    %v457 = vld [vmem:[%s1 + $0xcd0] sm:$0xff]
    %v458 = vld [vmem:[%s1 + $0xcd8] sm:$0xff]
    %v459 = vld [vmem:[%s1 + $0xce0] sm:$0xff]
    %v460 = vld [vmem:[%s1 + $0xce8] sm:$0xff]
    %v461 = vld [vmem:[%s1 + $0xcf0] sm:$0xff]
    %v462 = vld [vmem:[%s1 + $0xcf8] sm:$0xff]
    %v463 = vld [vmem:[%s1 + $0xd00] sm:$0xff]
    %v464 = vld [vmem:[%s1 + $0xd08] sm:$0xff]
    %v465 = vld [vmem:[%s1 + $0xd10] sm:$0xff]
    %v466 = vld [vmem:[%s1 + $0xd18] sm:$0xff]
    %v467 = vld [vmem:[%s1 + $0xd20] sm:$0xff]
    %v468 = vld [vmem:[%s1 + $0xd28] sm:$0xff]
    %v469 = vld [vmem:[%s1 + $0xd30] sm:$0xff]
    %v470 = vld [vmem:[%s1 + $0xd38] sm:$0xff]
    %v471 = vld [vmem:[%s1 + $0xd40] sm:$0xff]
    %v472 = vld [vmem:[%s1 + $0xd48] sm:$0xff]
    %v473 = vld [vmem:[%s1 + $0xd50] sm:$0xff]
    %v474 = vld [vmem:[%s1 + $0xd58] sm:$0xff]
    %v475 = vld [vmem:[%s1 + $0xd60] sm:$0xff]
    %v476 = vld [vmem:[%s1 + $0xd68] sm:$0xff]
    %v477 = vld [vmem:[%s1 + $0xd70] sm:$0xff]
    %v478 = vld [vmem:[%s1 + $0xd78] sm:$0xff]
    %v479 = vld [vmem:[%s1 + $0xd80] sm:$0xff]
    %v480 = vld [vmem:[%s1 + $0xd88] sm:$0xff]
    %v481 = vld [vmem:[%s1 + $0xd90] sm:$0xff]
    %v482 = vld [vmem:[%s1 + $0xd98] sm:$0xff]
    %v483 = vld [vmem:[%s1 + $0xda0] sm:$0xff]
    %v484 = vld [vmem:[%s1 + $0xda8] sm:$0xff]
    %v485 = vld [vmem:[%s1 + $0xdb0] sm:$0xff]
    %v486 = vld [vmem:[%s1 + $0xdb8] sm:$0xff]
    %v487 = vld [vmem:[%s1 + $0xdc0] sm:$0xff]
    %v488 = vld [vmem:[%s1 + $0xdc8] sm:$0xff]
    %v489 = vld [vmem:[%s1 + $0xdd0] sm:$0xff]
    %v490 = vld [vmem:[%s1 + $0xdd8] sm:$0xff]
    %v491 = vld [vmem:[%s1 + $0xde0] sm:$0xff]
    %v492 = vld [vmem:[%s1 + $0xde8] sm:$0xff]
    %v493 = vld [vmem:[%s1 + $0xdf0] sm:$0xff]
    %v494 = vld [vmem:[%s1 + $0xdf8] sm:$0xff]
    %v495 = vld [vmem:[%s1 + $0xe00] sm:$0xff]
    %v496 = vld [vmem:[%s1 + $0xe08] sm:$0xff]
    %v497 = vld [vmem:[%s1 + $0xe10] sm:$0xff]
    %v498 = vld [vmem:[%s1 + $0xe18] sm:$0xff]
    %v499 = vld [vmem:[%s1 + $0xe20] sm:$0xff]
    %v500 = vld [vmem:[%s1 + $0xe28] sm:$0xff]
    %v501 = vld [vmem:[%s1 + $0xe30] sm:$0xff]
    %v502 = vld [vmem:[%s1 + $0xe38] sm:$0xff]
    %v503 = vld [vmem:[%s1 + $0xe40] sm:$0xff]
    %v504 = vld [vmem:[%s1 + $0xe48] sm:$0xff]
    %v505 = vld [vmem:[%s1 + $0xe50] sm:$0xff]
    %v506 = vld [vmem:[%s1 + $0xe58] sm:$0xff]
    %v507 = vld [vmem:[%s1 + $0xe60] sm:$0xff]
    %v508 = vld [vmem:[%s1 + $0xe68] sm:$0xff]
    %v509 = vld [vmem:[%s1 + $0xe70] sm:$0xff]
    %v510 = vld [vmem:[%s1 + $0xe78] sm:$0xff]
    %v511 = vld [vmem:[%s1 + $0xe80] sm:$0xff]
    %v512 = vld [vmem:[%s1 + $0xe88] sm:$0xff]
    %v513 = vld [vmem:[%s1 + $0xe90] sm:$0xff]
    %v514 = vld [vmem:[%s1 + $0xe98] sm:$0xff]
    %v515 = vld [vmem:[%s1 + $0xea0] sm:$0xff]
    %v516 = vld [vmem:[%s1 + $0xea8] sm:$0xff]
    %v517 = vld [vmem:[%s1 + $0xeb0] sm:$0xff]
    %v518 = vld [vmem:[%s1 + $0xeb8] sm:$0xff]
    %v519 = vld [vmem:[%s1 + $0xec0] sm:$0xff]
    %v520 = vld [vmem:[%s1 + $0xec8] sm:$0xff]
    %v521 = vld [vmem:[%s1 + $0xed0] sm:$0xff]
    %v522 = vld [vmem:[%s1 + $0xed8] sm:$0xff]
    %v523 = vld [vmem:[%s1 + $0xee0] sm:$0xff]
    %v524 = vld [vmem:[%s1 + $0xee8] sm:$0xff]
    %v525 = vld [vmem:[%s1 + $0xef0] sm:$0xff]
    %v526 = vld [vmem:[%s1 + $0xef8] sm:$0xff]
    %v527 = vld [vmem:[%s1 + $0xf00] sm:$0xff]
    %v528 = vld [vmem:[%s1 + $0xf08] sm:$0xff]
    %v529 = vld [vmem:[%s1 + $0xf10] sm:$0xff]
    %v530 = vld [vmem:[%s1 + $0xf18] sm:$0xff]
    %v531 = vld [vmem:[%s1 + $0xf20] sm:$0xff]
    %v532 = vld [vmem:[%s1 + $0xf28] sm:$0xff]
    %v533 = vld [vmem:[%s1 + $0xf30] sm:$0xff]
    %v534 = vld [vmem:[%s1 + $0xf38] sm:$0xff]
    %v535 = vld [vmem:[%s1 + $0xf40] sm:$0xff]
    %v536 = vld [vmem:[%s1 + $0xf48] sm:$0xff]
    %v537 = vld [vmem:[%s1 + $0xf50] sm:$0xff]
    %v538 = vld [vmem:[%s1 + $0xf58] sm:$0xff]
    %v539 = vld [vmem:[%s1 + $0xf60] sm:$0xff]
    %v540 = vld [vmem:[%s1 + $0xf68] sm:$0xff]
    %v541 = vld [vmem:[%s1 + $0xf70] sm:$0xff]
    %v542 = vld [vmem:[%s1 + $0xf78] sm:$0xff]
    %v543 = vld [vmem:[%s1 + $0xf80] sm:$0xff]
    %v544 = vld [vmem:[%s1 + $0xf88] sm:$0xff]
    %v545 = vld [vmem:[%s1 + $0xf90] sm:$0xff]
    %v546 = vld [vmem:[%s1 + $0xf98] sm:$0xff]
    %v547 = vld [vmem:[%s1 + $0xfa0] sm:$0xff]
    %v548 = vld [vmem:[%s1 + $0xfa8] sm:$0xff]
    %v549 = vld [vmem:[%s1 + $0xfb0] sm:$0xff]
    %v550 = vld [vmem:[%s1 + $0xfb8] sm:$0xff]
    %v551 = vld [vmem:[%s1 + $0xfc0] sm:$0xff]
    %v552 = vld [vmem:[%s1 + $0xfc8] sm:$0xff]
    %v553 = vld [vmem:[%s1 + $0xfd0] sm:$0xff]
    %v554 = vld [vmem:[%s1 + $0xfd8] sm:$0xff]
    %v555 = vld [vmem:[%s1 + $0xfe0] sm:$0xff]
    %v556 = vld [vmem:[%s1 + $0xfe8] sm:$0xff]
    %v557 = vld [vmem:[%s1 + $0xff0] sm:$0xff]
    %v558 = vld [vmem:[%s1 + $0xff8] sm:$0xff]
    %vm559 = vcmask 261120
    %v561 = vsel %vm559, %v15, 0
    %v564 = vsel %vm559, %v47, 0
    %v567 = vsel %vm559, %v48, 0
    %v570 = vsel %vm559, %v49, 0
    %v573 = vsel %vm559, %v50, 0
    %v576 = vsel %vm559, %v51, 0
    %v579 = vsel %vm559, %v52, 0
    %v582 = vsel %vm559, %v53, 0
    %v585 = vsel %vm559, %v54, 0
    %v588 = vsel %vm559, %v55, 0
    %v591 = vsel %vm559, %v56, 0
    %v594 = vsel %vm559, %v57, 0
    %v597 = vsel %vm559, %v58, 0
    %v600 = vsel %vm559, %v59, 0
    %v603 = vsel %vm559, %v60, 0
    %v606 = vsel %vm559, %v61, 0
    %v609 = vsel %vm559, %v62, 0
    %611 = vmatprep.subr.mxu0 0.0
    %612 = vmatpush1.xpose.msra.mxu0 %v564
    %613 = vmatprep.subr.mxu0 0.0
    %614 = vmatpush1.xpose.msra.mxu0 %v567
    %615 = vmatprep.subr.mxu0 0.0
    %616 = vmatpush1.xpose.msra.mxu0 %v570
    %617 = vmatprep.subr.mxu0 0.0
    %618 = vmatpush1.xpose.msra.mxu0 %v573
    %619 = vmatprep.subr.mxu0 0.0
    %620 = vmatpush1.xpose.msra.mxu0 %v576
    %621 = vmatprep.subr.mxu0 0.0
    %622 = vmatpush1.xpose.msra.mxu0 %v579
    %623 = vmatprep.subr.mxu0 0.0
    %624 = vmatpush1.xpose.msra.mxu0 %v582
    %625 = vmatprep.subr.mxu0 0.0
    %626 = vmatpush1.xpose.msra.mxu0 %v585
    %627 = vmatprep.subr.mxu0 0.0
    %628 = vmatpush1.xpose.msra.mxu0 %v588
    %629 = vmatprep.subr.mxu0 0.0
    %630 = vmatpush1.xpose.msra.mxu0 %v591
    %631 = vmatprep.subr.mxu0 0.0
    %632 = vmatpush1.xpose.msra.mxu0 %v594
    %633 = vmatprep.subr.mxu0 0.0
    %634 = vmatpush1.xpose.msra.mxu0 %v597
    %635 = vmatprep.subr.mxu0 0.0
    %636 = vmatpush1.xpose.msra.mxu0 %v600
    %637 = vmatprep.subr.mxu0 0.0
    %638 = vmatpush1.xpose.msra.mxu0 %v603
    %639 = vmatprep.subr.mxu0 0.0
    %640 = vmatpush1.xpose.msra.mxu0 %v606
    %641 = vmatprep.subr.mxu0 0.0
    %642 = vmatpush1.xpose.msra.mxu0 %v609
    %643 = vmatprep.subr.mxu0 0.0
    %644 = vmatpush1.xpose.msra.mxu0 0.0
    %645 = vmatprep.subr.mxu0 0.0
    %646 = vmatpush1.xpose.msra.mxu0 0.0
    %647 = vmatprep.subr.mxu0 0.0
    %648 = vmatpush1.xpose.msra.mxu0 0.0
    %649 = vmatprep.subr.mxu0 0.0
    %650 = vmatpush1.xpose.msra.mxu0 0.0
    %651 = vmatprep.subr.mxu0 0.0
    %652 = vmatpush1.xpose.msra.mxu0 0.0
    %653 = vmatprep.subr.mxu0 0.0
    %654 = vmatpush1.xpose.msra.mxu0 0.0
    %655 = vmatprep.subr.mxu0 0.0
    %656 = vmatpush1.xpose.msra.mxu0 0.0
    %657 = vmatprep.subr.mxu0 0.0
    %658 = vmatpush1.xpose.msra.mxu0 0.0
    %659 = vmatprep.subr.mxu0 0.0
    %660 = vmatpush1.xpose.msra.mxu0 0.0
    %661 = vmatprep.subr.mxu0 0.0
    %662 = vmatpush1.xpose.msra.mxu0 0.0
    %663 = vmatprep.subr.mxu0 0.0
    %664 = vmatpush1.xpose.msra.mxu0 0.0
    %665 = vmatprep.subr.mxu0 0.0
    %666 = vmatpush1.xpose.msra.mxu0 0.0
    %667 = vmatprep.subr.mxu0 0.0
    %668 = vmatpush1.xpose.msra.mxu0 0.0
    %669 = vmatprep.subr.mxu0 0.0
    %670 = vmatpush1.xpose.msra.mxu0 0.0
    %671 = vmatprep.subr.mxu0 0.0
    %672 = vmatpush1.xpose.msra.mxu0 0.0
    %673 = vmatprep.subr.mxu0 0.0
    %674 = vmatpush1.xpose.msra.mxu0 0.0
    %675 = vmatprep.mubr.f32.mxu0 0.0
    %676 = vmatmul.mubr.f32.gmra.mrb[0].mxu0 %v561
    %v677 = vpop.f32.mrb[0].mxu0
    %v678 = vadd.f32 0.0, %v677
    %v679 = vpop.f32.mrb[0].mxu0
    %680 = vdwg.mxu0
    %v682 = vsel %vm559, %v16, 0
    %v685 = vsel %vm559, %v63, 0
    %v688 = vsel %vm559, %v64, 0
    %v691 = vsel %vm559, %v65, 0
    %v694 = vsel %vm559, %v66, 0
    %v697 = vsel %vm559, %v67, 0
    %v700 = vsel %vm559, %v68, 0
    %v703 = vsel %vm559, %v69, 0
    %v706 = vsel %vm559, %v70, 0
    %v709 = vsel %vm559, %v71, 0
    %v712 = vsel %vm559, %v72, 0
    %v715 = vsel %vm559, %v73, 0
    %v718 = vsel %vm559, %v74, 0
    %v721 = vsel %vm559, %v75, 0
    %v724 = vsel %vm559, %v76, 0
    %v727 = vsel %vm559, %v77, 0
    %v730 = vsel %vm559, %v78, 0
    %732 = vmatprep.subr.mxu0 0.0
    %733 = vmatpush1.xpose.msra.mxu0 %v685
    %734 = vmatprep.subr.mxu0 0.0
    %735 = vmatpush1.xpose.msra.mxu0 %v688
    %736 = vmatprep.subr.mxu0 0.0
    %737 = vmatpush1.xpose.msra.mxu0 %v691
    %738 = vmatprep.subr.mxu0 0.0
    %739 = vmatpush1.xpose.msra.mxu0 %v694
    %740 = vmatprep.subr.mxu0 0.0
    %741 = vmatpush1.xpose.msra.mxu0 %v697
    %742 = vmatprep.subr.mxu0 0.0
    %743 = vmatpush1.xpose.msra.mxu0 %v700
    %744 = vmatprep.subr.mxu0 0.0
    %745 = vmatpush1.xpose.msra.mxu0 %v703
    %746 = vmatprep.subr.mxu0 0.0
    %747 = vmatpush1.xpose.msra.mxu0 %v706
    %748 = vmatprep.subr.mxu0 0.0
    %749 = vmatpush1.xpose.msra.mxu0 %v709
    %750 = vmatprep.subr.mxu0 0.0
    %751 = vmatpush1.xpose.msra.mxu0 %v712
    %752 = vmatprep.subr.mxu0 0.0
    %753 = vmatpush1.xpose.msra.mxu0 %v715
    %754 = vmatprep.subr.mxu0 0.0
    %755 = vmatpush1.xpose.msra.mxu0 %v718
    %756 = vmatprep.subr.mxu0 0.0
    %757 = vmatpush1.xpose.msra.mxu0 %v721
    %758 = vmatprep.subr.mxu0 0.0
    %759 = vmatpush1.xpose.msra.mxu0 %v724
    %760 = vmatprep.subr.mxu0 0.0
    %761 = vmatpush1.xpose.msra.mxu0 %v727
    %762 = vmatprep.subr.mxu0 0.0
    %763 = vmatpush1.xpose.msra.mxu0 %v730
    %764 = vmatprep.subr.mxu0 0.0
    %765 = vmatpush1.xpose.msra.mxu0 0.0
    %766 = vmatprep.subr.mxu0 0.0
    %767 = vmatpush1.xpose.msra.mxu0 0.0
    %768 = vmatprep.subr.mxu0 0.0
    %769 = vmatpush1.xpose.msra.mxu0 0.0
    %770 = vmatprep.subr.mxu0 0.0
    %771 = vmatpush1.xpose.msra.mxu0 0.0
    %772 = vmatprep.subr.mxu0 0.0
    %773 = vmatpush1.xpose.msra.mxu0 0.0
    %774 = vmatprep.subr.mxu0 0.0
    %775 = vmatpush1.xpose.msra.mxu0 0.0
    %776 = vmatprep.subr.mxu0 0.0
    %777 = vmatpush1.xpose.msra.mxu0 0.0
    %778 = vmatprep.subr.mxu0 0.0
    %779 = vmatpush1.xpose.msra.mxu0 0.0
    %780 = vmatprep.subr.mxu0 0.0
    %781 = vmatpush1.xpose.msra.mxu0 0.0
    %782 = vmatprep.subr.mxu0 0.0
    %783 = vmatpush1.xpose.msra.mxu0 0.0
    %784 = vmatprep.subr.mxu0 0.0
    %785 = vmatpush1.xpose.msra.mxu0 0.0
    %786 = vmatprep.subr.mxu0 0.0
    %787 = vmatpush1.xpose.msra.mxu0 0.0
    %788 = vmatprep.subr.mxu0 0.0
    %789 = vmatpush1.xpose.msra.mxu0 0.0
    %790 = vmatprep.subr.mxu0 0.0
    %791 = vmatpush1.xpose.msra.mxu0 0.0
    %792 = vmatprep.subr.mxu0 0.0
    %793 = vmatpush1.xpose.msra.mxu0 0.0
    %794 = vmatprep.subr.mxu0 0.0
    %795 = vmatpush1.xpose.msra.mxu0 0.0
    %796 = vmatprep.mubr.f32.mxu0 0.0
    %797 = vmatmul.mubr.f32.gmra.mrb[0].mxu0 %v682
    %v798 = vpop.f32.mrb[0].mxu0
    %v799 = vadd.f32 0.0, %v798
    %v800 = vpop.f32.mrb[0].mxu0
    %801 = vdwg.mxu0
    %v803 = vsel %vm559, %v17, 0
    %v806 = vsel %vm559, %v79, 0
    %v809 = vsel %vm559, %v80, 0
    %v812 = vsel %vm559, %v81, 0
    %v815 = vsel %vm559, %v82, 0
    %v818 = vsel %vm559, %v83, 0
    %v821 = vsel %vm559, %v84, 0
    %v824 = vsel %vm559, %v85, 0
    %v827 = vsel %vm559, %v86, 0
    %v830 = vsel %vm559, %v87, 0
    %v833 = vsel %vm559, %v88, 0
    %v836 = vsel %vm559, %v89, 0
    %v839 = vsel %vm559, %v90, 0
    %v842 = vsel %vm559, %v91, 0
    %v845 = vsel %vm559, %v92, 0
    %v848 = vsel %vm559, %v93, 0
    %v851 = vsel %vm559, %v94, 0
    %853 = vmatprep.subr.mxu0 0.0
    %854 = vmatpush1.xpose.msra.mxu0 %v806
    %855 = vmatprep.subr.mxu0 0.0
    %856 = vmatpush1.xpose.msra.mxu0 %v809
    %857 = vmatprep.subr.mxu0 0.0
    %858 = vmatpush1.xpose.msra.mxu0 %v812
    %859 = vmatprep.subr.mxu0 0.0
    %860 = vmatpush1.xpose.msra.mxu0 %v815
    %861 = vmatprep.subr.mxu0 0.0
    %862 = vmatpush1.xpose.msra.mxu0 %v818
    %863 = vmatprep.subr.mxu0 0.0
    %864 = vmatpush1.xpose.msra.mxu0 %v821
    %865 = vmatprep.subr.mxu0 0.0
    %866 = vmatpush1.xpose.msra.mxu0 %v824
    %867 = vmatprep.subr.mxu0 0.0
    %868 = vmatpush1.xpose.msra.mxu0 %v827
    %869 = vmatprep.subr.mxu0 0.0
    %870 = vmatpush1.xpose.msra.mxu0 %v830
    %871 = vmatprep.subr.mxu0 0.0
    %872 = vmatpush1.xpose.msra.mxu0 %v833
    %873 = vmatprep.subr.mxu0 0.0
    %874 = vmatpush1.xpose.msra.mxu0 %v836
    %875 = vmatprep.subr.mxu0 0.0
    %876 = vmatpush1.xpose.msra.mxu0 %v839
    %877 = vmatprep.subr.mxu0 0.0
    %878 = vmatpush1.xpose.msra.mxu0 %v842
    %879 = vmatprep.subr.mxu0 0.0
    %880 = vmatpush1.xpose.msra.mxu0 %v845
    %881 = vmatprep.subr.mxu0 0.0
    %882 = vmatpush1.xpose.msra.mxu0 %v848
    %883 = vmatprep.subr.mxu0 0.0
    %884 = vmatpush1.xpose.msra.mxu0 %v851
    %885 = vmatprep.subr.mxu0 0.0
    %886 = vmatpush1.xpose.msra.mxu0 0.0
    %887 = vmatprep.subr.mxu0 0.0
    %888 = vmatpush1.xpose.msra.mxu0 0.0
    %889 = vmatprep.subr.mxu0 0.0
    %890 = vmatpush1.xpose.msra.mxu0 0.0
    %891 = vmatprep.subr.mxu0 0.0
    %892 = vmatpush1.xpose.msra.mxu0 0.0
    %893 = vmatprep.subr.mxu0 0.0
    %894 = vmatpush1.xpose.msra.mxu0 0.0
    %895 = vmatprep.subr.mxu0 0.0
    %896 = vmatpush1.xpose.msra.mxu0 0.0
    %897 = vmatprep.subr.mxu0 0.0
    %898 = vmatpush1.xpose.msra.mxu0 0.0
    %899 = vmatprep.subr.mxu0 0.0
    %900 = vmatpush1.xpose.msra.mxu0 0.0
    %901 = vmatprep.subr.mxu0 0.0
    %902 = vmatpush1.xpose.msra.mxu0 0.0
    %903 = vmatprep.subr.mxu0 0.0
    %904 = vmatpush1.xpose.msra.mxu0 0.0
    %905 = vmatprep.subr.mxu0 0.0
    %906 = vmatpush1.xpose.msra.mxu0 0.0
    %907 = vmatprep.subr.mxu0 0.0
    %908 = vmatpush1.xpose.msra.mxu0 0.0
    %909 = vmatprep.subr.mxu0 0.0
    %910 = vmatpush1.xpose.msra.mxu0 0.0
    %911 = vmatprep.subr.mxu0 0.0
    %912 = vmatpush1.xpose.msra.mxu0 0.0
    %913 = vmatprep.subr.mxu0 0.0
    %914 = vmatpush1.xpose.msra.mxu0 0.0
    %915 = vmatprep.subr.mxu0 0.0
    %916 = vmatpush1.xpose.msra.mxu0 0.0
    %917 = vmatprep.mubr.f32.mxu0 0.0
    %918 = vmatmul.mubr.f32.gmra.mrb[0].mxu0 %v803
    %v919 = vpop.f32.mrb[0].mxu0
    %v920 = vadd.f32 0.0, %v919
    %v921 = vpop.f32.mrb[0].mxu0
    %922 = vdwg.mxu0
    %v924 = vsel %vm559, %v18, 0
    %v927 = vsel %vm559, %v95, 0
    %v930 = vsel %vm559, %v96, 0
    %v933 = vsel %vm559, %v97, 0
    %v936 = vsel %vm559, %v98, 0
    %v939 = vsel %vm559, %v99, 0
    %v942 = vsel %vm559, %v100, 0
    %v945 = vsel %vm559, %v101, 0
    %v948 = vsel %vm559, %v102, 0
    %v951 = vsel %vm559, %v103, 0
    %v954 = vsel %vm559, %v104, 0
    %v957 = vsel %vm559, %v105, 0
    %v960 = vsel %vm559, %v106, 0
    %v963 = vsel %vm559, %v107, 0
    %v966 = vsel %vm559, %v108, 0
    %v969 = vsel %vm559, %v109, 0
    %v972 = vsel %vm559, %v110, 0
    %974 = vmatprep.subr.mxu0 0.0
    %975 = vmatpush1.xpose.msra.mxu0 %v927
    %976 = vmatprep.subr.mxu0 0.0
    %977 = vmatpush1.xpose.msra.mxu0 %v930
    %978 = vmatprep.subr.mxu0 0.0
    %979 = vmatpush1.xpose.msra.mxu0 %v933
    %980 = vmatprep.subr.mxu0 0.0
    %981 = vmatpush1.xpose.msra.mxu0 %v936
    %982 = vmatprep.subr.mxu0 0.0
    %983 = vmatpush1.xpose.msra.mxu0 %v939
    %984 = vmatprep.subr.mxu0 0.0
    %985 = vmatpush1.xpose.msra.mxu0 %v942
    %986 = vmatprep.subr.mxu0 0.0
    %987 = vmatpush1.xpose.msra.mxu0 %v945
    %988 = vmatprep.subr.mxu0 0.0
    %989 = vmatpush1.xpose.msra.mxu0 %v948
    %990 = vmatprep.subr.mxu0 0.0
    %991 = vmatpush1.xpose.msra.mxu0 %v951
    %992 = vmatprep.subr.mxu0 0.0
    %993 = vmatpush1.xpose.msra.mxu0 %v954
    %994 = vmatprep.subr.mxu0 0.0
    %995 = vmatpush1.xpose.msra.mxu0 %v957
    %996 = vmatprep.subr.mxu0 0.0
    %997 = vmatpush1.xpose.msra.mxu0 %v960
    %998 = vmatprep.subr.mxu0 0.0
    %999 = vmatpush1.xpose.msra.mxu0 %v963
    %1000 = vmatprep.subr.mxu0 0.0
    %1001 = vmatpush1.xpose.msra.mxu0 %v966
    %1002 = vmatprep.subr.mxu0 0.0
    %1003 = vmatpush1.xpose.msra.mxu0 %v969
    %1004 = vmatprep.subr.mxu0 0.0
    %1005 = vmatpush1.xpose.msra.mxu0 %v972
    %1006 = vmatprep.subr.mxu0 0.0
    %1007 = vmatpush1.xpose.msra.mxu0 0.0
    %1008 = vmatprep.subr.mxu0 0.0
    %1009 = vmatpush1.xpose.msra.mxu0 0.0
    %1010 = vmatprep.subr.mxu0 0.0
    %1011 = vmatpush1.xpose.msra.mxu0 0.0
    %1012 = vmatprep.subr.mxu0 0.0
    %1013 = vmatpush1.xpose.msra.mxu0 0.0
    %1014 = vmatprep.subr.mxu0 0.0
    %1015 = vmatpush1.xpose.msra.mxu0 0.0
    %1016 = vmatprep.subr.mxu0 0.0
    %1017 = vmatpush1.xpose.msra.mxu0 0.0
    %1018 = vmatprep.subr.mxu0 0.0
    %1019 = vmatpush1.xpose.msra.mxu0 0.0
    %1020 = vmatprep.subr.mxu0 0.0
    %1021 = vmatpush1.xpose.msra.mxu0 0.0
    %1022 = vmatprep.subr.mxu0 0.0
    %1023 = vmatpush1.xpose.msra.mxu0 0.0
    %1024 = vmatprep.subr.mxu0 0.0
    %1025 = vmatpush1.xpose.msra.mxu0 0.0
    %1026 = vmatprep.subr.mxu0 0.0
    %1027 = vmatpush1.xpose.msra.mxu0 0.0
    %1028 = vmatprep.subr.mxu0 0.0
    %1029 = vmatpush1.xpose.msra.mxu0 0.0
    %1030 = vmatprep.subr.mxu0 0.0
    %1031 = vmatpush1.xpose.msra.mxu0 0.0
    %1032 = vmatprep.subr.mxu0 0.0
    %1033 = vmatpush1.xpose.msra.mxu0 0.0
    %1034 = vmatprep.subr.mxu0 0.0
    %1035 = vmatpush1.xpose.msra.mxu0 0.0
    %1036 = vmatprep.subr.mxu0 0.0
    %1037 = vmatpush1.xpose.msra.mxu0 0.0
    %1038 = vmatprep.mubr.f32.mxu0 0.0
    %1039 = vmatmul.mubr.f32.gmra.mrb[0].mxu0 %v924
    %v1040 = vpop.f32.mrb[0].mxu0
    %v1041 = vadd.f32 0.0, %v1040
    %v1042 = vpop.f32.mrb[0].mxu0
    %1043 = vdwg.mxu0
    %v1045 = vsel %vm559, %v19, 0
    %v1048 = vsel %vm559, %v111, 0
    %v1051 = vsel %vm559, %v112, 0
    %v1054 = vsel %vm559, %v113, 0
    %v1057 = vsel %vm559, %v114, 0
    %v1060 = vsel %vm559, %v115, 0
    %v1063 = vsel %vm559, %v116, 0
    %v1066 = vsel %vm559, %v117, 0
    %v1069 = vsel %vm559, %v118, 0
    %v1072 = vsel %vm559, %v119, 0
    %v1075 = vsel %vm559, %v120, 0
    %v1078 = vsel %vm559, %v121, 0
    %v1081 = vsel %vm559, %v122, 0
    %v1084 = vsel %vm559, %v123, 0
    %v1087 = vsel %vm559, %v124, 0
    %v1090 = vsel %vm559, %v125, 0
    %v1093 = vsel %vm559, %v126, 0
    %1095 = vmatprep.subr.mxu0 0.0
    %1096 = vmatpush1.xpose.msra.mxu0 %v1048
    %1097 = vmatprep.subr.mxu0 0.0
    %1098 = vmatpush1.xpose.msra.mxu0 %v1051
    %1099 = vmatprep.subr.mxu0 0.0
    %1100 = vmatpush1.xpose.msra.mxu0 %v1054
    %1101 = vmatprep.subr.mxu0 0.0
    %1102 = vmatpush1.xpose.msra.mxu0 %v1057
    %1103 = vmatprep.subr.mxu0 0.0
    %1104 = vmatpush1.xpose.msra.mxu0 %v1060
    %1105 = vmatprep.subr.mxu0 0.0
    %1106 = vmatpush1.xpose.msra.mxu0 %v1063
    %1107 = vmatprep.subr.mxu0 0.0
    %1108 = vmatpush1.xpose.msra.mxu0 %v1066
    %1109 = vmatprep.subr.mxu0 0.0
    %1110 = vmatpush1.xpose.msra.mxu0 %v1069
    %1111 = vmatprep.subr.mxu0 0.0
    %1112 = vmatpush1.xpose.msra.mxu0 %v1072
    %1113 = vmatprep.subr.mxu0 0.0
    %1114 = vmatpush1.xpose.msra.mxu0 %v1075
    %1115 = vmatprep.subr.mxu0 0.0
    %1116 = vmatpush1.xpose.msra.mxu0 %v1078
    %1117 = vmatprep.subr.mxu0 0.0
    %1118 = vmatpush1.xpose.msra.mxu0 %v1081
    %1119 = vmatprep.subr.mxu0 0.0
    %1120 = vmatpush1.xpose.msra.mxu0 %v1084
    %1121 = vmatprep.subr.mxu0 0.0
    %1122 = vmatpush1.xpose.msra.mxu0 %v1087
    %1123 = vmatprep.subr.mxu0 0.0
    %1124 = vmatpush1.xpose.msra.mxu0 %v1090
    %1125 = vmatprep.subr.mxu0 0.0
    %1126 = vmatpush1.xpose.msra.mxu0 %v1093
    %1127 = vmatprep.subr.mxu0 0.0
    %1128 = vmatpush1.xpose.msra.mxu0 0.0
    %1129 = vmatprep.subr.mxu0 0.0
    %1130 = vmatpush1.xpose.msra.mxu0 0.0
    %1131 = vmatprep.subr.mxu0 0.0
    %1132 = vmatpush1.xpose.msra.mxu0 0.0
    %1133 = vmatprep.subr.mxu0 0.0
    %1134 = vmatpush1.xpose.msra.mxu0 0.0
    %1135 = vmatprep.subr.mxu0 0.0
    %1136 = vmatpush1.xpose.msra.mxu0 0.0
    %1137 = vmatprep.subr.mxu0 0.0
    %1138 = vmatpush1.xpose.msra.mxu0 0.0
    %1139 = vmatprep.subr.mxu0 0.0
    %1140 = vmatpush1.xpose.msra.mxu0 0.0
    %1141 = vmatprep.subr.mxu0 0.0
    %1142 = vmatpush1.xpose.msra.mxu0 0.0
    %1143 = vmatprep.subr.mxu0 0.0
    %1144 = vmatpush1.xpose.msra.mxu0 0.0
    %1145 = vmatprep.subr.mxu0 0.0
    %1146 = vmatpush1.xpose.msra.mxu0 0.0
    %1147 = vmatprep.subr.mxu0 0.0
    %1148 = vmatpush1.xpose.msra.mxu0 0.0
    %1149 = vmatprep.subr.mxu0 0.0
    %1150 = vmatpush1.xpose.msra.mxu0 0.0
    %1151 = vmatprep.subr.mxu0 0.0
    %1152 = vmatpush1.xpose.msra.mxu0 0.0
    %1153 = vmatprep.subr.mxu0 0.0
    %1154 = vmatpush1.xpose.msra.mxu0 0.0
    %1155 = vmatprep.subr.mxu0 0.0
    %1156 = vmatpush1.xpose.msra.mxu0 0.0
    %1157 = vmatprep.subr.mxu0 0.0
    %1158 = vmatpush1.xpose.msra.mxu0 0.0
    %1159 = vmatprep.mubr.f32.mxu0 0.0
    %1160 = vmatmul.mubr.f32.gmra.mrb[0].mxu0 %v1045
    %v1161 = vpop.f32.mrb[0].mxu0
    %v1162 = vadd.f32 0.0, %v1161
    %v1163 = vpop.f32.mrb[0].mxu0
    %1164 = vdwg.mxu0
    %v1166 = vsel %vm559, %v20, 0
    %v1169 = vsel %vm559, %v127, 0
    %v1172 = vsel %vm559, %v128, 0
    %v1175 = vsel %vm559, %v129, 0
    %v1178 = vsel %vm559, %v130, 0
    %v1181 = vsel %vm559, %v131, 0
    %v1184 = vsel %vm559, %v132, 0
    %v1187 = vsel %vm559, %v133, 0
    %v1190 = vsel %vm559, %v134, 0
    %v1193 = vsel %vm559, %v135, 0
    %v1196 = vsel %vm559, %v136, 0
    %v1199 = vsel %vm559, %v137, 0
    %v1202 = vsel %vm559, %v138, 0
    %v1205 = vsel %vm559, %v139, 0
    %v1208 = vsel %vm559, %v140, 0
    %v1211 = vsel %vm559, %v141, 0
    %v1214 = vsel %vm559, %v142, 0
    %1216 = vmatprep.subr.mxu0 0.0
    %1217 = vmatpush1.xpose.msra.mxu0 %v1169
    %1218 = vmatprep.subr.mxu0 0.0
    %1219 = vmatpush1.xpose.msra.mxu0 %v1172
    %1220 = vmatprep.subr.mxu0 0.0
    %1221 = vmatpush1.xpose.msra.mxu0 %v1175
    %1222 = vmatprep.subr.mxu0 0.0
    %1223 = vmatpush1.xpose.msra.mxu0 %v1178
    %1224 = vmatprep.subr.mxu0 0.0
    %1225 = vmatpush1.xpose.msra.mxu0 %v1181
    %1226 = vmatprep.subr.mxu0 0.0
    %1227 = vmatpush1.xpose.msra.mxu0 %v1184
    %1228 = vmatprep.subr.mxu0 0.0
    %1229 = vmatpush1.xpose.msra.mxu0 %v1187
    %1230 = vmatprep.subr.mxu0 0.0
    %1231 = vmatpush1.xpose.msra.mxu0 %v1190
    %1232 = vmatprep.subr.mxu0 0.0
    %1233 = vmatpush1.xpose.msra.mxu0 %v1193
    %1234 = vmatprep.subr.mxu0 0.0
    %1235 = vmatpush1.xpose.msra.mxu0 %v1196
    %1236 = vmatprep.subr.mxu0 0.0
    %1237 = vmatpush1.xpose.msra.mxu0 %v1199
    %1238 = vmatprep.subr.mxu0 0.0
    %1239 = vmatpush1.xpose.msra.mxu0 %v1202
    %1240 = vmatprep.subr.mxu0 0.0
    %1241 = vmatpush1.xpose.msra.mxu0 %v1205
    %1242 = vmatprep.subr.mxu0 0.0
    %1243 = vmatpush1.xpose.msra.mxu0 %v1208
    %1244 = vmatprep.subr.mxu0 0.0
    %1245 = vmatpush1.xpose.msra.mxu0 %v1211
    %1246 = vmatprep.subr.mxu0 0.0
    %1247 = vmatpush1.xpose.msra.mxu0 %v1214
    %1248 = vmatprep.subr.mxu0 0.0
    %1249 = vmatpush1.xpose.msra.mxu0 0.0
    %1250 = vmatprep.subr.mxu0 0.0
    %1251 = vmatpush1.xpose.msra.mxu0 0.0
    %1252 = vmatprep.subr.mxu0 0.0
    %1253 = vmatpush1.xpose.msra.mxu0 0.0
    %1254 = vmatprep.subr.mxu0 0.0
    %1255 = vmatpush1.xpose.msra.mxu0 0.0
    %1256 = vmatprep.subr.mxu0 0.0
    %1257 = vmatpush1.xpose.msra.mxu0 0.0
    %1258 = vmatprep.subr.mxu0 0.0
    %1259 = vmatpush1.xpose.msra.mxu0 0.0
    %1260 = vmatprep.subr.mxu0 0.0
    %1261 = vmatpush1.xpose.msra.mxu0 0.0
    %1262 = vmatprep.subr.mxu0 0.0
    %1263 = vmatpush1.xpose.msra.mxu0 0.0
    %1264 = vmatprep.subr.mxu0 0.0
    %1265 = vmatpush1.xpose.msra.mxu0 0.0
    %1266 = vmatprep.subr.mxu0 0.0
    %1267 = vmatpush1.xpose.msra.mxu0 0.0
    %1268 = vmatprep.subr.mxu0 0.0
    %1269 = vmatpush1.xpose.msra.mxu0 0.0
    %1270 = vmatprep.subr.mxu0 0.0
    %1271 = vmatpush1.xpose.msra.mxu0 0.0
    %1272 = vmatprep.subr.mxu0 0.0
    %1273 = vmatpush1.xpose.msra.mxu0 0.0
    %1274 = vmatprep.subr.mxu0 0.0
    %1275 = vmatpush1.xpose.msra.mxu0 0.0
    %1276 = vmatprep.subr.mxu0 0.0
    %1277 = vmatpush1.xpose.msra.mxu0 0.0
    %1278 = vmatprep.subr.mxu0 0.0
    %1279 = vmatpush1.xpose.msra.mxu0 0.0
    %1280 = vmatprep.mubr.f32.mxu0 0.0
    %1281 = vmatmul.mubr.f32.gmra.mrb[0].mxu0 %v1166
    %v1282 = vpop.f32.mrb[0].mxu0
    %v1283 = vadd.f32 0.0, %v1282
    %v1284 = vpop.f32.mrb[0].mxu0
    %1285 = vdwg.mxu0
    %v1287 = vsel %vm559, %v21, 0
    %v1290 = vsel %vm559, %v143, 0
    %v1293 = vsel %vm559, %v144, 0
    %v1296 = vsel %vm559, %v145, 0
    %v1299 = vsel %vm559, %v146, 0
    %v1302 = vsel %vm559, %v147, 0
    %v1305 = vsel %vm559, %v148, 0
    %v1308 = vsel %vm559, %v149, 0
    %v1311 = vsel %vm559, %v150, 0
    %v1314 = vsel %vm559, %v151, 0
    %v1317 = vsel %vm559, %v152, 0
    %v1320 = vsel %vm559, %v153, 0
    %v1323 = vsel %vm559, %v154, 0
    %v1326 = vsel %vm559, %v155, 0
    %v1329 = vsel %vm559, %v156, 0
    %v1332 = vsel %vm559, %v157, 0
    %v1335 = vsel %vm559, %v158, 0
    %1337 = vmatprep.subr.mxu0 0.0
    %1338 = vmatpush1.xpose.msra.mxu0 %v1290
    %1339 = vmatprep.subr.mxu0 0.0
    %1340 = vmatpush1.xpose.msra.mxu0 %v1293
    %1341 = vmatprep.subr.mxu0 0.0
    %1342 = vmatpush1.xpose.msra.mxu0 %v1296
    %1343 = vmatprep.subr.mxu0 0.0
    %1344 = vmatpush1.xpose.msra.mxu0 %v1299
    %1345 = vmatprep.subr.mxu0 0.0
    %1346 = vmatpush1.xpose.msra.mxu0 %v1302
    %1347 = vmatprep.subr.mxu0 0.0
    %1348 = vmatpush1.xpose.msra.mxu0 %v1305
    %1349 = vmatprep.subr.mxu0 0.0
    %1350 = vmatpush1.xpose.msra.mxu0 %v1308
    %1351 = vmatprep.subr.mxu0 0.0
    %1352 = vmatpush1.xpose.msra.mxu0 %v1311
    %1353 = vmatprep.subr.mxu0 0.0
    %1354 = vmatpush1.xpose.msra.mxu0 %v1314
    %1355 = vmatprep.subr.mxu0 0.0
    %1356 = vmatpush1.xpose.msra.mxu0 %v1317
    %1357 = vmatprep.subr.mxu0 0.0
    %1358 = vmatpush1.xpose.msra.mxu0 %v1320
    %1359 = vmatprep.subr.mxu0 0.0
    %1360 = vmatpush1.xpose.msra.mxu0 %v1323
    %1361 = vmatprep.subr.mxu0 0.0
    %1362 = vmatpush1.xpose.msra.mxu0 %v1326
    %1363 = vmatprep.subr.mxu0 0.0
    %1364 = vmatpush1.xpose.msra.mxu0 %v1329
    %1365 = vmatprep.subr.mxu0 0.0
    %1366 = vmatpush1.xpose.msra.mxu0 %v1332
    %1367 = vmatprep.subr.mxu0 0.0
    %1368 = vmatpush1.xpose.msra.mxu0 %v1335
    %1369 = vmatprep.subr.mxu0 0.0
    %1370 = vmatpush1.xpose.msra.mxu0 0.0
    %1371 = vmatprep.subr.mxu0 0.0
    %1372 = vmatpush1.xpose.msra.mxu0 0.0
    %1373 = vmatprep.subr.mxu0 0.0
    %1374 = vmatpush1.xpose.msra.mxu0 0.0
    %1375 = vmatprep.subr.mxu0 0.0
    %1376 = vmatpush1.xpose.msra.mxu0 0.0
    %1377 = vmatprep.subr.mxu0 0.0
    %1378 = vmatpush1.xpose.msra.mxu0 0.0
    %1379 = vmatprep.subr.mxu0 0.0
    %1380 = vmatpush1.xpose.msra.mxu0 0.0
    %1381 = vmatprep.subr.mxu0 0.0
    %1382 = vmatpush1.xpose.msra.mxu0 0.0
    %1383 = vmatprep.subr.mxu0 0.0
    %1384 = vmatpush1.xpose.msra.mxu0 0.0
    %1385 = vmatprep.subr.mxu0 0.0
    %1386 = vmatpush1.xpose.msra.mxu0 0.0
    %1387 = vmatprep.subr.mxu0 0.0
    %1388 = vmatpush1.xpose.msra.mxu0 0.0
    %1389 = vmatprep.subr.mxu0 0.0
    %1390 = vmatpush1.xpose.msra.mxu0 0.0
    %1391 = vmatprep.subr.mxu0 0.0
    %1392 = vmatpush1.xpose.msra.mxu0 0.0
    %1393 = vmatprep.subr.mxu0 0.0
    %1394 = vmatpush1.xpose.msra.mxu0 0.0
    %1395 = vmatprep.subr.mxu0 0.0
    %1396 = vmatpush1.xpose.msra.mxu0 0.0
    %1397 = vmatprep.subr.mxu0 0.0
    %1398 = vmatpush1.xpose.msra.mxu0 0.0
    %1399 = vmatprep.subr.mxu0 0.0
    %1400 = vmatpush1.xpose.msra.mxu0 0.0
    %1401 = vmatprep.mubr.f32.mxu0 0.0
    %1402 = vmatmul.mubr.f32.gmra.mrb[0].mxu0 %v1287
    %v1403 = vpop.f32.mrb[0].mxu0
    %v1404 = vadd.f32 0.0, %v1403
    %v1405 = vpop.f32.mrb[0].mxu0
    %1406 = vdwg.mxu0
    %v1408 = vsel %vm559, %v22, 0
    %v1411 = vsel %vm559, %v159, 0
    %v1414 = vsel %vm559, %v160, 0
    %v1417 = vsel %vm559, %v161, 0
    %v1420 = vsel %vm559, %v162, 0
    %v1423 = vsel %vm559, %v163, 0
    %v1426 = vsel %vm559, %v164, 0
    %v1429 = vsel %vm559, %v165, 0
    %v1432 = vsel %vm559, %v166, 0
    %v1435 = vsel %vm559, %v167, 0
    %v1438 = vsel %vm559, %v168, 0
    %v1441 = vsel %vm559, %v169, 0
    %v1444 = vsel %vm559, %v170, 0
    %v1447 = vsel %vm559, %v171, 0
    %v1450 = vsel %vm559, %v172, 0
    %v1453 = vsel %vm559, %v173, 0
    %v1456 = vsel %vm559, %v174, 0
    %1458 = vmatprep.subr.mxu0 0.0
    %1459 = vmatpush1.xpose.msra.mxu0 %v1411
    %1460 = vmatprep.subr.mxu0 0.0
    %1461 = vmatpush1.xpose.msra.mxu0 %v1414
    %1462 = vmatprep.subr.mxu0 0.0
    %1463 = vmatpush1.xpose.msra.mxu0 %v1417
    %1464 = vmatprep.subr.mxu0 0.0
    %1465 = vmatpush1.xpose.msra.mxu0 %v1420
    %1466 = vmatprep.subr.mxu0 0.0
    %1467 = vmatpush1.xpose.msra.mxu0 %v1423
    %1468 = vmatprep.subr.mxu0 0.0
    %1469 = vmatpush1.xpose.msra.mxu0 %v1426
    %1470 = vmatprep.subr.mxu0 0.0
    %1471 = vmatpush1.xpose.msra.mxu0 %v1429
    %1472 = vmatprep.subr.mxu0 0.0
    %1473 = vmatpush1.xpose.msra.mxu0 %v1432
    %1474 = vmatprep.subr.mxu0 0.0
    %1475 = vmatpush1.xpose.msra.mxu0 %v1435
    %1476 = vmatprep.subr.mxu0 0.0
    %1477 = vmatpush1.xpose.msra.mxu0 %v1438
    %1478 = vmatprep.subr.mxu0 0.0
    %1479 = vmatpush1.xpose.msra.mxu0 %v1441
    %1480 = vmatprep.subr.mxu0 0.0
    %1481 = vmatpush1.xpose.msra.mxu0 %v1444
    %1482 = vmatprep.subr.mxu0 0.0
    %1483 = vmatpush1.xpose.msra.mxu0 %v1447
    %1484 = vmatprep.subr.mxu0 0.0
    %1485 = vmatpush1.xpose.msra.mxu0 %v1450
    %1486 = vmatprep.subr.mxu0 0.0
    %1487 = vmatpush1.xpose.msra.mxu0 %v1453
    %1488 = vmatprep.subr.mxu0 0.0
    %1489 = vmatpush1.xpose.msra.mxu0 %v1456
    %1490 = vmatprep.subr.mxu0 0.0
    %1491 = vmatpush1.xpose.msra.mxu0 0.0
    %1492 = vmatprep.subr.mxu0 0.0
    %1493 = vmatpush1.xpose.msra.mxu0 0.0
    %1494 = vmatprep.subr.mxu0 0.0
    %1495 = vmatpush1.xpose.msra.mxu0 0.0
    %1496 = vmatprep.subr.mxu0 0.0
    %1497 = vmatpush1.xpose.msra.mxu0 0.0
    %1498 = vmatprep.subr.mxu0 0.0
    %1499 = vmatpush1.xpose.msra.mxu0 0.0
    %1500 = vmatprep.subr.mxu0 0.0
    %1501 = vmatpush1.xpose.msra.mxu0 0.0
    %1502 = vmatprep.subr.mxu0 0.0
    %1503 = vmatpush1.xpose.msra.mxu0 0.0
    %1504 = vmatprep.subr.mxu0 0.0
    %1505 = vmatpush1.xpose.msra.mxu0 0.0
    %1506 = vmatprep.subr.mxu0 0.0
    %1507 = vmatpush1.xpose.msra.mxu0 0.0
    %1508 = vmatprep.subr.mxu0 0.0
    %1509 = vmatpush1.xpose.msra.mxu0 0.0
    %1510 = vmatprep.subr.mxu0 0.0
    %1511 = vmatpush1.xpose.msra.mxu0 0.0
    %1512 = vmatprep.subr.mxu0 0.0
    %1513 = vmatpush1.xpose.msra.mxu0 0.0
    %1514 = vmatprep.subr.mxu0 0.0
    %1515 = vmatpush1.xpose.msra.mxu0 0.0
    %1516 = vmatprep.subr.mxu0 0.0
    %1517 = vmatpush1.xpose.msra.mxu0 0.0
    %1518 = vmatprep.subr.mxu0 0.0
    %1519 = vmatpush1.xpose.msra.mxu0 0.0
    %1520 = vmatprep.subr.mxu0 0.0
    %1521 = vmatpush1.xpose.msra.mxu0 0.0
    %1522 = vmatprep.mubr.f32.mxu0 0.0
    %1523 = vmatmul.mubr.f32.gmra.mrb[0].mxu0 %v1408
    %v1524 = vpop.f32.mrb[0].mxu0
    %v1525 = vadd.f32 0.0, %v1524
    %v1526 = vpop.f32.mrb[0].mxu0
    %1527 = vdwg.mxu0
    %v1529 = vsel %vm559, %v23, 0
    %v1532 = vsel %vm559, %v175, 0
    %v1535 = vsel %vm559, %v176, 0
    %v1538 = vsel %vm559, %v177, 0
    %v1541 = vsel %vm559, %v178, 0
    %v1544 = vsel %vm559, %v179, 0
    %v1547 = vsel %vm559, %v180, 0
    %v1550 = vsel %vm559, %v181, 0
    %v1553 = vsel %vm559, %v182, 0
    %v1556 = vsel %vm559, %v183, 0
    %v1559 = vsel %vm559, %v184, 0
    %v1562 = vsel %vm559, %v185, 0
    %v1565 = vsel %vm559, %v186, 0
    %v1568 = vsel %vm559, %v187, 0
    %v1571 = vsel %vm559, %v188, 0
    %v1574 = vsel %vm559, %v189, 0
    %v1577 = vsel %vm559, %v190, 0
    %1579 = vmatprep.subr.mxu0 0.0
    %1580 = vmatpush1.xpose.msra.mxu0 %v1532
    %1581 = vmatprep.subr.mxu0 0.0
    %1582 = vmatpush1.xpose.msra.mxu0 %v1535
    %1583 = vmatprep.subr.mxu0 0.0
    %1584 = vmatpush1.xpose.msra.mxu0 %v1538
    %1585 = vmatprep.subr.mxu0 0.0
    %1586 = vmatpush1.xpose.msra.mxu0 %v1541
    %1587 = vmatprep.subr.mxu0 0.0
    %1588 = vmatpush1.xpose.msra.mxu0 %v1544
    %1589 = vmatprep.subr.mxu0 0.0
    %1590 = vmatpush1.xpose.msra.mxu0 %v1547
    %1591 = vmatprep.subr.mxu0 0.0
    %1592 = vmatpush1.xpose.msra.mxu0 %v1550
    %1593 = vmatprep.subr.mxu0 0.0
    %1594 = vmatpush1.xpose.msra.mxu0 %v1553
    %1595 = vmatprep.subr.mxu0 0.0
    %1596 = vmatpush1.xpose.msra.mxu0 %v1556
    %1597 = vmatprep.subr.mxu0 0.0
    %1598 = vmatpush1.xpose.msra.mxu0 %v1559
    %1599 = vmatprep.subr.mxu0 0.0
    %1600 = vmatpush1.xpose.msra.mxu0 %v1562
    %1601 = vmatprep.subr.mxu0 0.0
    %1602 = vmatpush1.xpose.msra.mxu0 %v1565
    %1603 = vmatprep.subr.mxu0 0.0
    %1604 = vmatpush1.xpose.msra.mxu0 %v1568
    %1605 = vmatprep.subr.mxu0 0.0
    %1606 = vmatpush1.xpose.msra.mxu0 %v1571
    %1607 = vmatprep.subr.mxu0 0.0
    %1608 = vmatpush1.xpose.msra.mxu0 %v1574
    %1609 = vmatprep.subr.mxu0 0.0
    %1610 = vmatpush1.xpose.msra.mxu0 %v1577
    %1611 = vmatprep.subr.mxu0 0.0
    %1612 = vmatpush1.xpose.msra.mxu0 0.0
    %1613 = vmatprep.subr.mxu0 0.0
    %1614 = vmatpush1.xpose.msra.mxu0 0.0
    %1615 = vmatprep.subr.mxu0 0.0
    %1616 = vmatpush1.xpose.msra.mxu0 0.0
    %1617 = vmatprep.subr.mxu0 0.0
    %1618 = vmatpush1.xpose.msra.mxu0 0.0
    %1619 = vmatprep.subr.mxu0 0.0
    %1620 = vmatpush1.xpose.msra.mxu0 0.0
    %1621 = vmatprep.subr.mxu0 0.0
    %1622 = vmatpush1.xpose.msra.mxu0 0.0
    %1623 = vmatprep.subr.mxu0 0.0
    %1624 = vmatpush1.xpose.msra.mxu0 0.0
    %1625 = vmatprep.subr.mxu0 0.0
    %1626 = vmatpush1.xpose.msra.mxu0 0.0
    %1627 = vmatprep.subr.mxu0 0.0
    %1628 = vmatpush1.xpose.msra.mxu0 0.0
    %1629 = vmatprep.subr.mxu0 0.0
    %1630 = vmatpush1.xpose.msra.mxu0 0.0
    %1631 = vmatprep.subr.mxu0 0.0
    %1632 = vmatpush1.xpose.msra.mxu0 0.0
    %1633 = vmatprep.subr.mxu0 0.0
    %1634 = vmatpush1.xpose.msra.mxu0 0.0
    %1635 = vmatprep.subr.mxu0 0.0
    %1636 = vmatpush1.xpose.msra.mxu0 0.0
    %1637 = vmatprep.subr.mxu0 0.0
    %1638 = vmatpush1.xpose.msra.mxu0 0.0
    %1639 = vmatprep.subr.mxu0 0.0
    %1640 = vmatpush1.xpose.msra.mxu0 0.0
    %1641 = vmatprep.subr.mxu0 0.0
    %1642 = vmatpush1.xpose.msra.mxu0 0.0
    %1643 = vmatprep.mubr.f32.mxu0 0.0
    %1644 = vmatmul.mubr.f32.gmra.mrb[0].mxu0 %v1529
    %v1645 = vpop.f32.mrb[0].mxu0
    %v1646 = vadd.f32 0.0, %v1645
    %v1647 = vpop.f32.mrb[0].mxu0
    %1648 = vdwg.mxu0
    %v1650 = vsel %vm559, %v24, 0
    %v1653 = vsel %vm559, %v191, 0
    %v1656 = vsel %vm559, %v192, 0
    %v1659 = vsel %vm559, %v193, 0
    %v1662 = vsel %vm559, %v194, 0
    %v1665 = vsel %vm559, %v195, 0
    %v1668 = vsel %vm559, %v196, 0
    %v1671 = vsel %vm559, %v197, 0
    %v1674 = vsel %vm559, %v198, 0
    %v1677 = vsel %vm559, %v199, 0
    %v1680 = vsel %vm559, %v200, 0
    %v1683 = vsel %vm559, %v201, 0
    %v1686 = vsel %vm559, %v202, 0
    %v1689 = vsel %vm559, %v203, 0
    %v1692 = vsel %vm559, %v204, 0
    %v1695 = vsel %vm559, %v205, 0
    %v1698 = vsel %vm559, %v206, 0
    %1700 = vmatprep.subr.mxu0 0.0
    %1701 = vmatpush1.xpose.msra.mxu0 %v1653
    %1702 = vmatprep.subr.mxu0 0.0
    %1703 = vmatpush1.xpose.msra.mxu0 %v1656
    %1704 = vmatprep.subr.mxu0 0.0
    %1705 = vmatpush1.xpose.msra.mxu0 %v1659
    %1706 = vmatprep.subr.mxu0 0.0
    %1707 = vmatpush1.xpose.msra.mxu0 %v1662
    %1708 = vmatprep.subr.mxu0 0.0
    %1709 = vmatpush1.xpose.msra.mxu0 %v1665
    %1710 = vmatprep.subr.mxu0 0.0
    %1711 = vmatpush1.xpose.msra.mxu0 %v1668
    %1712 = vmatprep.subr.mxu0 0.0
    %1713 = vmatpush1.xpose.msra.mxu0 %v1671
    %1714 = vmatprep.subr.mxu0 0.0
    %1715 = vmatpush1.xpose.msra.mxu0 %v1674
    %1716 = vmatprep.subr.mxu0 0.0
    %1717 = vmatpush1.xpose.msra.mxu0 %v1677
    %1718 = vmatprep.subr.mxu0 0.0
    %1719 = vmatpush1.xpose.msra.mxu0 %v1680
    %1720 = vmatprep.subr.mxu0 0.0
    %1721 = vmatpush1.xpose.msra.mxu0 %v1683
    %1722 = vmatprep.subr.mxu0 0.0
    %1723 = vmatpush1.xpose.msra.mxu0 %v1686
    %1724 = vmatprep.subr.mxu0 0.0
    %1725 = vmatpush1.xpose.msra.mxu0 %v1689
    %1726 = vmatprep.subr.mxu0 0.0
    %1727 = vmatpush1.xpose.msra.mxu0 %v1692
    %1728 = vmatprep.subr.mxu0 0.0
    %1729 = vmatpush1.xpose.msra.mxu0 %v1695
    %1730 = vmatprep.subr.mxu0 0.0
    %1731 = vmatpush1.xpose.msra.mxu0 %v1698
    %1732 = vmatprep.subr.mxu0 0.0
    %1733 = vmatpush1.xpose.msra.mxu0 0.0
    %1734 = vmatprep.subr.mxu0 0.0
    %1735 = vmatpush1.xpose.msra.mxu0 0.0
    %1736 = vmatprep.subr.mxu0 0.0
    %1737 = vmatpush1.xpose.msra.mxu0 0.0
    %1738 = vmatprep.subr.mxu0 0.0
    %1739 = vmatpush1.xpose.msra.mxu0 0.0
    %1740 = vmatprep.subr.mxu0 0.0
    %1741 = vmatpush1.xpose.msra.mxu0 0.0
    %1742 = vmatprep.subr.mxu0 0.0
    %1743 = vmatpush1.xpose.msra.mxu0 0.0
    %1744 = vmatprep.subr.mxu0 0.0
    %1745 = vmatpush1.xpose.msra.mxu0 0.0
    %1746 = vmatprep.subr.mxu0 0.0
    %1747 = vmatpush1.xpose.msra.mxu0 0.0
    %1748 = vmatprep.subr.mxu0 0.0
    %1749 = vmatpush1.xpose.msra.mxu0 0.0
    %1750 = vmatprep.subr.mxu0 0.0
    %1751 = vmatpush1.xpose.msra.mxu0 0.0
    %1752 = vmatprep.subr.mxu0 0.0
    %1753 = vmatpush1.xpose.msra.mxu0 0.0
    %1754 = vmatprep.subr.mxu0 0.0
    %1755 = vmatpush1.xpose.msra.mxu0 0.0
    %1756 = vmatprep.subr.mxu0 0.0
    %1757 = vmatpush1.xpose.msra.mxu0 0.0
    %1758 = vmatprep.subr.mxu0 0.0
    %1759 = vmatpush1.xpose.msra.mxu0 0.0
    %1760 = vmatprep.subr.mxu0 0.0
    %1761 = vmatpush1.xpose.msra.mxu0 0.0
    %1762 = vmatprep.subr.mxu0 0.0
    %1763 = vmatpush1.xpose.msra.mxu0 0.0
    %1764 = vmatprep.mubr.f32.mxu0 0.0
    %1765 = vmatmul.mubr.f32.gmra.mrb[0].mxu0 %v1650
    %v1766 = vpop.f32.mrb[0].mxu0
    %v1767 = vadd.f32 0.0, %v1766
    %v1768 = vpop.f32.mrb[0].mxu0
    %1769 = vdwg.mxu0
    %v1771 = vsel %vm559, %v25, 0
    %v1774 = vsel %vm559, %v207, 0
    %v1777 = vsel %vm559, %v208, 0
    %v1780 = vsel %vm559, %v209, 0
    %v1783 = vsel %vm559, %v210, 0
    %v1786 = vsel %vm559, %v211, 0
    %v1789 = vsel %vm559, %v212, 0
    %v1792 = vsel %vm559, %v213, 0
    %v1795 = vsel %vm559, %v214, 0
    %v1798 = vsel %vm559, %v215, 0
    %v1801 = vsel %vm559, %v216, 0
    %v1804 = vsel %vm559, %v217, 0
    %v1807 = vsel %vm559, %v218, 0
    %v1810 = vsel %vm559, %v219, 0
    %v1813 = vsel %vm559, %v220, 0
    %v1816 = vsel %vm559, %v221, 0
    %v1819 = vsel %vm559, %v222, 0
    %1821 = vmatprep.subr.mxu0 0.0
    %1822 = vmatpush1.xpose.msra.mxu0 %v1774
    %1823 = vmatprep.subr.mxu0 0.0
    %1824 = vmatpush1.xpose.msra.mxu0 %v1777
    %1825 = vmatprep.subr.mxu0 0.0
    %1826 = vmatpush1.xpose.msra.mxu0 %v1780
    %1827 = vmatprep.subr.mxu0 0.0
    %1828 = vmatpush1.xpose.msra.mxu0 %v1783
    %1829 = vmatprep.subr.mxu0 0.0
    %1830 = vmatpush1.xpose.msra.mxu0 %v1786
    %1831 = vmatprep.subr.mxu0 0.0
    %1832 = vmatpush1.xpose.msra.mxu0 %v1789
    %1833 = vmatprep.subr.mxu0 0.0
    %1834 = vmatpush1.xpose.msra.mxu0 %v1792
    %1835 = vmatprep.subr.mxu0 0.0
    %1836 = vmatpush1.xpose.msra.mxu0 %v1795
    %1837 = vmatprep.subr.mxu0 0.0
    %1838 = vmatpush1.xpose.msra.mxu0 %v1798
    %1839 = vmatprep.subr.mxu0 0.0
    %1840 = vmatpush1.xpose.msra.mxu0 %v1801
    %1841 = vmatprep.subr.mxu0 0.0
    %1842 = vmatpush1.xpose.msra.mxu0 %v1804
    %1843 = vmatprep.subr.mxu0 0.0
    %1844 = vmatpush1.xpose.msra.mxu0 %v1807
    %1845 = vmatprep.subr.mxu0 0.0
    %1846 = vmatpush1.xpose.msra.mxu0 %v1810
    %1847 = vmatprep.subr.mxu0 0.0
    %1848 = vmatpush1.xpose.msra.mxu0 %v1813
    %1849 = vmatprep.subr.mxu0 0.0
    %1850 = vmatpush1.xpose.msra.mxu0 %v1816
    %1851 = vmatprep.subr.mxu0 0.0
    %1852 = vmatpush1.xpose.msra.mxu0 %v1819
    %1853 = vmatprep.subr.mxu0 0.0
    %1854 = vmatpush1.xpose.msra.mxu0 0.0
    %1855 = vmatprep.subr.mxu0 0.0
    %1856 = vmatpush1.xpose.msra.mxu0 0.0
    %1857 = vmatprep.subr.mxu0 0.0
    %1858 = vmatpush1.xpose.msra.mxu0 0.0
    %1859 = vmatprep.subr.mxu0 0.0
    %1860 = vmatpush1.xpose.msra.mxu0 0.0
    %1861 = vmatprep.subr.mxu0 0.0
    %1862 = vmatpush1.xpose.msra.mxu0 0.0
    %1863 = vmatprep.subr.mxu0 0.0
    %1864 = vmatpush1.xpose.msra.mxu0 0.0
    %1865 = vmatprep.subr.mxu0 0.0
    %1866 = vmatpush1.xpose.msra.mxu0 0.0
    %1867 = vmatprep.subr.mxu0 0.0
    %1868 = vmatpush1.xpose.msra.mxu0 0.0
    %1869 = vmatprep.subr.mxu0 0.0
    %1870 = vmatpush1.xpose.msra.mxu0 0.0
    %1871 = vmatprep.subr.mxu0 0.0
    %1872 = vmatpush1.xpose.msra.mxu0 0.0
    %1873 = vmatprep.subr.mxu0 0.0
    %1874 = vmatpush1.xpose.msra.mxu0 0.0
    %1875 = vmatprep.subr.mxu0 0.0
    %1876 = vmatpush1.xpose.msra.mxu0 0.0
    %1877 = vmatprep.subr.mxu0 0.0
    %1878 = vmatpush1.xpose.msra.mxu0 0.0
    %1879 = vmatprep.subr.mxu0 0.0
    %1880 = vmatpush1.xpose.msra.mxu0 0.0
    %1881 = vmatprep.subr.mxu0 0.0
    %1882 = vmatpush1.xpose.msra.mxu0 0.0
    %1883 = vmatprep.subr.mxu0 0.0
    %1884 = vmatpush1.xpose.msra.mxu0 0.0
    %1885 = vmatprep.mubr.f32.mxu0 0.0
    %1886 = vmatmul.mubr.f32.gmra.mrb[0].mxu0 %v1771
    %v1887 = vpop.f32.mrb[0].mxu0
    %v1888 = vadd.f32 0.0, %v1887
    %v1889 = vpop.f32.mrb[0].mxu0
    %1890 = vdwg.mxu0
    %v1892 = vsel %vm559, %v26, 0
    %v1895 = vsel %vm559, %v223, 0
    %v1898 = vsel %vm559, %v224, 0
    %v1901 = vsel %vm559, %v225, 0
    %v1904 = vsel %vm559, %v226, 0
    %v1907 = vsel %vm559, %v227, 0
    %v1910 = vsel %vm559, %v228, 0
    %v1913 = vsel %vm559, %v229, 0
    %v1916 = vsel %vm559, %v230, 0
    %v1919 = vsel %vm559, %v231, 0
    %v1922 = vsel %vm559, %v232, 0
    %v1925 = vsel %vm559, %v233, 0
    %v1928 = vsel %vm559, %v234, 0
    %v1931 = vsel %vm559, %v235, 0
    %v1934 = vsel %vm559, %v236, 0
    %v1937 = vsel %vm559, %v237, 0
    %v1940 = vsel %vm559, %v238, 0
    %1942 = vmatprep.subr.mxu0 0.0
    %1943 = vmatpush1.xpose.msra.mxu0 %v1895
    %1944 = vmatprep.subr.mxu0 0.0
    %1945 = vmatpush1.xpose.msra.mxu0 %v1898
    %1946 = vmatprep.subr.mxu0 0.0
    %1947 = vmatpush1.xpose.msra.mxu0 %v1901
    %1948 = vmatprep.subr.mxu0 0.0
    %1949 = vmatpush1.xpose.msra.mxu0 %v1904
    %1950 = vmatprep.subr.mxu0 0.0
    %1951 = vmatpush1.xpose.msra.mxu0 %v1907
    %1952 = vmatprep.subr.mxu0 0.0
    %1953 = vmatpush1.xpose.msra.mxu0 %v1910
    %1954 = vmatprep.subr.mxu0 0.0
    %1955 = vmatpush1.xpose.msra.mxu0 %v1913
    %1956 = vmatprep.subr.mxu0 0.0
    %1957 = vmatpush1.xpose.msra.mxu0 %v1916
    %1958 = vmatprep.subr.mxu0 0.0
    %1959 = vmatpush1.xpose.msra.mxu0 %v1919
    %1960 = vmatprep.subr.mxu0 0.0
    %1961 = vmatpush1.xpose.msra.mxu0 %v1922
    %1962 = vmatprep.subr.mxu0 0.0
    %1963 = vmatpush1.xpose.msra.mxu0 %v1925
    %1964 = vmatprep.subr.mxu0 0.0
    %1965 = vmatpush1.xpose.msra.mxu0 %v1928
    %1966 = vmatprep.subr.mxu0 0.0
    %1967 = vmatpush1.xpose.msra.mxu0 %v1931
    %1968 = vmatprep.subr.mxu0 0.0
    %1969 = vmatpush1.xpose.msra.mxu0 %v1934
    %1970 = vmatprep.subr.mxu0 0.0
    %1971 = vmatpush1.xpose.msra.mxu0 %v1937
    %1972 = vmatprep.subr.mxu0 0.0
    %1973 = vmatpush1.xpose.msra.mxu0 %v1940
    %1974 = vmatprep.subr.mxu0 0.0
    %1975 = vmatpush1.xpose.msra.mxu0 0.0
    %1976 = vmatprep.subr.mxu0 0.0
    %1977 = vmatpush1.xpose.msra.mxu0 0.0
    %1978 = vmatprep.subr.mxu0 0.0
    %1979 = vmatpush1.xpose.msra.mxu0 0.0
    %1980 = vmatprep.subr.mxu0 0.0
    %1981 = vmatpush1.xpose.msra.mxu0 0.0
    %1982 = vmatprep.subr.mxu0 0.0
    %1983 = vmatpush1.xpose.msra.mxu0 0.0
    %1984 = vmatprep.subr.mxu0 0.0
    %1985 = vmatpush1.xpose.msra.mxu0 0.0
    %1986 = vmatprep.subr.mxu0 0.0
    %1987 = vmatpush1.xpose.msra.mxu0 0.0
    %1988 = vmatprep.subr.mxu0 0.0
    %1989 = vmatpush1.xpose.msra.mxu0 0.0
    %1990 = vmatprep.subr.mxu0 0.0
    %1991 = vmatpush1.xpose.msra.mxu0 0.0
    %1992 = vmatprep.subr.mxu0 0.0
    %1993 = vmatpush1.xpose.msra.mxu0 0.0
    %1994 = vmatprep.subr.mxu0 0.0
    %1995 = vmatpush1.xpose.msra.mxu0 0.0
    %1996 = vmatprep.subr.mxu0 0.0
    %1997 = vmatpush1.xpose.msra.mxu0 0.0
    %1998 = vmatprep.subr.mxu0 0.0
    %1999 = vmatpush1.xpose.msra.mxu0 0.0
    %2000 = vmatprep.subr.mxu0 0.0
    %2001 = vmatpush1.xpose.msra.mxu0 0.0
    %2002 = vmatprep.subr.mxu0 0.0
    %2003 = vmatpush1.xpose.msra.mxu0 0.0
    %2004 = vmatprep.subr.mxu0 0.0
    %2005 = vmatpush1.xpose.msra.mxu0 0.0
    %2006 = vmatprep.mubr.f32.mxu0 0.0
    %2007 = vmatmul.mubr.f32.gmra.mrb[0].mxu0 %v1892
    %v2008 = vpop.f32.mrb[0].mxu0
    %v2009 = vadd.f32 0.0, %v2008
    %v2010 = vpop.f32.mrb[0].mxu0
    %2011 = vdwg.mxu0
    %v2013 = vsel %vm559, %v27, 0
    %v2016 = vsel %vm559, %v239, 0
    %v2019 = vsel %vm559, %v240, 0
    %v2022 = vsel %vm559, %v241, 0
    %v2025 = vsel %vm559, %v242, 0
    %v2028 = vsel %vm559, %v243, 0
    %v2031 = vsel %vm559, %v244, 0
    %v2034 = vsel %vm559, %v245, 0
    %v2037 = vsel %vm559, %v246, 0
    %v2040 = vsel %vm559, %v247, 0
    %v2043 = vsel %vm559, %v248, 0
    %v2046 = vsel %vm559, %v249, 0
    %v2049 = vsel %vm559, %v250, 0
    %v2052 = vsel %vm559, %v251, 0
    %v2055 = vsel %vm559, %v252, 0
    %v2058 = vsel %vm559, %v253, 0
    %v2061 = vsel %vm559, %v254, 0
    %2063 = vmatprep.subr.mxu0 0.0
    %2064 = vmatpush1.xpose.msra.mxu0 %v2016
    %2065 = vmatprep.subr.mxu0 0.0
    %2066 = vmatpush1.xpose.msra.mxu0 %v2019
    %2067 = vmatprep.subr.mxu0 0.0
    %2068 = vmatpush1.xpose.msra.mxu0 %v2022
    %2069 = vmatprep.subr.mxu0 0.0
    %2070 = vmatpush1.xpose.msra.mxu0 %v2025
    %2071 = vmatprep.subr.mxu0 0.0
    %2072 = vmatpush1.xpose.msra.mxu0 %v2028
    %2073 = vmatprep.subr.mxu0 0.0
    %2074 = vmatpush1.xpose.msra.mxu0 %v2031
    %2075 = vmatprep.subr.mxu0 0.0
    %2076 = vmatpush1.xpose.msra.mxu0 %v2034
    %2077 = vmatprep.subr.mxu0 0.0
    %2078 = vmatpush1.xpose.msra.mxu0 %v2037
    %2079 = vmatprep.subr.mxu0 0.0
    %2080 = vmatpush1.xpose.msra.mxu0 %v2040
    %2081 = vmatprep.subr.mxu0 0.0
    %2082 = vmatpush1.xpose.msra.mxu0 %v2043
    %2083 = vmatprep.subr.mxu0 0.0
    %2084 = vmatpush1.xpose.msra.mxu0 %v2046
    %2085 = vmatprep.subr.mxu0 0.0
    %2086 = vmatpush1.xpose.msra.mxu0 %v2049
    %2087 = vmatprep.subr.mxu0 0.0
    %2088 = vmatpush1.xpose.msra.mxu0 %v2052
    %2089 = vmatprep.subr.mxu0 0.0
    %2090 = vmatpush1.xpose.msra.mxu0 %v2055
    %2091 = vmatprep.subr.mxu0 0.0
    %2092 = vmatpush1.xpose.msra.mxu0 %v2058
    %2093 = vmatprep.subr.mxu0 0.0
    %2094 = vmatpush1.xpose.msra.mxu0 %v2061
    %2095 = vmatprep.subr.mxu0 0.0
    %2096 = vmatpush1.xpose.msra.mxu0 0.0
    %2097 = vmatprep.subr.mxu0 0.0
    %2098 = vmatpush1.xpose.msra.mxu0 0.0
    %2099 = vmatprep.subr.mxu0 0.0
    %2100 = vmatpush1.xpose.msra.mxu0 0.0
    %2101 = vmatprep.subr.mxu0 0.0
    %2102 = vmatpush1.xpose.msra.mxu0 0.0
    %2103 = vmatprep.subr.mxu0 0.0
    %2104 = vmatpush1.xpose.msra.mxu0 0.0
    %2105 = vmatprep.subr.mxu0 0.0
    %2106 = vmatpush1.xpose.msra.mxu0 0.0
    %2107 = vmatprep.subr.mxu0 0.0
    %2108 = vmatpush1.xpose.msra.mxu0 0.0
    %2109 = vmatprep.subr.mxu0 0.0
    %2110 = vmatpush1.xpose.msra.mxu0 0.0
    %2111 = vmatprep.subr.mxu0 0.0
    %2112 = vmatpush1.xpose.msra.mxu0 0.0
    %2113 = vmatprep.subr.mxu0 0.0
    %2114 = vmatpush1.xpose.msra.mxu0 0.0
    %2115 = vmatprep.subr.mxu0 0.0
    %2116 = vmatpush1.xpose.msra.mxu0 0.0
    %2117 = vmatprep.subr.mxu0 0.0
    %2118 = vmatpush1.xpose.msra.mxu0 0.0
    %2119 = vmatprep.subr.mxu0 0.0
    %2120 = vmatpush1.xpose.msra.mxu0 0.0
    %2121 = vmatprep.subr.mxu0 0.0
    %2122 = vmatpush1.xpose.msra.mxu0 0.0
    %2123 = vmatprep.subr.mxu0 0.0
    %2124 = vmatpush1.xpose.msra.mxu0 0.0
    %2125 = vmatprep.subr.mxu0 0.0
    %2126 = vmatpush1.xpose.msra.mxu0 0.0
    %2127 = vmatprep.mubr.f32.mxu0 0.0
    %2128 = vmatmul.mubr.f32.gmra.mrb[0].mxu0 %v2013
    %v2129 = vpop.f32.mrb[0].mxu0
    %v2130 = vadd.f32 0.0, %v2129
    %v2131 = vpop.f32.mrb[0].mxu0
    %2132 = vdwg.mxu0
    %v2134 = vsel %vm559, %v28, 0
    %v2137 = vsel %vm559, %v255, 0
    %v2140 = vsel %vm559, %v256, 0
    %v2143 = vsel %vm559, %v257, 0
    %v2146 = vsel %vm559, %v258, 0
    %v2149 = vsel %vm559, %v259, 0
    %v2152 = vsel %vm559, %v260, 0
    %v2155 = vsel %vm559, %v261, 0
    %v2158 = vsel %vm559, %v262, 0
    %v2161 = vsel %vm559, %v263, 0
    %v2164 = vsel %vm559, %v264, 0
    %v2167 = vsel %vm559, %v265, 0
    %v2170 = vsel %vm559, %v266, 0
    %v2173 = vsel %vm559, %v267, 0
    %v2176 = vsel %vm559, %v268, 0
    %v2179 = vsel %vm559, %v269, 0
    %v2182 = vsel %vm559, %v270, 0
    %2184 = vmatprep.subr.mxu0 0.0
    %2185 = vmatpush1.xpose.msra.mxu0 %v2137
    %2186 = vmatprep.subr.mxu0 0.0
    %2187 = vmatpush1.xpose.msra.mxu0 %v2140
    %2188 = vmatprep.subr.mxu0 0.0
    %2189 = vmatpush1.xpose.msra.mxu0 %v2143
    %2190 = vmatprep.subr.mxu0 0.0
    %2191 = vmatpush1.xpose.msra.mxu0 %v2146
    %2192 = vmatprep.subr.mxu0 0.0
    %2193 = vmatpush1.xpose.msra.mxu0 %v2149
    %2194 = vmatprep.subr.mxu0 0.0
    %2195 = vmatpush1.xpose.msra.mxu0 %v2152
    %2196 = vmatprep.subr.mxu0 0.0
    %2197 = vmatpush1.xpose.msra.mxu0 %v2155
    %2198 = vmatprep.subr.mxu0 0.0
    %2199 = vmatpush1.xpose.msra.mxu0 %v2158
    %2200 = vmatprep.subr.mxu0 0.0
    %2201 = vmatpush1.xpose.msra.mxu0 %v2161
    %2202 = vmatprep.subr.mxu0 0.0
    %2203 = vmatpush1.xpose.msra.mxu0 %v2164
    %2204 = vmatprep.subr.mxu0 0.0
    %2205 = vmatpush1.xpose.msra.mxu0 %v2167
    %2206 = vmatprep.subr.mxu0 0.0
    %2207 = vmatpush1.xpose.msra.mxu0 %v2170
    %2208 = vmatprep.subr.mxu0 0.0
    %2209 = vmatpush1.xpose.msra.mxu0 %v2173
    %2210 = vmatprep.subr.mxu0 0.0
    %2211 = vmatpush1.xpose.msra.mxu0 %v2176
    %2212 = vmatprep.subr.mxu0 0.0
    %2213 = vmatpush1.xpose.msra.mxu0 %v2179
    %2214 = vmatprep.subr.mxu0 0.0
    %2215 = vmatpush1.xpose.msra.mxu0 %v2182
    %2216 = vmatprep.subr.mxu0 0.0
    %2217 = vmatpush1.xpose.msra.mxu0 0.0
    %2218 = vmatprep.subr.mxu0 0.0
    %2219 = vmatpush1.xpose.msra.mxu0 0.0
    %2220 = vmatprep.subr.mxu0 0.0
    %2221 = vmatpush1.xpose.msra.mxu0 0.0
    %2222 = vmatprep.subr.mxu0 0.0
    %2223 = vmatpush1.xpose.msra.mxu0 0.0
    %2224 = vmatprep.subr.mxu0 0.0
    %2225 = vmatpush1.xpose.msra.mxu0 0.0
    %2226 = vmatprep.subr.mxu0 0.0
    %2227 = vmatpush1.xpose.msra.mxu0 0.0
    %2228 = vmatprep.subr.mxu0 0.0
    %2229 = vmatpush1.xpose.msra.mxu0 0.0
    %2230 = vmatprep.subr.mxu0 0.0
    %2231 = vmatpush1.xpose.msra.mxu0 0.0
    %2232 = vmatprep.subr.mxu0 0.0
    %2233 = vmatpush1.xpose.msra.mxu0 0.0
    %2234 = vmatprep.subr.mxu0 0.0
    %2235 = vmatpush1.xpose.msra.mxu0 0.0
    %2236 = vmatprep.subr.mxu0 0.0
    %2237 = vmatpush1.xpose.msra.mxu0 0.0
    %2238 = vmatprep.subr.mxu0 0.0
    %2239 = vmatpush1.xpose.msra.mxu0 0.0
    %2240 = vmatprep.subr.mxu0 0.0
    %2241 = vmatpush1.xpose.msra.mxu0 0.0
    %2242 = vmatprep.subr.mxu0 0.0
    %2243 = vmatpush1.xpose.msra.mxu0 0.0
    %2244 = vmatprep.subr.mxu0 0.0
    %2245 = vmatpush1.xpose.msra.mxu0 0.0
    %2246 = vmatprep.subr.mxu0 0.0
    %2247 = vmatpush1.xpose.msra.mxu0 0.0
    %2248 = vmatprep.mubr.f32.mxu0 0.0
    %2249 = vmatmul.mubr.f32.gmra.mrb[0].mxu0 %v2134
    %v2250 = vpop.f32.mrb[0].mxu0
    %v2251 = vadd.f32 0.0, %v2250
    %v2252 = vpop.f32.mrb[0].mxu0
    %2253 = vdwg.mxu0
    %v2255 = vsel %vm559, %v29, 0
    %v2258 = vsel %vm559, %v271, 0
    %v2261 = vsel %vm559, %v272, 0
    %v2264 = vsel %vm559, %v273, 0
    %v2267 = vsel %vm559, %v274, 0
    %v2270 = vsel %vm559, %v275, 0
    %v2273 = vsel %vm559, %v276, 0
    %v2276 = vsel %vm559, %v277, 0
    %v2279 = vsel %vm559, %v278, 0
    %v2282 = vsel %vm559, %v279, 0
    %v2285 = vsel %vm559, %v280, 0
    %v2288 = vsel %vm559, %v281, 0
    %v2291 = vsel %vm559, %v282, 0
    %v2294 = vsel %vm559, %v283, 0
    %v2297 = vsel %vm559, %v284, 0
    %v2300 = vsel %vm559, %v285, 0
    %v2303 = vsel %vm559, %v286, 0
    %2305 = vmatprep.subr.mxu0 0.0
    %2306 = vmatpush1.xpose.msra.mxu0 %v2258
    %2307 = vmatprep.subr.mxu0 0.0
    %2308 = vmatpush1.xpose.msra.mxu0 %v2261
    %2309 = vmatprep.subr.mxu0 0.0
    %2310 = vmatpush1.xpose.msra.mxu0 %v2264
    %2311 = vmatprep.subr.mxu0 0.0
    %2312 = vmatpush1.xpose.msra.mxu0 %v2267
    %2313 = vmatprep.subr.mxu0 0.0
    %2314 = vmatpush1.xpose.msra.mxu0 %v2270
    %2315 = vmatprep.subr.mxu0 0.0
    %2316 = vmatpush1.xpose.msra.mxu0 %v2273
    %2317 = vmatprep.subr.mxu0 0.0
    %2318 = vmatpush1.xpose.msra.mxu0 %v2276
    %2319 = vmatprep.subr.mxu0 0.0
    %2320 = vmatpush1.xpose.msra.mxu0 %v2279
    %2321 = vmatprep.subr.mxu0 0.0
    %2322 = vmatpush1.xpose.msra.mxu0 %v2282
    %2323 = vmatprep.subr.mxu0 0.0
    %2324 = vmatpush1.xpose.msra.mxu0 %v2285
    %2325 = vmatprep.subr.mxu0 0.0
    %2326 = vmatpush1.xpose.msra.mxu0 %v2288
    %2327 = vmatprep.subr.mxu0 0.0
    %2328 = vmatpush1.xpose.msra.mxu0 %v2291
    %2329 = vmatprep.subr.mxu0 0.0
    %2330 = vmatpush1.xpose.msra.mxu0 %v2294
    %2331 = vmatprep.subr.mxu0 0.0
    %2332 = vmatpush1.xpose.msra.mxu0 %v2297
    %2333 = vmatprep.subr.mxu0 0.0
    %2334 = vmatpush1.xpose.msra.mxu0 %v2300
    %2335 = vmatprep.subr.mxu0 0.0
    %2336 = vmatpush1.xpose.msra.mxu0 %v2303
    %2337 = vmatprep.subr.mxu0 0.0
    %2338 = vmatpush1.xpose.msra.mxu0 0.0
    %2339 = vmatprep.subr.mxu0 0.0
    %2340 = vmatpush1.xpose.msra.mxu0 0.0
    %2341 = vmatprep.subr.mxu0 0.0
    %2342 = vmatpush1.xpose.msra.mxu0 0.0
    %2343 = vmatprep.subr.mxu0 0.0
    %2344 = vmatpush1.xpose.msra.mxu0 0.0
    %2345 = vmatprep.subr.mxu0 0.0
    %2346 = vmatpush1.xpose.msra.mxu0 0.0
    %2347 = vmatprep.subr.mxu0 0.0
    %2348 = vmatpush1.xpose.msra.mxu0 0.0
    %2349 = vmatprep.subr.mxu0 0.0
    %2350 = vmatpush1.xpose.msra.mxu0 0.0
    %2351 = vmatprep.subr.mxu0 0.0
    %2352 = vmatpush1.xpose.msra.mxu0 0.0
    %2353 = vmatprep.subr.mxu0 0.0
    %2354 = vmatpush1.xpose.msra.mxu0 0.0
    %2355 = vmatprep.subr.mxu0 0.0
    %2356 = vmatpush1.xpose.msra.mxu0 0.0
    %2357 = vmatprep.subr.mxu0 0.0
    %2358 = vmatpush1.xpose.msra.mxu0 0.0
    %2359 = vmatprep.subr.mxu0 0.0
    %2360 = vmatpush1.xpose.msra.mxu0 0.0
    %2361 = vmatprep.subr.mxu0 0.0
    %2362 = vmatpush1.xpose.msra.mxu0 0.0
    %2363 = vmatprep.subr.mxu0 0.0
    %2364 = vmatpush1.xpose.msra.mxu0 0.0
    %2365 = vmatprep.subr.mxu0 0.0
    %2366 = vmatpush1.xpose.msra.mxu0 0.0
    %2367 = vmatprep.subr.mxu0 0.0
    %2368 = vmatpush1.xpose.msra.mxu0 0.0
    %2369 = vmatprep.mubr.f32.mxu0 0.0
    %2370 = vmatmul.mubr.f32.gmra.mrb[0].mxu0 %v2255
    %v2371 = vpop.f32.mrb[0].mxu0
    %v2372 = vadd.f32 0.0, %v2371
    %v2373 = vpop.f32.mrb[0].mxu0
    %2374 = vdwg.mxu0
    %v2376 = vsel %vm559, %v30, 0
    %v2379 = vsel %vm559, %v287, 0
    %v2382 = vsel %vm559, %v288, 0
    %v2385 = vsel %vm559, %v289, 0
    %v2388 = vsel %vm559, %v290, 0
    %v2391 = vsel %vm559, %v291, 0
    %v2394 = vsel %vm559, %v292, 0
    %v2397 = vsel %vm559, %v293, 0
    %v2400 = vsel %vm559, %v294, 0
    %v2403 = vsel %vm559, %v295, 0
    %v2406 = vsel %vm559, %v296, 0
    %v2409 = vsel %vm559, %v297, 0
    %v2412 = vsel %vm559, %v298, 0
    %v2415 = vsel %vm559, %v299, 0
    %v2418 = vsel %vm559, %v300, 0
    %v2421 = vsel %vm559, %v301, 0
    %v2424 = vsel %vm559, %v302, 0
    %2426 = vmatprep.subr.mxu0 0.0
    %2427 = vmatpush1.xpose.msra.mxu0 %v2379
    %2428 = vmatprep.subr.mxu0 0.0
    %2429 = vmatpush1.xpose.msra.mxu0 %v2382
    %2430 = vmatprep.subr.mxu0 0.0
    %2431 = vmatpush1.xpose.msra.mxu0 %v2385
    %2432 = vmatprep.subr.mxu0 0.0
    %2433 = vmatpush1.xpose.msra.mxu0 %v2388
    %2434 = vmatprep.subr.mxu0 0.0
    %2435 = vmatpush1.xpose.msra.mxu0 %v2391
    %2436 = vmatprep.subr.mxu0 0.0
    %2437 = vmatpush1.xpose.msra.mxu0 %v2394
    %2438 = vmatprep.subr.mxu0 0.0
    %2439 = vmatpush1.xpose.msra.mxu0 %v2397
    %2440 = vmatprep.subr.mxu0 0.0
    %2441 = vmatpush1.xpose.msra.mxu0 %v2400
    %2442 = vmatprep.subr.mxu0 0.0
    %2443 = vmatpush1.xpose.msra.mxu0 %v2403
    %2444 = vmatprep.subr.mxu0 0.0
    %2445 = vmatpush1.xpose.msra.mxu0 %v2406
    %2446 = vmatprep.subr.mxu0 0.0
    %2447 = vmatpush1.xpose.msra.mxu0 %v2409
    %2448 = vmatprep.subr.mxu0 0.0
    %2449 = vmatpush1.xpose.msra.mxu0 %v2412
    %2450 = vmatprep.subr.mxu0 0.0
    %2451 = vmatpush1.xpose.msra.mxu0 %v2415
    %2452 = vmatprep.subr.mxu0 0.0
    %2453 = vmatpush1.xpose.msra.mxu0 %v2418
    %2454 = vmatprep.subr.mxu0 0.0
    %2455 = vmatpush1.xpose.msra.mxu0 %v2421
    %2456 = vmatprep.subr.mxu0 0.0
    %2457 = vmatpush1.xpose.msra.mxu0 %v2424
    %2458 = vmatprep.subr.mxu0 0.0
    %2459 = vmatpush1.xpose.msra.mxu0 0.0
    %2460 = vmatprep.subr.mxu0 0.0
    %2461 = vmatpush1.xpose.msra.mxu0 0.0
    %2462 = vmatprep.subr.mxu0 0.0
    %2463 = vmatpush1.xpose.msra.mxu0 0.0
    %2464 = vmatprep.subr.mxu0 0.0
    %2465 = vmatpush1.xpose.msra.mxu0 0.0
    %2466 = vmatprep.subr.mxu0 0.0
    %2467 = vmatpush1.xpose.msra.mxu0 0.0
    %2468 = vmatprep.subr.mxu0 0.0
    %2469 = vmatpush1.xpose.msra.mxu0 0.0
    %2470 = vmatprep.subr.mxu0 0.0
    %2471 = vmatpush1.xpose.msra.mxu0 0.0
    %2472 = vmatprep.subr.mxu0 0.0
    %2473 = vmatpush1.xpose.msra.mxu0 0.0
    %2474 = vmatprep.subr.mxu0 0.0
    %2475 = vmatpush1.xpose.msra.mxu0 0.0
    %2476 = vmatprep.subr.mxu0 0.0
    %2477 = vmatpush1.xpose.msra.mxu0 0.0
    %2478 = vmatprep.subr.mxu0 0.0
    %2479 = vmatpush1.xpose.msra.mxu0 0.0
    %2480 = vmatprep.subr.mxu0 0.0
    %2481 = vmatpush1.xpose.msra.mxu0 0.0
    %2482 = vmatprep.subr.mxu0 0.0
    %2483 = vmatpush1.xpose.msra.mxu0 0.0
    %2484 = vmatprep.subr.mxu0 0.0
    %2485 = vmatpush1.xpose.msra.mxu0 0.0
    %2486 = vmatprep.subr.mxu0 0.0
    %2487 = vmatpush1.xpose.msra.mxu0 0.0
    %2488 = vmatprep.subr.mxu0 0.0
    %2489 = vmatpush1.xpose.msra.mxu0 0.0
    %2490 = vmatprep.mubr.f32.mxu0 0.0
    %2491 = vmatmul.mubr.f32.gmra.mrb[0].mxu0 %v2376
    %v2492 = vpop.f32.mrb[0].mxu0
    %v2493 = vadd.f32 0.0, %v2492
    %v2494 = vpop.f32.mrb[0].mxu0
    %2495 = vdwg.mxu0
    %v2497 = vsel %vm559, %v31, 0
    %v2500 = vsel %vm559, %v303, 0
    %v2503 = vsel %vm559, %v304, 0
    %v2506 = vsel %vm559, %v305, 0
    %v2509 = vsel %vm559, %v306, 0
    %v2512 = vsel %vm559, %v307, 0
    %v2515 = vsel %vm559, %v308, 0
    %v2518 = vsel %vm559, %v309, 0
    %v2521 = vsel %vm559, %v310, 0
    %v2524 = vsel %vm559, %v311, 0
    %v2527 = vsel %vm559, %v312, 0
    %v2530 = vsel %vm559, %v313, 0
    %v2533 = vsel %vm559, %v314, 0
    %v2536 = vsel %vm559, %v315, 0
    %v2539 = vsel %vm559, %v316, 0
    %v2542 = vsel %vm559, %v317, 0
    %v2545 = vsel %vm559, %v318, 0
    %2547 = vmatprep.subr.mxu0 0.0
    %2548 = vmatpush1.xpose.msra.mxu0 %v2500
    %2549 = vmatprep.subr.mxu0 0.0
    %2550 = vmatpush1.xpose.msra.mxu0 %v2503
    %2551 = vmatprep.subr.mxu0 0.0
    %2552 = vmatpush1.xpose.msra.mxu0 %v2506
    %2553 = vmatprep.subr.mxu0 0.0
    %2554 = vmatpush1.xpose.msra.mxu0 %v2509
    %2555 = vmatprep.subr.mxu0 0.0
    %2556 = vmatpush1.xpose.msra.mxu0 %v2512
    %2557 = vmatprep.subr.mxu0 0.0
    %2558 = vmatpush1.xpose.msra.mxu0 %v2515
    %2559 = vmatprep.subr.mxu0 0.0
    %2560 = vmatpush1.xpose.msra.mxu0 %v2518
    %2561 = vmatprep.subr.mxu0 0.0
    %2562 = vmatpush1.xpose.msra.mxu0 %v2521
    %2563 = vmatprep.subr.mxu0 0.0
    %2564 = vmatpush1.xpose.msra.mxu0 %v2524
    %2565 = vmatprep.subr.mxu0 0.0
    %2566 = vmatpush1.xpose.msra.mxu0 %v2527
    %2567 = vmatprep.subr.mxu0 0.0
    %2568 = vmatpush1.xpose.msra.mxu0 %v2530
    %2569 = vmatprep.subr.mxu0 0.0
    %2570 = vmatpush1.xpose.msra.mxu0 %v2533
    %2571 = vmatprep.subr.mxu0 0.0
    %2572 = vmatpush1.xpose.msra.mxu0 %v2536
    %2573 = vmatprep.subr.mxu0 0.0
    %2574 = vmatpush1.xpose.msra.mxu0 %v2539
    %2575 = vmatprep.subr.mxu0 0.0
    %2576 = vmatpush1.xpose.msra.mxu0 %v2542
    %2577 = vmatprep.subr.mxu0 0.0
    %2578 = vmatpush1.xpose.msra.mxu0 %v2545
    %2579 = vmatprep.subr.mxu0 0.0
    %2580 = vmatpush1.xpose.msra.mxu0 0.0
    %2581 = vmatprep.subr.mxu0 0.0
    %2582 = vmatpush1.xpose.msra.mxu0 0.0
    %2583 = vmatprep.subr.mxu0 0.0
    %2584 = vmatpush1.xpose.msra.mxu0 0.0
    %2585 = vmatprep.subr.mxu0 0.0
    %2586 = vmatpush1.xpose.msra.mxu0 0.0
    %2587 = vmatprep.subr.mxu0 0.0
    %2588 = vmatpush1.xpose.msra.mxu0 0.0
    %2589 = vmatprep.subr.mxu0 0.0
    %2590 = vmatpush1.xpose.msra.mxu0 0.0
    %2591 = vmatprep.subr.mxu0 0.0
    %2592 = vmatpush1.xpose.msra.mxu0 0.0
    %2593 = vmatprep.subr.mxu0 0.0
    %2594 = vmatpush1.xpose.msra.mxu0 0.0
    %2595 = vmatprep.subr.mxu0 0.0
    %2596 = vmatpush1.xpose.msra.mxu0 0.0
    %2597 = vmatprep.subr.mxu0 0.0
    %2598 = vmatpush1.xpose.msra.mxu0 0.0
    %2599 = vmatprep.subr.mxu0 0.0
    %2600 = vmatpush1.xpose.msra.mxu0 0.0
    %2601 = vmatprep.subr.mxu0 0.0
    %2602 = vmatpush1.xpose.msra.mxu0 0.0
    %2603 = vmatprep.subr.mxu0 0.0
    %2604 = vmatpush1.xpose.msra.mxu0 0.0
    %2605 = vmatprep.subr.mxu0 0.0
    %2606 = vmatpush1.xpose.msra.mxu0 0.0
    %2607 = vmatprep.subr.mxu0 0.0
    %2608 = vmatpush1.xpose.msra.mxu0 0.0
    %2609 = vmatprep.subr.mxu0 0.0
    %2610 = vmatpush1.xpose.msra.mxu0 0.0
    %2611 = vmatprep.mubr.f32.mxu0 0.0
    %2612 = vmatmul.mubr.f32.gmra.mrb[0].mxu0 %v2497
    %v2613 = vpop.f32.mrb[0].mxu0
    %v2614 = vadd.f32 0.0, %v2613
    %v2615 = vpop.f32.mrb[0].mxu0
    %2616 = vdwg.mxu0
    %v2618 = vsel %vm559, %v32, 0
    %v2621 = vsel %vm559, %v319, 0
    %v2624 = vsel %vm559, %v320, 0
    %v2627 = vsel %vm559, %v321, 0
    %v2630 = vsel %vm559, %v322, 0
    %v2633 = vsel %vm559, %v323, 0
    %v2636 = vsel %vm559, %v324, 0
    %v2639 = vsel %vm559, %v325, 0
    %v2642 = vsel %vm559, %v326, 0
    %v2645 = vsel %vm559, %v327, 0
    %v2648 = vsel %vm559, %v328, 0
    %v2651 = vsel %vm559, %v329, 0
    %v2654 = vsel %vm559, %v330, 0
    %v2657 = vsel %vm559, %v331, 0
    %v2660 = vsel %vm559, %v332, 0
    %v2663 = vsel %vm559, %v333, 0
    %v2666 = vsel %vm559, %v334, 0
    %2668 = vmatprep.subr.mxu0 0.0
    %2669 = vmatpush1.xpose.msra.mxu0 %v2621
    %2670 = vmatprep.subr.mxu0 0.0
    %2671 = vmatpush1.xpose.msra.mxu0 %v2624
    %2672 = vmatprep.subr.mxu0 0.0
    %2673 = vmatpush1.xpose.msra.mxu0 %v2627
    %2674 = vmatprep.subr.mxu0 0.0
    %2675 = vmatpush1.xpose.msra.mxu0 %v2630
    %2676 = vmatprep.subr.mxu0 0.0
    %2677 = vmatpush1.xpose.msra.mxu0 %v2633
    %2678 = vmatprep.subr.mxu0 0.0
    %2679 = vmatpush1.xpose.msra.mxu0 %v2636
    %2680 = vmatprep.subr.mxu0 0.0
    %2681 = vmatpush1.xpose.msra.mxu0 %v2639
    %2682 = vmatprep.subr.mxu0 0.0
    %2683 = vmatpush1.xpose.msra.mxu0 %v2642
    %2684 = vmatprep.subr.mxu0 0.0
    %2685 = vmatpush1.xpose.msra.mxu0 %v2645
    %2686 = vmatprep.subr.mxu0 0.0
    %2687 = vmatpush1.xpose.msra.mxu0 %v2648
    %2688 = vmatprep.subr.mxu0 0.0
    %2689 = vmatpush1.xpose.msra.mxu0 %v2651
    %2690 = vmatprep.subr.mxu0 0.0
    %2691 = vmatpush1.xpose.msra.mxu0 %v2654
    %2692 = vmatprep.subr.mxu0 0.0
    %2693 = vmatpush1.xpose.msra.mxu0 %v2657
    %2694 = vmatprep.subr.mxu0 0.0
    %2695 = vmatpush1.xpose.msra.mxu0 %v2660
    %2696 = vmatprep.subr.mxu0 0.0
    %2697 = vmatpush1.xpose.msra.mxu0 %v2663
    %2698 = vmatprep.subr.mxu0 0.0
    %2699 = vmatpush1.xpose.msra.mxu0 %v2666
    %2700 = vmatprep.subr.mxu0 0.0
    %2701 = vmatpush1.xpose.msra.mxu0 0.0
    %2702 = vmatprep.subr.mxu0 0.0
    %2703 = vmatpush1.xpose.msra.mxu0 0.0
    %2704 = vmatprep.subr.mxu0 0.0
    %2705 = vmatpush1.xpose.msra.mxu0 0.0
    %2706 = vmatprep.subr.mxu0 0.0
    %2707 = vmatpush1.xpose.msra.mxu0 0.0
    %2708 = vmatprep.subr.mxu0 0.0
    %2709 = vmatpush1.xpose.msra.mxu0 0.0
    %2710 = vmatprep.subr.mxu0 0.0
    %2711 = vmatpush1.xpose.msra.mxu0 0.0
    %2712 = vmatprep.subr.mxu0 0.0
    %2713 = vmatpush1.xpose.msra.mxu0 0.0
    %2714 = vmatprep.subr.mxu0 0.0
    %2715 = vmatpush1.xpose.msra.mxu0 0.0
    %2716 = vmatprep.subr.mxu0 0.0
    %2717 = vmatpush1.xpose.msra.mxu0 0.0
    %2718 = vmatprep.subr.mxu0 0.0
    %2719 = vmatpush1.xpose.msra.mxu0 0.0
    %2720 = vmatprep.subr.mxu0 0.0
    %2721 = vmatpush1.xpose.msra.mxu0 0.0
    %2722 = vmatprep.subr.mxu0 0.0
    %2723 = vmatpush1.xpose.msra.mxu0 0.0
    %2724 = vmatprep.subr.mxu0 0.0
    %2725 = vmatpush1.xpose.msra.mxu0 0.0
    %2726 = vmatprep.subr.mxu0 0.0
    %2727 = vmatpush1.xpose.msra.mxu0 0.0
    %2728 = vmatprep.subr.mxu0 0.0
    %2729 = vmatpush1.xpose.msra.mxu0 0.0
    %2730 = vmatprep.subr.mxu0 0.0
    %2731 = vmatpush1.xpose.msra.mxu0 0.0
    %2732 = vmatprep.mubr.f32.mxu0 0.0
    %2733 = vmatmul.mubr.f32.gmra.mrb[0].mxu0 %v2618
    %v2734 = vpop.f32.mrb[0].mxu0
    %v2735 = vadd.f32 0.0, %v2734
    %v2736 = vpop.f32.mrb[0].mxu0
    %2737 = vdwg.mxu0
    %v2739 = vsel %vm559, %v33, 0
    %v2742 = vsel %vm559, %v335, 0
    %v2745 = vsel %vm559, %v336, 0
    %v2748 = vsel %vm559, %v337, 0
    %v2751 = vsel %vm559, %v338, 0
    %v2754 = vsel %vm559, %v339, 0
    %v2757 = vsel %vm559, %v340, 0
    %v2760 = vsel %vm559, %v341, 0
    %v2763 = vsel %vm559, %v342, 0
    %v2766 = vsel %vm559, %v343, 0
    %v2769 = vsel %vm559, %v344, 0
    %v2772 = vsel %vm559, %v345, 0
    %v2775 = vsel %vm559, %v346, 0
    %v2778 = vsel %vm559, %v347, 0
    %v2781 = vsel %vm559, %v348, 0
    %v2784 = vsel %vm559, %v349, 0
    %v2787 = vsel %vm559, %v350, 0
    %2789 = vmatprep.subr.mxu0 0.0
    %2790 = vmatpush1.xpose.msra.mxu0 %v2742
    %2791 = vmatprep.subr.mxu0 0.0
    %2792 = vmatpush1.xpose.msra.mxu0 %v2745
    %2793 = vmatprep.subr.mxu0 0.0
    %2794 = vmatpush1.xpose.msra.mxu0 %v2748
    %2795 = vmatprep.subr.mxu0 0.0
    %2796 = vmatpush1.xpose.msra.mxu0 %v2751
    %2797 = vmatprep.subr.mxu0 0.0
    %2798 = vmatpush1.xpose.msra.mxu0 %v2754
    %2799 = vmatprep.subr.mxu0 0.0
    %2800 = vmatpush1.xpose.msra.mxu0 %v2757
    %2801 = vmatprep.subr.mxu0 0.0
    %2802 = vmatpush1.xpose.msra.mxu0 %v2760
    %2803 = vmatprep.subr.mxu0 0.0
    %2804 = vmatpush1.xpose.msra.mxu0 %v2763
    %2805 = vmatprep.subr.mxu0 0.0
    %2806 = vmatpush1.xpose.msra.mxu0 %v2766
    %2807 = vmatprep.subr.mxu0 0.0
    %2808 = vmatpush1.xpose.msra.mxu0 %v2769
    %2809 = vmatprep.subr.mxu0 0.0
    %2810 = vmatpush1.xpose.msra.mxu0 %v2772
    %2811 = vmatprep.subr.mxu0 0.0
    %2812 = vmatpush1.xpose.msra.mxu0 %v2775
    %2813 = vmatprep.subr.mxu0 0.0
    %2814 = vmatpush1.xpose.msra.mxu0 %v2778
    %2815 = vmatprep.subr.mxu0 0.0
    %2816 = vmatpush1.xpose.msra.mxu0 %v2781
    %2817 = vmatprep.subr.mxu0 0.0
    %2818 = vmatpush1.xpose.msra.mxu0 %v2784
    %2819 = vmatprep.subr.mxu0 0.0
    %2820 = vmatpush1.xpose.msra.mxu0 %v2787
    %2821 = vmatprep.subr.mxu0 0.0
    %2822 = vmatpush1.xpose.msra.mxu0 0.0
    %2823 = vmatprep.subr.mxu0 0.0
    %2824 = vmatpush1.xpose.msra.mxu0 0.0
    %2825 = vmatprep.subr.mxu0 0.0
    %2826 = vmatpush1.xpose.msra.mxu0 0.0
    %2827 = vmatprep.subr.mxu0 0.0
    %2828 = vmatpush1.xpose.msra.mxu0 0.0
    %2829 = vmatprep.subr.mxu0 0.0
    %2830 = vmatpush1.xpose.msra.mxu0 0.0
    %2831 = vmatprep.subr.mxu0 0.0
    %2832 = vmatpush1.xpose.msra.mxu0 0.0
    %2833 = vmatprep.subr.mxu0 0.0
    %2834 = vmatpush1.xpose.msra.mxu0 0.0
    %2835 = vmatprep.subr.mxu0 0.0
    %2836 = vmatpush1.xpose.msra.mxu0 0.0
    %2837 = vmatprep.subr.mxu0 0.0
    %2838 = vmatpush1.xpose.msra.mxu0 0.0
    %2839 = vmatprep.subr.mxu0 0.0
    %2840 = vmatpush1.xpose.msra.mxu0 0.0
    %2841 = vmatprep.subr.mxu0 0.0
    %2842 = vmatpush1.xpose.msra.mxu0 0.0
    %2843 = vmatprep.subr.mxu0 0.0
    %2844 = vmatpush1.xpose.msra.mxu0 0.0
    %2845 = vmatprep.subr.mxu0 0.0
    %2846 = vmatpush1.xpose.msra.mxu0 0.0
    %2847 = vmatprep.subr.mxu0 0.0
    %2848 = vmatpush1.xpose.msra.mxu0 0.0
    %2849 = vmatprep.subr.mxu0 0.0
    %2850 = vmatpush1.xpose.msra.mxu0 0.0
    %2851 = vmatprep.subr.mxu0 0.0
    %2852 = vmatpush1.xpose.msra.mxu0 0.0
    %2853 = vmatprep.mubr.f32.mxu0 0.0
    %2854 = vmatmul.mubr.f32.gmra.mrb[0].mxu0 %v2739
    %v2855 = vpop.f32.mrb[0].mxu0
    %v2856 = vadd.f32 0.0, %v2855
    %v2857 = vpop.f32.mrb[0].mxu0
    %2858 = vdwg.mxu0
    %v2860 = vsel %vm559, %v34, 0
    %v2863 = vsel %vm559, %v351, 0
    %v2866 = vsel %vm559, %v352, 0
    %v2869 = vsel %vm559, %v353, 0
    %v2872 = vsel %vm559, %v354, 0
    %v2875 = vsel %vm559, %v355, 0
    %v2878 = vsel %vm559, %v356, 0
    %v2881 = vsel %vm559, %v357, 0
    %v2884 = vsel %vm559, %v358, 0
    %v2887 = vsel %vm559, %v359, 0
    %v2890 = vsel %vm559, %v360, 0
    %v2893 = vsel %vm559, %v361, 0
    %v2896 = vsel %vm559, %v362, 0
    %v2899 = vsel %vm559, %v363, 0
    %v2902 = vsel %vm559, %v364, 0
    %v2905 = vsel %vm559, %v365, 0
    %v2908 = vsel %vm559, %v366, 0
    %2910 = vmatprep.subr.mxu0 0.0
    %2911 = vmatpush1.xpose.msra.mxu0 %v2863
    %2912 = vmatprep.subr.mxu0 0.0
    %2913 = vmatpush1.xpose.msra.mxu0 %v2866
    %2914 = vmatprep.subr.mxu0 0.0
    %2915 = vmatpush1.xpose.msra.mxu0 %v2869
    %2916 = vmatprep.subr.mxu0 0.0
    %2917 = vmatpush1.xpose.msra.mxu0 %v2872
    %2918 = vmatprep.subr.mxu0 0.0
    %2919 = vmatpush1.xpose.msra.mxu0 %v2875
    %2920 = vmatprep.subr.mxu0 0.0
    %2921 = vmatpush1.xpose.msra.mxu0 %v2878
    %2922 = vmatprep.subr.mxu0 0.0
    %2923 = vmatpush1.xpose.msra.mxu0 %v2881
    %2924 = vmatprep.subr.mxu0 0.0
    %2925 = vmatpush1.xpose.msra.mxu0 %v2884
    %2926 = vmatprep.subr.mxu0 0.0
    %2927 = vmatpush1.xpose.msra.mxu0 %v2887
    %2928 = vmatprep.subr.mxu0 0.0
    %2929 = vmatpush1.xpose.msra.mxu0 %v2890
    %2930 = vmatprep.subr.mxu0 0.0
    %2931 = vmatpush1.xpose.msra.mxu0 %v2893
    %2932 = vmatprep.subr.mxu0 0.0
    %2933 = vmatpush1.xpose.msra.mxu0 %v2896
    %2934 = vmatprep.subr.mxu0 0.0
    %2935 = vmatpush1.xpose.msra.mxu0 %v2899
    %2936 = vmatprep.subr.mxu0 0.0
    %2937 = vmatpush1.xpose.msra.mxu0 %v2902
    %2938 = vmatprep.subr.mxu0 0.0
    %2939 = vmatpush1.xpose.msra.mxu0 %v2905
    %2940 = vmatprep.subr.mxu0 0.0
    %2941 = vmatpush1.xpose.msra.mxu0 %v2908
    %2942 = vmatprep.subr.mxu0 0.0
    %2943 = vmatpush1.xpose.msra.mxu0 0.0
    %2944 = vmatprep.subr.mxu0 0.0
    %2945 = vmatpush1.xpose.msra.mxu0 0.0
    %2946 = vmatprep.subr.mxu0 0.0
    %2947 = vmatpush1.xpose.msra.mxu0 0.0
    %2948 = vmatprep.subr.mxu0 0.0
    %2949 = vmatpush1.xpose.msra.mxu0 0.0
    %2950 = vmatprep.subr.mxu0 0.0
    %2951 = vmatpush1.xpose.msra.mxu0 0.0
    %2952 = vmatprep.subr.mxu0 0.0
    %2953 = vmatpush1.xpose.msra.mxu0 0.0
    %2954 = vmatprep.subr.mxu0 0.0
    %2955 = vmatpush1.xpose.msra.mxu0 0.0
    %2956 = vmatprep.subr.mxu0 0.0
    %2957 = vmatpush1.xpose.msra.mxu0 0.0
    %2958 = vmatprep.subr.mxu0 0.0
    %2959 = vmatpush1.xpose.msra.mxu0 0.0
    %2960 = vmatprep.subr.mxu0 0.0
    %2961 = vmatpush1.xpose.msra.mxu0 0.0
    %2962 = vmatprep.subr.mxu0 0.0
    %2963 = vmatpush1.xpose.msra.mxu0 0.0
    %2964 = vmatprep.subr.mxu0 0.0
    %2965 = vmatpush1.xpose.msra.mxu0 0.0
    %2966 = vmatprep.subr.mxu0 0.0
    %2967 = vmatpush1.xpose.msra.mxu0 0.0
    %2968 = vmatprep.subr.mxu0 0.0
    %2969 = vmatpush1.xpose.msra.mxu0 0.0
    %2970 = vmatprep.subr.mxu0 0.0
    %2971 = vmatpush1.xpose.msra.mxu0 0.0
    %2972 = vmatprep.subr.mxu0 0.0
    %2973 = vmatpush1.xpose.msra.mxu0 0.0
    %2974 = vmatprep.mubr.f32.mxu0 0.0
    %2975 = vmatmul.mubr.f32.gmra.mrb[0].mxu0 %v2860
    %v2976 = vpop.f32.mrb[0].mxu0
    %v2977 = vadd.f32 0.0, %v2976
    %v2978 = vpop.f32.mrb[0].mxu0
    %2979 = vdwg.mxu0
    %v2981 = vsel %vm559, %v35, 0
    %v2984 = vsel %vm559, %v367, 0
    %v2987 = vsel %vm559, %v368, 0
    %v2990 = vsel %vm559, %v369, 0
    %v2993 = vsel %vm559, %v370, 0
    %v2996 = vsel %vm559, %v371, 0
    %v2999 = vsel %vm559, %v372, 0
    %v3002 = vsel %vm559, %v373, 0
    %v3005 = vsel %vm559, %v374, 0
    %v3008 = vsel %vm559, %v375, 0
    %v3011 = vsel %vm559, %v376, 0
    %v3014 = vsel %vm559, %v377, 0
    %v3017 = vsel %vm559, %v378, 0
    %v3020 = vsel %vm559, %v379, 0
    %v3023 = vsel %vm559, %v380, 0
    %v3026 = vsel %vm559, %v381, 0
    %v3029 = vsel %vm559, %v382, 0
    %3031 = vmatprep.subr.mxu0 0.0
    %3032 = vmatpush1.xpose.msra.mxu0 %v2984
    %3033 = vmatprep.subr.mxu0 0.0
    %3034 = vmatpush1.xpose.msra.mxu0 %v2987
    %3035 = vmatprep.subr.mxu0 0.0
    %3036 = vmatpush1.xpose.msra.mxu0 %v2990
    %3037 = vmatprep.subr.mxu0 0.0
    %3038 = vmatpush1.xpose.msra.mxu0 %v2993
    %3039 = vmatprep.subr.mxu0 0.0
    %3040 = vmatpush1.xpose.msra.mxu0 %v2996
    %3041 = vmatprep.subr.mxu0 0.0
    %3042 = vmatpush1.xpose.msra.mxu0 %v2999
    %3043 = vmatprep.subr.mxu0 0.0
    %3044 = vmatpush1.xpose.msra.mxu0 %v3002
    %3045 = vmatprep.subr.mxu0 0.0
    %3046 = vmatpush1.xpose.msra.mxu0 %v3005
    %3047 = vmatprep.subr.mxu0 0.0
    %3048 = vmatpush1.xpose.msra.mxu0 %v3008
    %3049 = vmatprep.subr.mxu0 0.0
    %3050 = vmatpush1.xpose.msra.mxu0 %v3011
    %3051 = vmatprep.subr.mxu0 0.0
    %3052 = vmatpush1.xpose.msra.mxu0 %v3014
    %3053 = vmatprep.subr.mxu0 0.0
    %3054 = vmatpush1.xpose.msra.mxu0 %v3017
    %3055 = vmatprep.subr.mxu0 0.0
    %3056 = vmatpush1.xpose.msra.mxu0 %v3020
    %3057 = vmatprep.subr.mxu0 0.0
    %3058 = vmatpush1.xpose.msra.mxu0 %v3023
    %3059 = vmatprep.subr.mxu0 0.0
    %3060 = vmatpush1.xpose.msra.mxu0 %v3026
    %3061 = vmatprep.subr.mxu0 0.0
    %3062 = vmatpush1.xpose.msra.mxu0 %v3029
    %3063 = vmatprep.subr.mxu0 0.0
    %3064 = vmatpush1.xpose.msra.mxu0 0.0
    %3065 = vmatprep.subr.mxu0 0.0
    %3066 = vmatpush1.xpose.msra.mxu0 0.0
    %3067 = vmatprep.subr.mxu0 0.0
    %3068 = vmatpush1.xpose.msra.mxu0 0.0
    %3069 = vmatprep.subr.mxu0 0.0
    %3070 = vmatpush1.xpose.msra.mxu0 0.0
    %3071 = vmatprep.subr.mxu0 0.0
    %3072 = vmatpush1.xpose.msra.mxu0 0.0
    %3073 = vmatprep.subr.mxu0 0.0
    %3074 = vmatpush1.xpose.msra.mxu0 0.0
    %3075 = vmatprep.subr.mxu0 0.0
    %3076 = vmatpush1.xpose.msra.mxu0 0.0
    %3077 = vmatprep.subr.mxu0 0.0
    %3078 = vmatpush1.xpose.msra.mxu0 0.0
    %3079 = vmatprep.subr.mxu0 0.0
    %3080 = vmatpush1.xpose.msra.mxu0 0.0
    %3081 = vmatprep.subr.mxu0 0.0
    %3082 = vmatpush1.xpose.msra.mxu0 0.0
    %3083 = vmatprep.subr.mxu0 0.0
    %3084 = vmatpush1.xpose.msra.mxu0 0.0
    %3085 = vmatprep.subr.mxu0 0.0
    %3086 = vmatpush1.xpose.msra.mxu0 0.0
    %3087 = vmatprep.subr.mxu0 0.0
    %3088 = vmatpush1.xpose.msra.mxu0 0.0
    %3089 = vmatprep.subr.mxu0 0.0
    %3090 = vmatpush1.xpose.msra.mxu0 0.0
    %3091 = vmatprep.subr.mxu0 0.0
    %3092 = vmatpush1.xpose.msra.mxu0 0.0
    %3093 = vmatprep.subr.mxu0 0.0
    %3094 = vmatpush1.xpose.msra.mxu0 0.0
    %3095 = vmatprep.mubr.f32.mxu0 0.0
    %3096 = vmatmul.mubr.f32.gmra.mrb[0].mxu0 %v2981
    %v3097 = vpop.f32.mrb[0].mxu0
    %v3098 = vadd.f32 0.0, %v3097
    %v3099 = vpop.f32.mrb[0].mxu0
    %3100 = vdwg.mxu0
    %v3102 = vsel %vm559, %v36, 0
    %v3105 = vsel %vm559, %v383, 0
    %v3108 = vsel %vm559, %v384, 0
    %v3111 = vsel %vm559, %v385, 0
    %v3114 = vsel %vm559, %v386, 0
    %v3117 = vsel %vm559, %v387, 0
    %v3120 = vsel %vm559, %v388, 0
    %v3123 = vsel %vm559, %v389, 0
    %v3126 = vsel %vm559, %v390, 0
    %v3129 = vsel %vm559, %v391, 0
    %v3132 = vsel %vm559, %v392, 0
    %v3135 = vsel %vm559, %v393, 0
    %v3138 = vsel %vm559, %v394, 0
    %v3141 = vsel %vm559, %v395, 0
    %v3144 = vsel %vm559, %v396, 0
    %v3147 = vsel %vm559, %v397, 0
    %v3150 = vsel %vm559, %v398, 0
    %3152 = vmatprep.subr.mxu0 0.0
    %3153 = vmatpush1.xpose.msra.mxu0 %v3105
    %3154 = vmatprep.subr.mxu0 0.0
    %3155 = vmatpush1.xpose.msra.mxu0 %v3108
    %3156 = vmatprep.subr.mxu0 0.0
    %3157 = vmatpush1.xpose.msra.mxu0 %v3111
    %3158 = vmatprep.subr.mxu0 0.0
    %3159 = vmatpush1.xpose.msra.mxu0 %v3114
    %3160 = vmatprep.subr.mxu0 0.0
    %3161 = vmatpush1.xpose.msra.mxu0 %v3117
    %3162 = vmatprep.subr.mxu0 0.0
    %3163 = vmatpush1.xpose.msra.mxu0 %v3120
    %3164 = vmatprep.subr.mxu0 0.0
    %3165 = vmatpush1.xpose.msra.mxu0 %v3123
    %3166 = vmatprep.subr.mxu0 0.0
    %3167 = vmatpush1.xpose.msra.mxu0 %v3126
    %3168 = vmatprep.subr.mxu0 0.0
    %3169 = vmatpush1.xpose.msra.mxu0 %v3129
    %3170 = vmatprep.subr.mxu0 0.0
    %3171 = vmatpush1.xpose.msra.mxu0 %v3132
    %3172 = vmatprep.subr.mxu0 0.0
    %3173 = vmatpush1.xpose.msra.mxu0 %v3135
    %3174 = vmatprep.subr.mxu0 0.0
    %3175 = vmatpush1.xpose.msra.mxu0 %v3138
    %3176 = vmatprep.subr.mxu0 0.0
    %3177 = vmatpush1.xpose.msra.mxu0 %v3141
    %3178 = vmatprep.subr.mxu0 0.0
    %3179 = vmatpush1.xpose.msra.mxu0 %v3144
    %3180 = vmatprep.subr.mxu0 0.0
    %3181 = vmatpush1.xpose.msra.mxu0 %v3147
    %3182 = vmatprep.subr.mxu0 0.0
    %3183 = vmatpush1.xpose.msra.mxu0 %v3150
    %3184 = vmatprep.subr.mxu0 0.0
    %3185 = vmatpush1.xpose.msra.mxu0 0.0
    %3186 = vmatprep.subr.mxu0 0.0
    %3187 = vmatpush1.xpose.msra.mxu0 0.0
    %3188 = vmatprep.subr.mxu0 0.0
    %3189 = vmatpush1.xpose.msra.mxu0 0.0
    %3190 = vmatprep.subr.mxu0 0.0
    %3191 = vmatpush1.xpose.msra.mxu0 0.0
    %3192 = vmatprep.subr.mxu0 0.0
    %3193 = vmatpush1.xpose.msra.mxu0 0.0
    %3194 = vmatprep.subr.mxu0 0.0
    %3195 = vmatpush1.xpose.msra.mxu0 0.0
    %3196 = vmatprep.subr.mxu0 0.0
    %3197 = vmatpush1.xpose.msra.mxu0 0.0
    %3198 = vmatprep.subr.mxu0 0.0
    %3199 = vmatpush1.xpose.msra.mxu0 0.0
    %3200 = vmatprep.subr.mxu0 0.0
    %3201 = vmatpush1.xpose.msra.mxu0 0.0
    %3202 = vmatprep.subr.mxu0 0.0
    %3203 = vmatpush1.xpose.msra.mxu0 0.0
    %3204 = vmatprep.subr.mxu0 0.0
    %3205 = vmatpush1.xpose.msra.mxu0 0.0
    %3206 = vmatprep.subr.mxu0 0.0
    %3207 = vmatpush1.xpose.msra.mxu0 0.0
    %3208 = vmatprep.subr.mxu0 0.0
    %3209 = vmatpush1.xpose.msra.mxu0 0.0
    %3210 = vmatprep.subr.mxu0 0.0
    %3211 = vmatpush1.xpose.msra.mxu0 0.0
    %3212 = vmatprep.subr.mxu0 0.0
    %3213 = vmatpush1.xpose.msra.mxu0 0.0
    %3214 = vmatprep.subr.mxu0 0.0
    %3215 = vmatpush1.xpose.msra.mxu0 0.0
    %3216 = vmatprep.mubr.f32.mxu0 0.0
    %3217 = vmatmul.mubr.f32.gmra.mrb[0].mxu0 %v3102
    %v3218 = vpop.f32.mrb[0].mxu0
    %v3219 = vadd.f32 0.0, %v3218
    %v3220 = vpop.f32.mrb[0].mxu0
    %3221 = vdwg.mxu0
    %v3223 = vsel %vm559, %v37, 0
    %v3226 = vsel %vm559, %v399, 0
    %v3229 = vsel %vm559, %v400, 0
    %v3232 = vsel %vm559, %v401, 0
    %v3235 = vsel %vm559, %v402, 0
    %v3238 = vsel %vm559, %v403, 0
    %v3241 = vsel %vm559, %v404, 0
    %v3244 = vsel %vm559, %v405, 0
    %v3247 = vsel %vm559, %v406, 0
    %v3250 = vsel %vm559, %v407, 0
    %v3253 = vsel %vm559, %v408, 0
    %v3256 = vsel %vm559, %v409, 0
    %v3259 = vsel %vm559, %v410, 0
    %v3262 = vsel %vm559, %v411, 0
    %v3265 = vsel %vm559, %v412, 0
    %v3268 = vsel %vm559, %v413, 0
    %v3271 = vsel %vm559, %v414, 0
    %3273 = vmatprep.subr.mxu0 0.0
    %3274 = vmatpush1.xpose.msra.mxu0 %v3226
    %3275 = vmatprep.subr.mxu0 0.0
    %3276 = vmatpush1.xpose.msra.mxu0 %v3229
    %3277 = vmatprep.subr.mxu0 0.0
    %3278 = vmatpush1.xpose.msra.mxu0 %v3232
    %3279 = vmatprep.subr.mxu0 0.0
    %3280 = vmatpush1.xpose.msra.mxu0 %v3235
    %3281 = vmatprep.subr.mxu0 0.0
    %3282 = vmatpush1.xpose.msra.mxu0 %v3238
    %3283 = vmatprep.subr.mxu0 0.0
    %3284 = vmatpush1.xpose.msra.mxu0 %v3241
    %3285 = vmatprep.subr.mxu0 0.0
    %3286 = vmatpush1.xpose.msra.mxu0 %v3244
    %3287 = vmatprep.subr.mxu0 0.0
    %3288 = vmatpush1.xpose.msra.mxu0 %v3247
    %3289 = vmatprep.subr.mxu0 0.0
    %3290 = vmatpush1.xpose.msra.mxu0 %v3250
    %3291 = vmatprep.subr.mxu0 0.0
    %3292 = vmatpush1.xpose.msra.mxu0 %v3253
    %3293 = vmatprep.subr.mxu0 0.0
    %3294 = vmatpush1.xpose.msra.mxu0 %v3256
    %3295 = vmatprep.subr.mxu0 0.0
    %3296 = vmatpush1.xpose.msra.mxu0 %v3259
    %3297 = vmatprep.subr.mxu0 0.0
    %3298 = vmatpush1.xpose.msra.mxu0 %v3262
    %3299 = vmatprep.subr.mxu0 0.0
    %3300 = vmatpush1.xpose.msra.mxu0 %v3265
    %3301 = vmatprep.subr.mxu0 0.0
    %3302 = vmatpush1.xpose.msra.mxu0 %v3268
    %3303 = vmatprep.subr.mxu0 0.0
    %3304 = vmatpush1.xpose.msra.mxu0 %v3271
    %3305 = vmatprep.subr.mxu0 0.0
    %3306 = vmatpush1.xpose.msra.mxu0 0.0
    %3307 = vmatprep.subr.mxu0 0.0
    %3308 = vmatpush1.xpose.msra.mxu0 0.0
    %3309 = vmatprep.subr.mxu0 0.0
    %3310 = vmatpush1.xpose.msra.mxu0 0.0
    %3311 = vmatprep.subr.mxu0 0.0
    %3312 = vmatpush1.xpose.msra.mxu0 0.0
    %3313 = vmatprep.subr.mxu0 0.0
    %3314 = vmatpush1.xpose.msra.mxu0 0.0
    %3315 = vmatprep.subr.mxu0 0.0
    %3316 = vmatpush1.xpose.msra.mxu0 0.0
    %3317 = vmatprep.subr.mxu0 0.0
    %3318 = vmatpush1.xpose.msra.mxu0 0.0
    %3319 = vmatprep.subr.mxu0 0.0
    %3320 = vmatpush1.xpose.msra.mxu0 0.0
    %3321 = vmatprep.subr.mxu0 0.0
    %3322 = vmatpush1.xpose.msra.mxu0 0.0
    %3323 = vmatprep.subr.mxu0 0.0
    %3324 = vmatpush1.xpose.msra.mxu0 0.0
    %3325 = vmatprep.subr.mxu0 0.0
    %3326 = vmatpush1.xpose.msra.mxu0 0.0
    %3327 = vmatprep.subr.mxu0 0.0
    %3328 = vmatpush1.xpose.msra.mxu0 0.0
    %3329 = vmatprep.subr.mxu0 0.0
    %3330 = vmatpush1.xpose.msra.mxu0 0.0
    %3331 = vmatprep.subr.mxu0 0.0
    %3332 = vmatpush1.xpose.msra.mxu0 0.0
    %3333 = vmatprep.subr.mxu0 0.0
    %3334 = vmatpush1.xpose.msra.mxu0 0.0
    %3335 = vmatprep.subr.mxu0 0.0
    %3336 = vmatpush1.xpose.msra.mxu0 0.0
    %3337 = vmatprep.mubr.f32.mxu0 0.0
    %3338 = vmatmul.mubr.f32.gmra.mrb[0].mxu0 %v3223
    %v3339 = vpop.f32.mrb[0].mxu0
    %v3340 = vadd.f32 0.0, %v3339
    %v3341 = vpop.f32.mrb[0].mxu0
    %3342 = vdwg.mxu0
    %v3344 = vsel %vm559, %v38, 0
    %v3347 = vsel %vm559, %v415, 0
    %v3350 = vsel %vm559, %v416, 0
    %v3353 = vsel %vm559, %v417, 0
    %v3356 = vsel %vm559, %v418, 0
    %v3359 = vsel %vm559, %v419, 0
    %v3362 = vsel %vm559, %v420, 0
    %v3365 = vsel %vm559, %v421, 0
    %v3368 = vsel %vm559, %v422, 0
    %v3371 = vsel %vm559, %v423, 0
    %v3374 = vsel %vm559, %v424, 0
    %v3377 = vsel %vm559, %v425, 0
    %v3380 = vsel %vm559, %v426, 0
    %v3383 = vsel %vm559, %v427, 0
    %v3386 = vsel %vm559, %v428, 0
    %v3389 = vsel %vm559, %v429, 0
    %v3392 = vsel %vm559, %v430, 0
    %3394 = vmatprep.subr.mxu0 0.0
    %3395 = vmatpush1.xpose.msra.mxu0 %v3347
    %3396 = vmatprep.subr.mxu0 0.0
    %3397 = vmatpush1.xpose.msra.mxu0 %v3350
    %3398 = vmatprep.subr.mxu0 0.0
    %3399 = vmatpush1.xpose.msra.mxu0 %v3353
    %3400 = vmatprep.subr.mxu0 0.0
    %3401 = vmatpush1.xpose.msra.mxu0 %v3356
    %3402 = vmatprep.subr.mxu0 0.0
    %3403 = vmatpush1.xpose.msra.mxu0 %v3359
    %3404 = vmatprep.subr.mxu0 0.0
    %3405 = vmatpush1.xpose.msra.mxu0 %v3362
    %3406 = vmatprep.subr.mxu0 0.0
    %3407 = vmatpush1.xpose.msra.mxu0 %v3365
    %3408 = vmatprep.subr.mxu0 0.0
    %3409 = vmatpush1.xpose.msra.mxu0 %v3368
    %3410 = vmatprep.subr.mxu0 0.0
    %3411 = vmatpush1.xpose.msra.mxu0 %v3371
    %3412 = vmatprep.subr.mxu0 0.0
    %3413 = vmatpush1.xpose.msra.mxu0 %v3374
    %3414 = vmatprep.subr.mxu0 0.0
    %3415 = vmatpush1.xpose.msra.mxu0 %v3377
    %3416 = vmatprep.subr.mxu0 0.0
    %3417 = vmatpush1.xpose.msra.mxu0 %v3380
    %3418 = vmatprep.subr.mxu0 0.0
    %3419 = vmatpush1.xpose.msra.mxu0 %v3383
    %3420 = vmatprep.subr.mxu0 0.0
    %3421 = vmatpush1.xpose.msra.mxu0 %v3386
    %3422 = vmatprep.subr.mxu0 0.0
    %3423 = vmatpush1.xpose.msra.mxu0 %v3389
    %3424 = vmatprep.subr.mxu0 0.0
    %3425 = vmatpush1.xpose.msra.mxu0 %v3392
    %3426 = vmatprep.subr.mxu0 0.0
    %3427 = vmatpush1.xpose.msra.mxu0 0.0
    %3428 = vmatprep.subr.mxu0 0.0
    %3429 = vmatpush1.xpose.msra.mxu0 0.0
    %3430 = vmatprep.subr.mxu0 0.0
    %3431 = vmatpush1.xpose.msra.mxu0 0.0
    %3432 = vmatprep.subr.mxu0 0.0
    %3433 = vmatpush1.xpose.msra.mxu0 0.0
    %3434 = vmatprep.subr.mxu0 0.0
    %3435 = vmatpush1.xpose.msra.mxu0 0.0
    %3436 = vmatprep.subr.mxu0 0.0
    %3437 = vmatpush1.xpose.msra.mxu0 0.0
    %3438 = vmatprep.subr.mxu0 0.0
    %3439 = vmatpush1.xpose.msra.mxu0 0.0
    %3440 = vmatprep.subr.mxu0 0.0
    %3441 = vmatpush1.xpose.msra.mxu0 0.0
    %3442 = vmatprep.subr.mxu0 0.0
    %3443 = vmatpush1.xpose.msra.mxu0 0.0
    %3444 = vmatprep.subr.mxu0 0.0
    %3445 = vmatpush1.xpose.msra.mxu0 0.0
    %3446 = vmatprep.subr.mxu0 0.0
    %3447 = vmatpush1.xpose.msra.mxu0 0.0
    %3448 = vmatprep.subr.mxu0 0.0
    %3449 = vmatpush1.xpose.msra.mxu0 0.0
    %3450 = vmatprep.subr.mxu0 0.0
    %3451 = vmatpush1.xpose.msra.mxu0 0.0
    %3452 = vmatprep.subr.mxu0 0.0
    %3453 = vmatpush1.xpose.msra.mxu0 0.0
    %3454 = vmatprep.subr.mxu0 0.0
    %3455 = vmatpush1.xpose.msra.mxu0 0.0
    %3456 = vmatprep.subr.mxu0 0.0
    %3457 = vmatpush1.xpose.msra.mxu0 0.0
    %3458 = vmatprep.mubr.f32.mxu0 0.0
    %3459 = vmatmul.mubr.f32.gmra.mrb[0].mxu0 %v3344
    %v3460 = vpop.f32.mrb[0].mxu0
    %v3461 = vadd.f32 0.0, %v3460
    %v3462 = vpop.f32.mrb[0].mxu0
    %3463 = vdwg.mxu0
    %v3465 = vsel %vm559, %v39, 0
    %v3468 = vsel %vm559, %v431, 0
    %v3471 = vsel %vm559, %v432, 0
    %v3474 = vsel %vm559, %v433, 0
    %v3477 = vsel %vm559, %v434, 0
    %v3480 = vsel %vm559, %v435, 0
    %v3483 = vsel %vm559, %v436, 0
    %v3486 = vsel %vm559, %v437, 0
    %v3489 = vsel %vm559, %v438, 0
    %v3492 = vsel %vm559, %v439, 0
    %v3495 = vsel %vm559, %v440, 0
    %v3498 = vsel %vm559, %v441, 0
    %v3501 = vsel %vm559, %v442, 0
    %v3504 = vsel %vm559, %v443, 0
    %v3507 = vsel %vm559, %v444, 0
    %v3510 = vsel %vm559, %v445, 0
    %v3513 = vsel %vm559, %v446, 0
    %3515 = vmatprep.subr.mxu0 0.0
    %3516 = vmatpush1.xpose.msra.mxu0 %v3468
    %3517 = vmatprep.subr.mxu0 0.0
    %3518 = vmatpush1.xpose.msra.mxu0 %v3471
    %3519 = vmatprep.subr.mxu0 0.0
    %3520 = vmatpush1.xpose.msra.mxu0 %v3474
    %3521 = vmatprep.subr.mxu0 0.0
    %3522 = vmatpush1.xpose.msra.mxu0 %v3477
    %3523 = vmatprep.subr.mxu0 0.0
    %3524 = vmatpush1.xpose.msra.mxu0 %v3480
    %3525 = vmatprep.subr.mxu0 0.0
    %3526 = vmatpush1.xpose.msra.mxu0 %v3483
    %3527 = vmatprep.subr.mxu0 0.0
    %3528 = vmatpush1.xpose.msra.mxu0 %v3486
    %3529 = vmatprep.subr.mxu0 0.0
    %3530 = vmatpush1.xpose.msra.mxu0 %v3489
    %3531 = vmatprep.subr.mxu0 0.0
    %3532 = vmatpush1.xpose.msra.mxu0 %v3492
    %3533 = vmatprep.subr.mxu0 0.0
    %3534 = vmatpush1.xpose.msra.mxu0 %v3495
    %3535 = vmatprep.subr.mxu0 0.0
    %3536 = vmatpush1.xpose.msra.mxu0 %v3498
    %3537 = vmatprep.subr.mxu0 0.0
    %3538 = vmatpush1.xpose.msra.mxu0 %v3501
    %3539 = vmatprep.subr.mxu0 0.0
    %3540 = vmatpush1.xpose.msra.mxu0 %v3504
    %3541 = vmatprep.subr.mxu0 0.0
    %3542 = vmatpush1.xpose.msra.mxu0 %v3507
    %3543 = vmatprep.subr.mxu0 0.0
    %3544 = vmatpush1.xpose.msra.mxu0 %v3510
    %3545 = vmatprep.subr.mxu0 0.0
    %3546 = vmatpush1.xpose.msra.mxu0 %v3513
    %3547 = vmatprep.subr.mxu0 0.0
    %3548 = vmatpush1.xpose.msra.mxu0 0.0
    %3549 = vmatprep.subr.mxu0 0.0
    %3550 = vmatpush1.xpose.msra.mxu0 0.0
    %3551 = vmatprep.subr.mxu0 0.0
    %3552 = vmatpush1.xpose.msra.mxu0 0.0
    %3553 = vmatprep.subr.mxu0 0.0
    %3554 = vmatpush1.xpose.msra.mxu0 0.0
    %3555 = vmatprep.subr.mxu0 0.0
    %3556 = vmatpush1.xpose.msra.mxu0 0.0
    %3557 = vmatprep.subr.mxu0 0.0
    %3558 = vmatpush1.xpose.msra.mxu0 0.0
    %3559 = vmatprep.subr.mxu0 0.0
    %3560 = vmatpush1.xpose.msra.mxu0 0.0
    %3561 = vmatprep.subr.mxu0 0.0
    %3562 = vmatpush1.xpose.msra.mxu0 0.0
    %3563 = vmatprep.subr.mxu0 0.0
    %3564 = vmatpush1.xpose.msra.mxu0 0.0
    %3565 = vmatprep.subr.mxu0 0.0
    %3566 = vmatpush1.xpose.msra.mxu0 0.0
    %3567 = vmatprep.subr.mxu0 0.0
    %3568 = vmatpush1.xpose.msra.mxu0 0.0
    %3569 = vmatprep.subr.mxu0 0.0
    %3570 = vmatpush1.xpose.msra.mxu0 0.0
    %3571 = vmatprep.subr.mxu0 0.0
    %3572 = vmatpush1.xpose.msra.mxu0 0.0
    %3573 = vmatprep.subr.mxu0 0.0
    %3574 = vmatpush1.xpose.msra.mxu0 0.0
    %3575 = vmatprep.subr.mxu0 0.0
    %3576 = vmatpush1.xpose.msra.mxu0 0.0
    %3577 = vmatprep.subr.mxu0 0.0
    %3578 = vmatpush1.xpose.msra.mxu0 0.0
    %3579 = vmatprep.mubr.f32.mxu0 0.0
    %3580 = vmatmul.mubr.f32.gmra.mrb[0].mxu0 %v3465
    %v3581 = vpop.f32.mrb[0].mxu0
    %v3582 = vadd.f32 0.0, %v3581
    %v3583 = vpop.f32.mrb[0].mxu0
    %3584 = vdwg.mxu0
    %v3586 = vsel %vm559, %v40, 0
    %v3589 = vsel %vm559, %v447, 0
    %v3592 = vsel %vm559, %v448, 0
    %v3595 = vsel %vm559, %v449, 0
    %v3598 = vsel %vm559, %v450, 0
    %v3601 = vsel %vm559, %v451, 0
    %v3604 = vsel %vm559, %v452, 0
    %v3607 = vsel %vm559, %v453, 0
    %v3610 = vsel %vm559, %v454, 0
    %v3613 = vsel %vm559, %v455, 0
    %v3616 = vsel %vm559, %v456, 0
    %v3619 = vsel %vm559, %v457, 0
    %v3622 = vsel %vm559, %v458, 0
    %v3625 = vsel %vm559, %v459, 0
    %v3628 = vsel %vm559, %v460, 0
    %v3631 = vsel %vm559, %v461, 0
    %v3634 = vsel %vm559, %v462, 0
    %3636 = vmatprep.subr.mxu0 0.0
    %3637 = vmatpush1.xpose.msra.mxu0 %v3589
    %3638 = vmatprep.subr.mxu0 0.0
    %3639 = vmatpush1.xpose.msra.mxu0 %v3592
    %3640 = vmatprep.subr.mxu0 0.0
    %3641 = vmatpush1.xpose.msra.mxu0 %v3595
    %3642 = vmatprep.subr.mxu0 0.0
    %3643 = vmatpush1.xpose.msra.mxu0 %v3598
    %3644 = vmatprep.subr.mxu0 0.0
    %3645 = vmatpush1.xpose.msra.mxu0 %v3601
    %3646 = vmatprep.subr.mxu0 0.0
    %3647 = vmatpush1.xpose.msra.mxu0 %v3604
    %3648 = vmatprep.subr.mxu0 0.0
    %3649 = vmatpush1.xpose.msra.mxu0 %v3607
    %3650 = vmatprep.subr.mxu0 0.0
    %3651 = vmatpush1.xpose.msra.mxu0 %v3610
    %3652 = vmatprep.subr.mxu0 0.0
    %3653 = vmatpush1.xpose.msra.mxu0 %v3613
    %3654 = vmatprep.subr.mxu0 0.0
    %3655 = vmatpush1.xpose.msra.mxu0 %v3616
    %3656 = vmatprep.subr.mxu0 0.0
    %3657 = vmatpush1.xpose.msra.mxu0 %v3619
    %3658 = vmatprep.subr.mxu0 0.0
    %3659 = vmatpush1.xpose.msra.mxu0 %v3622
    %3660 = vmatprep.subr.mxu0 0.0
    %3661 = vmatpush1.xpose.msra.mxu0 %v3625
    %3662 = vmatprep.subr.mxu0 0.0
    %3663 = vmatpush1.xpose.msra.mxu0 %v3628
    %3664 = vmatprep.subr.mxu0 0.0
    %3665 = vmatpush1.xpose.msra.mxu0 %v3631
    %3666 = vmatprep.subr.mxu0 0.0
    %3667 = vmatpush1.xpose.msra.mxu0 %v3634
    %3668 = vmatprep.subr.mxu0 0.0
    %3669 = vmatpush1.xpose.msra.mxu0 0.0
    %3670 = vmatprep.subr.mxu0 0.0
    %3671 = vmatpush1.xpose.msra.mxu0 0.0
    %3672 = vmatprep.subr.mxu0 0.0
    %3673 = vmatpush1.xpose.msra.mxu0 0.0
    %3674 = vmatprep.subr.mxu0 0.0
    %3675 = vmatpush1.xpose.msra.mxu0 0.0
    %3676 = vmatprep.subr.mxu0 0.0
    %3677 = vmatpush1.xpose.msra.mxu0 0.0
    %3678 = vmatprep.subr.mxu0 0.0
    %3679 = vmatpush1.xpose.msra.mxu0 0.0
    %3680 = vmatprep.subr.mxu0 0.0
    %3681 = vmatpush1.xpose.msra.mxu0 0.0
    %3682 = vmatprep.subr.mxu0 0.0
    %3683 = vmatpush1.xpose.msra.mxu0 0.0
    %3684 = vmatprep.subr.mxu0 0.0
    %3685 = vmatpush1.xpose.msra.mxu0 0.0
    %3686 = vmatprep.subr.mxu0 0.0
    %3687 = vmatpush1.xpose.msra.mxu0 0.0
    %3688 = vmatprep.subr.mxu0 0.0
    %3689 = vmatpush1.xpose.msra.mxu0 0.0
    %3690 = vmatprep.subr.mxu0 0.0
    %3691 = vmatpush1.xpose.msra.mxu0 0.0
    %3692 = vmatprep.subr.mxu0 0.0
    %3693 = vmatpush1.xpose.msra.mxu0 0.0
    %3694 = vmatprep.subr.mxu0 0.0
    %3695 = vmatpush1.xpose.msra.mxu0 0.0
    %3696 = vmatprep.subr.mxu0 0.0
    %3697 = vmatpush1.xpose.msra.mxu0 0.0
    %3698 = vmatprep.subr.mxu0 0.0
    %3699 = vmatpush1.xpose.msra.mxu0 0.0
    %3700 = vmatprep.mubr.f32.mxu0 0.0
    %3701 = vmatmul.mubr.f32.gmra.mrb[0].mxu0 %v3586
    %v3702 = vpop.f32.mrb[0].mxu0
    %v3703 = vadd.f32 0.0, %v3702
    %v3704 = vpop.f32.mrb[0].mxu0
    %3705 = vdwg.mxu0
    %v3707 = vsel %vm559, %v41, 0
    %v3710 = vsel %vm559, %v463, 0
    %v3713 = vsel %vm559, %v464, 0
    %v3716 = vsel %vm559, %v465, 0
    %v3719 = vsel %vm559, %v466, 0
    %v3722 = vsel %vm559, %v467, 0
    %v3725 = vsel %vm559, %v468, 0
    %v3728 = vsel %vm559, %v469, 0
    %v3731 = vsel %vm559, %v470, 0
    %v3734 = vsel %vm559, %v471, 0
    %v3737 = vsel %vm559, %v472, 0
    %v3740 = vsel %vm559, %v473, 0
    %v3743 = vsel %vm559, %v474, 0
    %v3746 = vsel %vm559, %v475, 0
    %v3749 = vsel %vm559, %v476, 0
    %v3752 = vsel %vm559, %v477, 0
    %v3755 = vsel %vm559, %v478, 0
    %3757 = vmatprep.subr.mxu0 0.0
    %3758 = vmatpush1.xpose.msra.mxu0 %v3710
    %3759 = vmatprep.subr.mxu0 0.0
    %3760 = vmatpush1.xpose.msra.mxu0 %v3713
    %3761 = vmatprep.subr.mxu0 0.0
    %3762 = vmatpush1.xpose.msra.mxu0 %v3716
    %3763 = vmatprep.subr.mxu0 0.0
    %3764 = vmatpush1.xpose.msra.mxu0 %v3719
    %3765 = vmatprep.subr.mxu0 0.0
    %3766 = vmatpush1.xpose.msra.mxu0 %v3722
    %3767 = vmatprep.subr.mxu0 0.0
    %3768 = vmatpush1.xpose.msra.mxu0 %v3725
    %3769 = vmatprep.subr.mxu0 0.0
    %3770 = vmatpush1.xpose.msra.mxu0 %v3728
    %3771 = vmatprep.subr.mxu0 0.0
    %3772 = vmatpush1.xpose.msra.mxu0 %v3731
    %3773 = vmatprep.subr.mxu0 0.0
    %3774 = vmatpush1.xpose.msra.mxu0 %v3734
    %3775 = vmatprep.subr.mxu0 0.0
    %3776 = vmatpush1.xpose.msra.mxu0 %v3737
    %3777 = vmatprep.subr.mxu0 0.0
    %3778 = vmatpush1.xpose.msra.mxu0 %v3740
    %3779 = vmatprep.subr.mxu0 0.0
    %3780 = vmatpush1.xpose.msra.mxu0 %v3743
    %3781 = vmatprep.subr.mxu0 0.0
    %3782 = vmatpush1.xpose.msra.mxu0 %v3746
    %3783 = vmatprep.subr.mxu0 0.0
    %3784 = vmatpush1.xpose.msra.mxu0 %v3749
    %3785 = vmatprep.subr.mxu0 0.0
    %3786 = vmatpush1.xpose.msra.mxu0 %v3752
    %3787 = vmatprep.subr.mxu0 0.0
    %3788 = vmatpush1.xpose.msra.mxu0 %v3755
    %3789 = vmatprep.subr.mxu0 0.0
    %3790 = vmatpush1.xpose.msra.mxu0 0.0
    %3791 = vmatprep.subr.mxu0 0.0
    %3792 = vmatpush1.xpose.msra.mxu0 0.0
    %3793 = vmatprep.subr.mxu0 0.0
    %3794 = vmatpush1.xpose.msra.mxu0 0.0
    %3795 = vmatprep.subr.mxu0 0.0
    %3796 = vmatpush1.xpose.msra.mxu0 0.0
    %3797 = vmatprep.subr.mxu0 0.0
    %3798 = vmatpush1.xpose.msra.mxu0 0.0
    %3799 = vmatprep.subr.mxu0 0.0
    %3800 = vmatpush1.xpose.msra.mxu0 0.0
    %3801 = vmatprep.subr.mxu0 0.0
    %3802 = vmatpush1.xpose.msra.mxu0 0.0
    %3803 = vmatprep.subr.mxu0 0.0
    %3804 = vmatpush1.xpose.msra.mxu0 0.0
    %3805 = vmatprep.subr.mxu0 0.0
    %3806 = vmatpush1.xpose.msra.mxu0 0.0
    %3807 = vmatprep.subr.mxu0 0.0
    %3808 = vmatpush1.xpose.msra.mxu0 0.0
    %3809 = vmatprep.subr.mxu0 0.0
    %3810 = vmatpush1.xpose.msra.mxu0 0.0
    %3811 = vmatprep.subr.mxu0 0.0
    %3812 = vmatpush1.xpose.msra.mxu0 0.0
    %3813 = vmatprep.subr.mxu0 0.0
    %3814 = vmatpush1.xpose.msra.mxu0 0.0
    %3815 = vmatprep.subr.mxu0 0.0
    %3816 = vmatpush1.xpose.msra.mxu0 0.0
    %3817 = vmatprep.subr.mxu0 0.0
    %3818 = vmatpush1.xpose.msra.mxu0 0.0
    %3819 = vmatprep.subr.mxu0 0.0
    %3820 = vmatpush1.xpose.msra.mxu0 0.0
    %3821 = vmatprep.mubr.f32.mxu0 0.0
    %3822 = vmatmul.mubr.f32.gmra.mrb[0].mxu0 %v3707
    %v3823 = vpop.f32.mrb[0].mxu0
    %v3824 = vadd.f32 0.0, %v3823
    %v3825 = vpop.f32.mrb[0].mxu0
    %3826 = vdwg.mxu0
    %v3828 = vsel %vm559, %v42, 0
    %v3831 = vsel %vm559, %v479, 0
    %v3834 = vsel %vm559, %v480, 0
    %v3837 = vsel %vm559, %v481, 0
    %v3840 = vsel %vm559, %v482, 0
    %v3843 = vsel %vm559, %v483, 0
    %v3846 = vsel %vm559, %v484, 0
    %v3849 = vsel %vm559, %v485, 0
    %v3852 = vsel %vm559, %v486, 0
    %v3855 = vsel %vm559, %v487, 0
    %v3858 = vsel %vm559, %v488, 0
    %v3861 = vsel %vm559, %v489, 0
    %v3864 = vsel %vm559, %v490, 0
    %v3867 = vsel %vm559, %v491, 0
    %v3870 = vsel %vm559, %v492, 0
    %v3873 = vsel %vm559, %v493, 0
    %v3876 = vsel %vm559, %v494, 0
    %3878 = vmatprep.subr.mxu0 0.0
    %3879 = vmatpush1.xpose.msra.mxu0 %v3831
    %3880 = vmatprep.subr.mxu0 0.0
    %3881 = vmatpush1.xpose.msra.mxu0 %v3834
    %3882 = vmatprep.subr.mxu0 0.0
    %3883 = vmatpush1.xpose.msra.mxu0 %v3837
    %3884 = vmatprep.subr.mxu0 0.0
    %3885 = vmatpush1.xpose.msra.mxu0 %v3840
    %3886 = vmatprep.subr.mxu0 0.0
    %3887 = vmatpush1.xpose.msra.mxu0 %v3843
    %3888 = vmatprep.subr.mxu0 0.0
    %3889 = vmatpush1.xpose.msra.mxu0 %v3846
    %3890 = vmatprep.subr.mxu0 0.0
    %3891 = vmatpush1.xpose.msra.mxu0 %v3849
    %3892 = vmatprep.subr.mxu0 0.0
    %3893 = vmatpush1.xpose.msra.mxu0 %v3852
    %3894 = vmatprep.subr.mxu0 0.0
    %3895 = vmatpush1.xpose.msra.mxu0 %v3855
    %3896 = vmatprep.subr.mxu0 0.0
    %3897 = vmatpush1.xpose.msra.mxu0 %v3858
    %3898 = vmatprep.subr.mxu0 0.0
    %3899 = vmatpush1.xpose.msra.mxu0 %v3861
    %3900 = vmatprep.subr.mxu0 0.0
    %3901 = vmatpush1.xpose.msra.mxu0 %v3864
    %3902 = vmatprep.subr.mxu0 0.0
    %3903 = vmatpush1.xpose.msra.mxu0 %v3867
    %3904 = vmatprep.subr.mxu0 0.0
    %3905 = vmatpush1.xpose.msra.mxu0 %v3870
    %3906 = vmatprep.subr.mxu0 0.0
    %3907 = vmatpush1.xpose.msra.mxu0 %v3873
    %3908 = vmatprep.subr.mxu0 0.0
    %3909 = vmatpush1.xpose.msra.mxu0 %v3876
    %3910 = vmatprep.subr.mxu0 0.0
    %3911 = vmatpush1.xpose.msra.mxu0 0.0
    %3912 = vmatprep.subr.mxu0 0.0
    %3913 = vmatpush1.xpose.msra.mxu0 0.0
    %3914 = vmatprep.subr.mxu0 0.0
    %3915 = vmatpush1.xpose.msra.mxu0 0.0
    %3916 = vmatprep.subr.mxu0 0.0
    %3917 = vmatpush1.xpose.msra.mxu0 0.0
    %3918 = vmatprep.subr.mxu0 0.0
    %3919 = vmatpush1.xpose.msra.mxu0 0.0
    %3920 = vmatprep.subr.mxu0 0.0
    %3921 = vmatpush1.xpose.msra.mxu0 0.0
    %3922 = vmatprep.subr.mxu0 0.0
    %3923 = vmatpush1.xpose.msra.mxu0 0.0
    %3924 = vmatprep.subr.mxu0 0.0
    %3925 = vmatpush1.xpose.msra.mxu0 0.0
    %3926 = vmatprep.subr.mxu0 0.0
    %3927 = vmatpush1.xpose.msra.mxu0 0.0
    %3928 = vmatprep.subr.mxu0 0.0
    %3929 = vmatpush1.xpose.msra.mxu0 0.0
    %3930 = vmatprep.subr.mxu0 0.0
    %3931 = vmatpush1.xpose.msra.mxu0 0.0
    %3932 = vmatprep.subr.mxu0 0.0
    %3933 = vmatpush1.xpose.msra.mxu0 0.0
    %3934 = vmatprep.subr.mxu0 0.0
    %3935 = vmatpush1.xpose.msra.mxu0 0.0
    %3936 = vmatprep.subr.mxu0 0.0
    %3937 = vmatpush1.xpose.msra.mxu0 0.0
    %3938 = vmatprep.subr.mxu0 0.0
    %3939 = vmatpush1.xpose.msra.mxu0 0.0
    %3940 = vmatprep.subr.mxu0 0.0
    %3941 = vmatpush1.xpose.msra.mxu0 0.0
    %3942 = vmatprep.mubr.f32.mxu0 0.0
    %3943 = vmatmul.mubr.f32.gmra.mrb[0].mxu0 %v3828
    %v3944 = vpop.f32.mrb[0].mxu0
    %v3945 = vadd.f32 0.0, %v3944
    %v3946 = vpop.f32.mrb[0].mxu0
    %3947 = vdwg.mxu0
    %v3949 = vsel %vm559, %v43, 0
    %v3952 = vsel %vm559, %v495, 0
    %v3955 = vsel %vm559, %v496, 0
    %v3958 = vsel %vm559, %v497, 0
    %v3961 = vsel %vm559, %v498, 0
    %v3964 = vsel %vm559, %v499, 0
    %v3967 = vsel %vm559, %v500, 0
    %v3970 = vsel %vm559, %v501, 0
    %v3973 = vsel %vm559, %v502, 0
    %v3976 = vsel %vm559, %v503, 0
    %v3979 = vsel %vm559, %v504, 0
    %v3982 = vsel %vm559, %v505, 0
    %v3985 = vsel %vm559, %v506, 0
    %v3988 = vsel %vm559, %v507, 0
    %v3991 = vsel %vm559, %v508, 0
    %v3994 = vsel %vm559, %v509, 0
    %v3997 = vsel %vm559, %v510, 0
    %3999 = vmatprep.subr.mxu0 0.0
    %4000 = vmatpush1.xpose.msra.mxu0 %v3952
    %4001 = vmatprep.subr.mxu0 0.0
    %4002 = vmatpush1.xpose.msra.mxu0 %v3955
    %4003 = vmatprep.subr.mxu0 0.0
    %4004 = vmatpush1.xpose.msra.mxu0 %v3958
    %4005 = vmatprep.subr.mxu0 0.0
    %4006 = vmatpush1.xpose.msra.mxu0 %v3961
    %4007 = vmatprep.subr.mxu0 0.0
    %4008 = vmatpush1.xpose.msra.mxu0 %v3964
    %4009 = vmatprep.subr.mxu0 0.0
    %4010 = vmatpush1.xpose.msra.mxu0 %v3967
    %4011 = vmatprep.subr.mxu0 0.0
    %4012 = vmatpush1.xpose.msra.mxu0 %v3970
    %4013 = vmatprep.subr.mxu0 0.0
    %4014 = vmatpush1.xpose.msra.mxu0 %v3973
    %4015 = vmatprep.subr.mxu0 0.0
    %4016 = vmatpush1.xpose.msra.mxu0 %v3976
    %4017 = vmatprep.subr.mxu0 0.0
    %4018 = vmatpush1.xpose.msra.mxu0 %v3979
    %4019 = vmatprep.subr.mxu0 0.0
    %4020 = vmatpush1.xpose.msra.mxu0 %v3982
    %4021 = vmatprep.subr.mxu0 0.0
    %4022 = vmatpush1.xpose.msra.mxu0 %v3985
    %4023 = vmatprep.subr.mxu0 0.0
    %4024 = vmatpush1.xpose.msra.mxu0 %v3988
    %4025 = vmatprep.subr.mxu0 0.0
    %4026 = vmatpush1.xpose.msra.mxu0 %v3991
    %4027 = vmatprep.subr.mxu0 0.0
    %4028 = vmatpush1.xpose.msra.mxu0 %v3994
    %4029 = vmatprep.subr.mxu0 0.0
    %4030 = vmatpush1.xpose.msra.mxu0 %v3997
    %4031 = vmatprep.subr.mxu0 0.0
    %4032 = vmatpush1.xpose.msra.mxu0 0.0
    %4033 = vmatprep.subr.mxu0 0.0
    %4034 = vmatpush1.xpose.msra.mxu0 0.0
    %4035 = vmatprep.subr.mxu0 0.0
    %4036 = vmatpush1.xpose.msra.mxu0 0.0
    %4037 = vmatprep.subr.mxu0 0.0
    %4038 = vmatpush1.xpose.msra.mxu0 0.0
    %4039 = vmatprep.subr.mxu0 0.0
    %4040 = vmatpush1.xpose.msra.mxu0 0.0
    %4041 = vmatprep.subr.mxu0 0.0
    %4042 = vmatpush1.xpose.msra.mxu0 0.0
    %4043 = vmatprep.subr.mxu0 0.0
    %4044 = vmatpush1.xpose.msra.mxu0 0.0
    %4045 = vmatprep.subr.mxu0 0.0
    %4046 = vmatpush1.xpose.msra.mxu0 0.0
    %4047 = vmatprep.subr.mxu0 0.0
    %4048 = vmatpush1.xpose.msra.mxu0 0.0
    %4049 = vmatprep.subr.mxu0 0.0
    %4050 = vmatpush1.xpose.msra.mxu0 0.0
    %4051 = vmatprep.subr.mxu0 0.0
    %4052 = vmatpush1.xpose.msra.mxu0 0.0
    %4053 = vmatprep.subr.mxu0 0.0
    %4054 = vmatpush1.xpose.msra.mxu0 0.0
    %4055 = vmatprep.subr.mxu0 0.0
    %4056 = vmatpush1.xpose.msra.mxu0 0.0
    %4057 = vmatprep.subr.mxu0 0.0
    %4058 = vmatpush1.xpose.msra.mxu0 0.0
    %4059 = vmatprep.subr.mxu0 0.0
    %4060 = vmatpush1.xpose.msra.mxu0 0.0
    %4061 = vmatprep.subr.mxu0 0.0
    %4062 = vmatpush1.xpose.msra.mxu0 0.0
    %4063 = vmatprep.mubr.f32.mxu0 0.0
    %4064 = vmatmul.mubr.f32.gmra.mrb[0].mxu0 %v3949
    %v4065 = vpop.f32.mrb[0].mxu0
    %v4066 = vadd.f32 0.0, %v4065
    %v4067 = vpop.f32.mrb[0].mxu0
    %4068 = vdwg.mxu0
    %v4070 = vsel %vm559, %v44, 0
    %v4073 = vsel %vm559, %v511, 0
    %v4076 = vsel %vm559, %v512, 0
    %v4079 = vsel %vm559, %v513, 0
    %v4082 = vsel %vm559, %v514, 0
    %v4085 = vsel %vm559, %v515, 0
    %v4088 = vsel %vm559, %v516, 0
    %v4091 = vsel %vm559, %v517, 0
    %v4094 = vsel %vm559, %v518, 0
    %v4097 = vsel %vm559, %v519, 0
    %v4100 = vsel %vm559, %v520, 0
    %v4103 = vsel %vm559, %v521, 0
    %v4106 = vsel %vm559, %v522, 0
    %v4109 = vsel %vm559, %v523, 0
    %v4112 = vsel %vm559, %v524, 0
    %v4115 = vsel %vm559, %v525, 0
    %v4118 = vsel %vm559, %v526, 0
    %4120 = vmatprep.subr.mxu0 0.0
    %4121 = vmatpush1.xpose.msra.mxu0 %v4073
    %4122 = vmatprep.subr.mxu0 0.0
    %4123 = vmatpush1.xpose.msra.mxu0 %v4076
    %4124 = vmatprep.subr.mxu0 0.0
    %4125 = vmatpush1.xpose.msra.mxu0 %v4079
    %4126 = vmatprep.subr.mxu0 0.0
    %4127 = vmatpush1.xpose.msra.mxu0 %v4082
    %4128 = vmatprep.subr.mxu0 0.0
    %4129 = vmatpush1.xpose.msra.mxu0 %v4085
    %4130 = vmatprep.subr.mxu0 0.0
    %4131 = vmatpush1.xpose.msra.mxu0 %v4088
    %4132 = vmatprep.subr.mxu0 0.0
    %4133 = vmatpush1.xpose.msra.mxu0 %v4091
    %4134 = vmatprep.subr.mxu0 0.0
    %4135 = vmatpush1.xpose.msra.mxu0 %v4094
    %4136 = vmatprep.subr.mxu0 0.0
    %4137 = vmatpush1.xpose.msra.mxu0 %v4097
    %4138 = vmatprep.subr.mxu0 0.0
    %4139 = vmatpush1.xpose.msra.mxu0 %v4100
    %4140 = vmatprep.subr.mxu0 0.0
    %4141 = vmatpush1.xpose.msra.mxu0 %v4103
    %4142 = vmatprep.subr.mxu0 0.0
    %4143 = vmatpush1.xpose.msra.mxu0 %v4106
    %4144 = vmatprep.subr.mxu0 0.0
    %4145 = vmatpush1.xpose.msra.mxu0 %v4109
    %4146 = vmatprep.subr.mxu0 0.0
    %4147 = vmatpush1.xpose.msra.mxu0 %v4112
    %4148 = vmatprep.subr.mxu0 0.0
    %4149 = vmatpush1.xpose.msra.mxu0 %v4115
    %4150 = vmatprep.subr.mxu0 0.0
    %4151 = vmatpush1.xpose.msra.mxu0 %v4118
    %4152 = vmatprep.subr.mxu0 0.0
    %4153 = vmatpush1.xpose.msra.mxu0 0.0
    %4154 = vmatprep.subr.mxu0 0.0
    %4155 = vmatpush1.xpose.msra.mxu0 0.0
    %4156 = vmatprep.subr.mxu0 0.0
    %4157 = vmatpush1.xpose.msra.mxu0 0.0
    %4158 = vmatprep.subr.mxu0 0.0
    %4159 = vmatpush1.xpose.msra.mxu0 0.0
    %4160 = vmatprep.subr.mxu0 0.0
    %4161 = vmatpush1.xpose.msra.mxu0 0.0
    %4162 = vmatprep.subr.mxu0 0.0
    %4163 = vmatpush1.xpose.msra.mxu0 0.0
    %4164 = vmatprep.subr.mxu0 0.0
    %4165 = vmatpush1.xpose.msra.mxu0 0.0
    %4166 = vmatprep.subr.mxu0 0.0
    %4167 = vmatpush1.xpose.msra.mxu0 0.0
    %4168 = vmatprep.subr.mxu0 0.0
    %4169 = vmatpush1.xpose.msra.mxu0 0.0
    %4170 = vmatprep.subr.mxu0 0.0
    %4171 = vmatpush1.xpose.msra.mxu0 0.0
    %4172 = vmatprep.subr.mxu0 0.0
    %4173 = vmatpush1.xpose.msra.mxu0 0.0
    %4174 = vmatprep.subr.mxu0 0.0
    %4175 = vmatpush1.xpose.msra.mxu0 0.0
    %4176 = vmatprep.subr.mxu0 0.0
    %4177 = vmatpush1.xpose.msra.mxu0 0.0
    %4178 = vmatprep.subr.mxu0 0.0
    %4179 = vmatpush1.xpose.msra.mxu0 0.0
    %4180 = vmatprep.subr.mxu0 0.0
    %4181 = vmatpush1.xpose.msra.mxu0 0.0
    %4182 = vmatprep.subr.mxu0 0.0
    %4183 = vmatpush1.xpose.msra.mxu0 0.0
    %4184 = vmatprep.mubr.f32.mxu0 0.0
    %4185 = vmatmul.mubr.f32.gmra.mrb[0].mxu0 %v4070
    %v4186 = vpop.f32.mrb[0].mxu0
    %v4187 = vadd.f32 0.0, %v4186
    %v4188 = vpop.f32.mrb[0].mxu0
    %4189 = vdwg.mxu0
    %v4191 = vsel %vm559, %v45, 0
    %v4194 = vsel %vm559, %v527, 0
    %v4197 = vsel %vm559, %v528, 0
    %v4200 = vsel %vm559, %v529, 0
    %v4203 = vsel %vm559, %v530, 0
    %v4206 = vsel %vm559, %v531, 0
    %v4209 = vsel %vm559, %v532, 0
    %v4212 = vsel %vm559, %v533, 0
    %v4215 = vsel %vm559, %v534, 0
    %v4218 = vsel %vm559, %v535, 0
    %v4221 = vsel %vm559, %v536, 0
    %v4224 = vsel %vm559, %v537, 0
    %v4227 = vsel %vm559, %v538, 0
    %v4230 = vsel %vm559, %v539, 0
    %v4233 = vsel %vm559, %v540, 0
    %v4236 = vsel %vm559, %v541, 0
    %v4239 = vsel %vm559, %v542, 0
    %4241 = vmatprep.subr.mxu0 0.0
    %4242 = vmatpush1.xpose.msra.mxu0 %v4194
    %4243 = vmatprep.subr.mxu0 0.0
    %4244 = vmatpush1.xpose.msra.mxu0 %v4197
    %4245 = vmatprep.subr.mxu0 0.0
    %4246 = vmatpush1.xpose.msra.mxu0 %v4200
    %4247 = vmatprep.subr.mxu0 0.0
    %4248 = vmatpush1.xpose.msra.mxu0 %v4203
    %4249 = vmatprep.subr.mxu0 0.0
    %4250 = vmatpush1.xpose.msra.mxu0 %v4206
    %4251 = vmatprep.subr.mxu0 0.0
    %4252 = vmatpush1.xpose.msra.mxu0 %v4209
    %4253 = vmatprep.subr.mxu0 0.0
    %4254 = vmatpush1.xpose.msra.mxu0 %v4212
    %4255 = vmatprep.subr.mxu0 0.0
    %4256 = vmatpush1.xpose.msra.mxu0 %v4215
    %4257 = vmatprep.subr.mxu0 0.0
    %4258 = vmatpush1.xpose.msra.mxu0 %v4218
    %4259 = vmatprep.subr.mxu0 0.0
    %4260 = vmatpush1.xpose.msra.mxu0 %v4221
    %4261 = vmatprep.subr.mxu0 0.0
    %4262 = vmatpush1.xpose.msra.mxu0 %v4224
    %4263 = vmatprep.subr.mxu0 0.0
    %4264 = vmatpush1.xpose.msra.mxu0 %v4227
    %4265 = vmatprep.subr.mxu0 0.0
    %4266 = vmatpush1.xpose.msra.mxu0 %v4230
    %4267 = vmatprep.subr.mxu0 0.0
    %4268 = vmatpush1.xpose.msra.mxu0 %v4233
    %4269 = vmatprep.subr.mxu0 0.0
    %4270 = vmatpush1.xpose.msra.mxu0 %v4236
    %4271 = vmatprep.subr.mxu0 0.0
    %4272 = vmatpush1.xpose.msra.mxu0 %v4239
    %4273 = vmatprep.subr.mxu0 0.0
    %4274 = vmatpush1.xpose.msra.mxu0 0.0
    %4275 = vmatprep.subr.mxu0 0.0
    %4276 = vmatpush1.xpose.msra.mxu0 0.0
    %4277 = vmatprep.subr.mxu0 0.0
    %4278 = vmatpush1.xpose.msra.mxu0 0.0
    %4279 = vmatprep.subr.mxu0 0.0
    %4280 = vmatpush1.xpose.msra.mxu0 0.0
    %4281 = vmatprep.subr.mxu0 0.0
    %4282 = vmatpush1.xpose.msra.mxu0 0.0
    %4283 = vmatprep.subr.mxu0 0.0
    %4284 = vmatpush1.xpose.msra.mxu0 0.0
    %4285 = vmatprep.subr.mxu0 0.0
    %4286 = vmatpush1.xpose.msra.mxu0 0.0
    %4287 = vmatprep.subr.mxu0 0.0
    %4288 = vmatpush1.xpose.msra.mxu0 0.0
    %4289 = vmatprep.subr.mxu0 0.0
    %4290 = vmatpush1.xpose.msra.mxu0 0.0
    %4291 = vmatprep.subr.mxu0 0.0
    %4292 = vmatpush1.xpose.msra.mxu0 0.0
    %4293 = vmatprep.subr.mxu0 0.0
    %4294 = vmatpush1.xpose.msra.mxu0 0.0
    %4295 = vmatprep.subr.mxu0 0.0
    %4296 = vmatpush1.xpose.msra.mxu0 0.0
    %4297 = vmatprep.subr.mxu0 0.0
    %4298 = vmatpush1.xpose.msra.mxu0 0.0
    %4299 = vmatprep.subr.mxu0 0.0
    %4300 = vmatpush1.xpose.msra.mxu0 0.0
    %4301 = vmatprep.subr.mxu0 0.0
    %4302 = vmatpush1.xpose.msra.mxu0 0.0
    %4303 = vmatprep.subr.mxu0 0.0
    %4304 = vmatpush1.xpose.msra.mxu0 0.0
    %4305 = vmatprep.mubr.f32.mxu0 0.0
    %4306 = vmatmul.mubr.f32.gmra.mrb[0].mxu0 %v4191
    %v4307 = vpop.f32.mrb[0].mxu0
    %v4308 = vadd.f32 0.0, %v4307
    %v4309 = vpop.f32.mrb[0].mxu0
    %4310 = vdwg.mxu0
    %v4312 = vsel %vm559, %v46, 0
    %v4315 = vsel %vm559, %v543, 0
    %v4318 = vsel %vm559, %v544, 0
    %v4321 = vsel %vm559, %v545, 0
    %v4324 = vsel %vm559, %v546, 0
    %v4327 = vsel %vm559, %v547, 0
    %v4330 = vsel %vm559, %v548, 0
    %v4333 = vsel %vm559, %v549, 0
    %v4336 = vsel %vm559, %v550, 0
    %v4339 = vsel %vm559, %v551, 0
    %v4342 = vsel %vm559, %v552, 0
    %v4345 = vsel %vm559, %v553, 0
    %v4348 = vsel %vm559, %v554, 0
    %v4351 = vsel %vm559, %v555, 0
    %v4354 = vsel %vm559, %v556, 0
    %v4357 = vsel %vm559, %v557, 0
    %v4360 = vsel %vm559, %v558, 0
    %4362 = vmatprep.subr.mxu0 0.0
    %4363 = vmatpush1.xpose.msra.mxu0 %v4315
    %4364 = vmatprep.subr.mxu0 0.0
    %4365 = vmatpush1.xpose.msra.mxu0 %v4318
    %4366 = vmatprep.subr.mxu0 0.0
    %4367 = vmatpush1.xpose.msra.mxu0 %v4321
    %4368 = vmatprep.subr.mxu0 0.0
    %4369 = vmatpush1.xpose.msra.mxu0 %v4324
    %4370 = vmatprep.subr.mxu0 0.0
    %4371 = vmatpush1.xpose.msra.mxu0 %v4327
    %4372 = vmatprep.subr.mxu0 0.0
    %4373 = vmatpush1.xpose.msra.mxu0 %v4330
    %4374 = vmatprep.subr.mxu0 0.0
    %4375 = vmatpush1.xpose.msra.mxu0 %v4333
    %4376 = vmatprep.subr.mxu0 0.0
    %4377 = vmatpush1.xpose.msra.mxu0 %v4336
    %4378 = vmatprep.subr.mxu0 0.0
    %4379 = vmatpush1.xpose.msra.mxu0 %v4339
    %4380 = vmatprep.subr.mxu0 0.0
    %4381 = vmatpush1.xpose.msra.mxu0 %v4342
    %4382 = vmatprep.subr.mxu0 0.0
    %4383 = vmatpush1.xpose.msra.mxu0 %v4345
    %4384 = vmatprep.subr.mxu0 0.0
    %4385 = vmatpush1.xpose.msra.mxu0 %v4348
    %4386 = vmatprep.subr.mxu0 0.0
    %4387 = vmatpush1.xpose.msra.mxu0 %v4351
    %4388 = vmatprep.subr.mxu0 0.0
    %4389 = vmatpush1.xpose.msra.mxu0 %v4354
    %4390 = vmatprep.subr.mxu0 0.0
    %4391 = vmatpush1.xpose.msra.mxu0 %v4357
    %4392 = vmatprep.subr.mxu0 0.0
    %4393 = vmatpush1.xpose.msra.mxu0 %v4360
    %4394 = vmatprep.subr.mxu0 0.0
    %4395 = vmatpush1.xpose.msra.mxu0 0.0
    %4396 = vmatprep.subr.mxu0 0.0
    %4397 = vmatpush1.xpose.msra.mxu0 0.0
    %4398 = vmatprep.subr.mxu0 0.0
    %4399 = vmatpush1.xpose.msra.mxu0 0.0
    %4400 = vmatprep.subr.mxu0 0.0
    %4401 = vmatpush1.xpose.msra.mxu0 0.0
    %4402 = vmatprep.subr.mxu0 0.0
    %4403 = vmatpush1.xpose.msra.mxu0 0.0
    %4404 = vmatprep.subr.mxu0 0.0
    %4405 = vmatpush1.xpose.msra.mxu0 0.0
    %4406 = vmatprep.subr.mxu0 0.0
    %4407 = vmatpush1.xpose.msra.mxu0 0.0
    %4408 = vmatprep.subr.mxu0 0.0
    %4409 = vmatpush1.xpose.msra.mxu0 0.0
    %4410 = vmatprep.subr.mxu0 0.0
    %4411 = vmatpush1.xpose.msra.mxu0 0.0
    %4412 = vmatprep.subr.mxu0 0.0
    %4413 = vmatpush1.xpose.msra.mxu0 0.0
    %4414 = vmatprep.subr.mxu0 0.0
    %4415 = vmatpush1.xpose.msra.mxu0 0.0
    %4416 = vmatprep.subr.mxu0 0.0
    %4417 = vmatpush1.xpose.msra.mxu0 0.0
    %4418 = vmatprep.subr.mxu0 0.0
    %4419 = vmatpush1.xpose.msra.mxu0 0.0
    %4420 = vmatprep.subr.mxu0 0.0
    %4421 = vmatpush1.xpose.msra.mxu0 0.0
    %4422 = vmatprep.subr.mxu0 0.0
    %4423 = vmatpush1.xpose.msra.mxu0 0.0
    %4424 = vmatprep.subr.mxu0 0.0
    %4425 = vmatpush1.xpose.msra.mxu0 0.0
    %4426 = vmatprep.mubr.f32.mxu0 0.0
    %4427 = vmatmul.mubr.f32.gmra.mrb[0].mxu0 %v4312
    %v4428 = vpop.f32.mrb[0].mxu0
    %v4429 = vadd.f32 0.0, %v4428
    %v4430 = vpop.f32.mrb[0].mxu0
    %4431 = vdwg.mxu0
    %v4432 = vmul.f32 %v678, 0.17677669
    %v4433 = vmul.f32 %v799, 0.17677669
    %v4434 = vmul.f32 %v920, 0.17677669
    %v4435 = vmul.f32 %v1041, 0.17677669
    %v4436 = vmul.f32 %v1162, 0.17677669
    %v4437 = vmul.f32 %v1283, 0.17677669
    %v4438 = vmul.f32 %v1404, 0.17677669
    %v4439 = vmul.f32 %v1525, 0.17677669
    %v4440 = vmul.f32 %v1646, 0.17677669
    %v4441 = vmul.f32 %v1767, 0.17677669
    %v4442 = vmul.f32 %v1888, 0.17677669
    %v4443 = vmul.f32 %v2009, 0.17677669
    %v4444 = vmul.f32 %v2130, 0.17677669
    %v4445 = vmul.f32 %v2251, 0.17677669
    %v4446 = vmul.f32 %v2372, 0.17677669
    %v4447 = vmul.f32 %v2493, 0.17677669
    %v4448 = vmul.f32 %v2614, 0.17677669
    %v4449 = vmul.f32 %v2735, 0.17677669
    %v4450 = vmul.f32 %v2856, 0.17677669
    %v4451 = vmul.f32 %v2977, 0.17677669
    %v4452 = vmul.f32 %v3098, 0.17677669
    %v4453 = vmul.f32 %v3219, 0.17677669
    %v4454 = vmul.f32 %v3340, 0.17677669
    %v4455 = vmul.f32 %v3461, 0.17677669
    %v4456 = vmul.f32 %v3582, 0.17677669
    %v4457 = vmul.f32 %v3703, 0.17677669
    %v4458 = vmul.f32 %v3824, 0.17677669
    %v4459 = vmul.f32 %v3945, 0.17677669
    %v4460 = vmul.f32 %v4066, 0.17677669
    %v4461 = vmul.f32 %v4187, 0.17677669
    %v4462 = vmul.f32 %v4308, 0.17677669
    %v4463 = vmul.f32 %v4429, 0.17677669
    %v4464 = vlaneseq
    %v4465 = vand.u32 %v4464, 127
    %vm4466 = vcmp.lt.s32.totalorder %v4465, 8
    %v4499 = vrot.slane %v4433, 7
    %vm4500 = vcmask 1041409
    %v4501 = vsel %vm4500, %v4499, %v4432
    %v4502 = vrot.slane %v4434, 6
    %vm4503 = vcmask 1042434
    %v4504 = vsel %vm4503, %v4502, %v4501
    %v4505 = vrot.slane %v4435, 5
    %vm4506 = vcmask 1043459
    %v4507 = vsel %vm4506, %v4505, %v4504
    %v4508 = vrot.slane %v4436, 4
    %vm4509 = vcmask 1044484
    %v4510 = vsel %vm4509, %v4508, %v4507
    %v4511 = vrot.slane %v4437, 3
    %vm4512 = vcmask 1045509
    %v4513 = vsel %vm4512, %v4511, %v4510
    %v4514 = vrot.slane %v4438, 2
    %vm4515 = vcmask 1046534
    %v4516 = vsel %vm4515, %v4514, %v4513
    %v4517 = vrot.slane %v4439, 1
    %vm4518 = vcmask 1047559
    %v4519 = vsel %vm4518, %v4517, %v4516
    %v4520 = vrot.slane %v4441, 7
    %v4521 = vsel %vm4500, %v4520, %v4440
    %v4522 = vrot.slane %v4442, 6
    %v4523 = vsel %vm4503, %v4522, %v4521
    %v4524 = vrot.slane %v4443, 5
    %v4525 = vsel %vm4506, %v4524, %v4523
    %v4526 = vrot.slane %v4444, 4
    %v4527 = vsel %vm4509, %v4526, %v4525
    %v4528 = vrot.slane %v4445, 3
    %v4529 = vsel %vm4512, %v4528, %v4527
    %v4530 = vrot.slane %v4446, 2
    %v4531 = vsel %vm4515, %v4530, %v4529
    %v4532 = vrot.slane %v4447, 1
    %v4533 = vsel %vm4518, %v4532, %v4531
    %v4534 = vrot.slane %v4449, 7
    %v4535 = vsel %vm4500, %v4534, %v4448
    %v4536 = vrot.slane %v4450, 6
    %v4537 = vsel %vm4503, %v4536, %v4535
    %v4538 = vrot.slane %v4451, 5
    %v4539 = vsel %vm4506, %v4538, %v4537
    %v4540 = vrot.slane %v4452, 4
    %v4541 = vsel %vm4509, %v4540, %v4539
    %v4542 = vrot.slane %v4453, 3
    %v4543 = vsel %vm4512, %v4542, %v4541
    %v4544 = vrot.slane %v4454, 2
    %v4545 = vsel %vm4515, %v4544, %v4543
    %v4546 = vrot.slane %v4455, 1
    %v4547 = vsel %vm4518, %v4546, %v4545
    %v4548 = vrot.slane %v4457, 7
    %v4549 = vsel %vm4500, %v4548, %v4456
    %v4550 = vrot.slane %v4458, 6
    %v4551 = vsel %vm4503, %v4550, %v4549
    %v4552 = vrot.slane %v4459, 5
    %v4553 = vsel %vm4506, %v4552, %v4551
    %v4554 = vrot.slane %v4460, 4
    %v4555 = vsel %vm4509, %v4554, %v4553
    %v4556 = vrot.slane %v4461, 3
    %v4557 = vsel %vm4512, %v4556, %v4555
    %v4558 = vrot.slane %v4462, 2
    %v4559 = vsel %vm4515, %v4558, %v4557
    %v4560 = vrot.slane %v4463, 1
    %v4561 = vsel %vm4518, %v4560, %v4559
    %v4566 = vsel %vm4466, %v4519, -1e+30
    %v4567 = vsel %vm4466, %v4533, -1e+30
    %v4568 = vsel %vm4466, %v4547, -1e+30
    %v4569 = vsel %vm4466, %v4561, -1e+30
    %4570 = vmax.xlane.f32.xlu0 %v4566
    %v4571 = vpop.xlane.xlu0 %4570
    %4572 = vmax.xlane.f32.xlu0 %v4567
    %v4573 = vpop.xlane.xlu0 %4572
    %4574 = vmax.xlane.f32.xlu0 %v4568
    %v4575 = vpop.xlane.xlu0 %4574
    %4576 = vmax.xlane.f32.xlu0 %v4569
    %v4577 = vpop.xlane.xlu0 %4576
    %v4578 = vsub.f32 %v4566, %v4571
    %v4579 = vsub.f32 %v4567, %v4573
    %v4580 = vsub.f32 %v4568, %v4575
    %v4581 = vsub.f32 %v4569, %v4577
    %v4582 = vmul.f32 %v4578, 1.442695
    %v4583 = vpow.pop %v4582
    %v4584 = vmul.f32 %v4579, 1.442695
    %v4585 = vpow.pop %v4584
    %v4586 = vmul.f32 %v4580, 1.442695
    %v4587 = vpow.pop %v4586
    %v4588 = vmul.f32 %v4581, 1.442695
    %v4589 = vpow.pop %v4588
    %v4590 = vld [vmem:[%s2] sm:$0xff]
    %v4591 = vld [vmem:[%s2 + $0x8] sm:$0xff]
    %v4592 = vld [vmem:[%s2 + $0x10] sm:$0xff]
    %v4593 = vld [vmem:[%s2 + $0x18] sm:$0xff]
    %v4594 = vmul.f32 %v4583, %v4590
    %v4595 = vmul.f32 %v4585, %v4591
    %v4596 = vmul.f32 %v4587, %v4592
    %v4597 = vmul.f32 %v4589, %v4593
    %4598 = vadd.xlane.f32.xlu0 %v4594
    %v4599 = vpop.xlane.xlu0 %4598
    %4600 = vadd.xlane.f32.xlu0 %v4595
    %v4601 = vpop.xlane.xlu0 %4600
    %4602 = vadd.xlane.f32.xlu0 %v4596
    %v4603 = vpop.xlane.xlu0 %4602
    %4604 = vadd.xlane.f32.xlu0 %v4597
    %v4605 = vpop.xlane.xlu0 %4604
    %v4606 = vadd.f32 %v4599, 1e-06
    %v4607 = vadd.f32 %v4601, 1e-06
    %v4608 = vadd.f32 %v4603, 1e-06
    %v4609 = vadd.f32 %v4605, 1e-06
    %v4610 = vadd.f32 %v4594, 1.25e-07
    %v4611 = vadd.f32 %v4595, 1.25e-07
    %v4612 = vadd.f32 %v4596, 1.25e-07
    %v4613 = vadd.f32 %v4597, 1.25e-07
    %v4614 = vrcp.pop %v4606
    %v4615 = vrcp.pop %v4607
    %v4616 = vrcp.pop %v4608
    %v4617 = vrcp.pop %v4609
    %v4618 = vmul.f32 %v4610, %v4614
    %v4619 = vmul.f32 %v4611, %v4615
    %v4620 = vmul.f32 %v4612, %v4616
    %v4621 = vmul.f32 %v4613, %v4617
    %v4622 = vlaneseq
    %v4623 = vshrl.u32 %v4622, 7
    %v4624 = vmul.u32 %v4623, 4
    %vm4625 = vcmp.ge.s32.totalorder %v4465, %v4624
    %v4626 = vadd.s32 %v4623, 1
    %v4627 = vmul.u32 %v4626, 4
    %vm4628 = vcmp.lt.s32.totalorder %v4465, %v4627
    %vm4629 = vmand %vm4625, %vm4628
    %v4630 = vsel %vm4629, 1, 0
    %v4631 = vcvt.s32.f32 %v4630
    %v4633 = vsel %vm559, %v4631, 0
    %4635 = vmatprep.subr.mxu0 0.0
    %4636 = vmatpush1.msra.mxu0 %v4618
    %4637 = vmatprep.subr.mxu0 0.0
    %4638 = vmatpush1.msra.mxu0 %v4619
    %4639 = vmatprep.subr.mxu0 0.0
    %4640 = vmatpush1.msra.mxu0 %v4620
    %4641 = vmatprep.subr.mxu0 0.0
    %4642 = vmatpush1.msra.mxu0 %v4621
    %4643 = vmatprep.subr.mxu0 0.0
    %4644 = vmatpush1.msra.mxu0 0.0
    %4645 = vmatprep.subr.mxu0 0.0
    %4646 = vmatpush1.msra.mxu0 0.0
    %4647 = vmatprep.subr.mxu0 0.0
    %4648 = vmatpush1.msra.mxu0 0.0
    %4649 = vmatprep.subr.mxu0 0.0
    %4650 = vmatpush1.msra.mxu0 0.0
    %4651 = vmatprep.subr.mxu0 0.0
    %4652 = vmatpush1.msra.mxu0 0.0
    %4653 = vmatprep.subr.mxu0 0.0
    %4654 = vmatpush1.msra.mxu0 0.0
    %4655 = vmatprep.subr.mxu0 0.0
    %4656 = vmatpush1.msra.mxu0 0.0
    %4657 = vmatprep.subr.mxu0 0.0
    %4658 = vmatpush1.msra.mxu0 0.0
    %4659 = vmatprep.subr.mxu0 0.0
    %4660 = vmatpush1.msra.mxu0 0.0
    %4661 = vmatprep.subr.mxu0 0.0
    %4662 = vmatpush1.msra.mxu0 0.0
    %4663 = vmatprep.subr.mxu0 0.0
    %4664 = vmatpush1.msra.mxu0 0.0
    %4665 = vmatprep.subr.mxu0 0.0
    %4666 = vmatpush1.msra.mxu0 0.0
    %4667 = vmatprep.subr.mxu0 0.0
    %4668 = vmatpush1.msra.mxu0 0.0
    %4669 = vmatprep.subr.mxu0 0.0
    %4670 = vmatpush1.msra.mxu0 0.0
    %4671 = vmatprep.subr.mxu0 0.0
    %4672 = vmatpush1.msra.mxu0 0.0
    %4673 = vmatprep.subr.mxu0 0.0
    %4674 = vmatpush1.msra.mxu0 0.0
    %4675 = vmatprep.subr.mxu0 0.0
    %4676 = vmatpush1.msra.mxu0 0.0
    %4677 = vmatprep.subr.mxu0 0.0
    %4678 = vmatpush1.msra.mxu0 0.0
    %4679 = vmatprep.subr.mxu0 0.0
    %4680 = vmatpush1.msra.mxu0 0.0
    %4681 = vmatprep.subr.mxu0 0.0
    %4682 = vmatpush1.msra.mxu0 0.0
    %4683 = vmatprep.subr.mxu0 0.0
    %4684 = vmatpush1.msra.mxu0 0.0
    %4685 = vmatprep.subr.mxu0 0.0
    %4686 = vmatpush1.msra.mxu0 0.0
    %4687 = vmatprep.subr.mxu0 0.0
    %4688 = vmatpush1.msra.mxu0 0.0
    %4689 = vmatprep.subr.mxu0 0.0
    %4690 = vmatpush1.msra.mxu0 0.0
    %4691 = vmatprep.subr.mxu0 0.0
    %4692 = vmatpush1.msra.mxu0 0.0
    %4693 = vmatprep.subr.mxu0 0.0
    %4694 = vmatpush1.msra.mxu0 0.0
    %4695 = vmatprep.subr.mxu0 0.0
    %4696 = vmatpush1.msra.mxu0 0.0
    %4697 = vmatprep.subr.mxu0 0.0
    %4698 = vmatpush1.msra.mxu0 0.0
    %4699 = vmatprep.mubr.f32.mxu0 0.0
    %4700 = vmatmul.mubr.f32.gmra.mrb[0].mxu0 %v4633
    %v4701 = vpop.f32.mrb[0].mxu0
    %v4702 = vadd.f32 0.0, %v4701
    %v4703 = vpop.f32.mrb[0].mxu0
    %4704 = vdwg.mxu0
    %4705 = vst [vmem:[#allocation2] sm:$0xff] %v4702
    // Predicated region
    $region14: #{tpu_custom_call.1} parent=1 // pred_check
      _
    $region15: #{tpu_custom_call.1} parent=1 // pred_check_branch
      %4707 = sbr.rel (0) target = $region17
    $region16: #{tpu_custom_call.1} parent=1 // pred_region
      %s4709 = ssub.s32 128, 128
      %4710 = vsyncadd [#allocation3], %s4709
      %s4712 = sshll.u32 [#allocation2], 4
      %s4713 = int_to_ptr.vmem [resolvable:$true] %s4712
      %4715 = dma.vmem_to_hbm [thread:$0]  %s4713, 128, %s3, [#allocation3]
    $region17: #{tpu_custom_call.1} parent=1 // pred_fallthru
      _
    // Predicated region
    $region18: #{tpu_custom_call.1} parent=1 // pred_check
      _
    $region19: #{tpu_custom_call.1} parent=1 // pred_check_branch
      %4717 = sbr.rel (0) target = $region21
    $region20: #{tpu_custom_call.1} parent=1 // pred_region
      %4718 = dma.done [#allocation3], 128
    $region21: #{tpu_custom_call.1} parent=1 // pred_fallthru
      _
    %4719 = vsyncpa [#allocation3], 1

</llo_original>
